<compile_context>
chip_gen: v5e
topology: v5e:2x2
jax: 0.10.0
libtpu: 0.0.40
codegen_flags: <defaults>
</compile_context>

<pallas_src>
import numpy as np

import jax
import jax.numpy as jnp
from jax import lax
from jax.experimental import pallas as pl
from jax.experimental.pallas import tpu as pltpu


# ---------------------------------------------------------------------------
# Fused, batched LeNet kernel (one block of images per grid step)
# ---------------------------------------------------------------------------

def _lenet_kernel(x_ref, t1_ref, b1_ref, selw1_ref, t2_ref, b2_ref, selw2_ref,
                  fc1w_ref, fc1b_ref, fc2w_ref, fc2b_ref, fc3w_ref, fc3b_ref,
                  out_ref):
    f32 = jnp.float32
    B = x_ref.shape[0]
    x = x_ref[...]                                               # (B, 28, 28)

    # --- conv1 (5x5, 1->6) + bias + ReLU: 5 Toeplitz matmuls ------------------
    # result layout: rows = (b, y) for y in 0..23, lanes = co*24 + x'
    acc1 = jnp.zeros((B * 24, 144), f32)
    for ky in range(5):
        rows = x[:, ky:ky + 24, :].reshape(B * 24, 28)
        acc1 = acc1 + jnp.dot(rows, t1_ref[ky], preferred_element_type=f32)
    h1 = jnp.maximum(acc1 + b1_ref[...], 0.0)                    # (B*24, 144)

    # --- maxpool1 2x2 ---------------------------------------------------------
    # W-direction: pairwise lane max + one 0/1 selection matmul (all channels at once)
    mw1 = jnp.maximum(h1[:, 0:143], h1[:, 1:144])                # (B*24, 143)
    pw1 = jnp.dot(mw1, selw1_ref[...],
                  preferred_element_type=f32).reshape(B, 24, 72)  # lanes = ci*12 + x2
    # H-direction: 12 static row-pair maxes, assembled once per step
    p1 = jnp.concatenate(
        [jnp.maximum(pw1[:, 2 * r:2 * r + 1, :], pw1[:, 2 * r + 1:2 * r + 2, :])
         for r in range(12)],
        axis=1)                                                  # (B, 12, 72)

    # --- conv2 (5x5, 6->16) + bias + ReLU: 5 Toeplitz matmuls ----------------
    # result layout: rows = (b, y2) for y2 in 0..7, lanes = co*8 + x2 (128 dense)
    acc2 = jnp.zeros((B * 8, 128), f32)
    for ky in range(5):
        rows = p1[:, ky:ky + 8, :].reshape(B * 8, 72)
        acc2 = acc2 + jnp.dot(rows, t2_ref[ky], preferred_element_type=f32)
    h2 = jnp.maximum(acc2 + b2_ref[...], 0.0)                    # (B*8, 128)

    # --- maxpool2 2x2: W via selection matmul, H fused into fc1 --------------
    mw2 = jnp.maximum(h2[:, 0:127], h2[:, 1:128])                # (B*8, 127)
    pw2 = jnp.dot(mw2, selw2_ref[...],
                  preferred_element_type=f32).reshape(B, 8, 64)   # lanes = co*4 + x3

    # --- flatten (.view order absorbed into fc1 weight layout) + fc1 + ReLU ---
    acc3 = jnp.zeros((B, 120), f32)
    for y3 in range(4):
        r = jnp.maximum(pw2[:, 2 * y3], pw2[:, 2 * y3 + 1])      # (B, 64): H-pool row y3
        acc3 = acc3 + jnp.dot(r, fc1w_ref[y3 * 64:(y3 + 1) * 64, :],
                              preferred_element_type=f32)
    z1 = jnp.maximum(acc3 + fc1b_ref[...], 0.0)                  # (B, 120)

    # --- fc2 + ReLU, fc3 (padded to 128 lanes) --------------------------------
    z2 = jnp.maximum(jnp.dot(z1, fc2w_ref[...], preferred_element_type=f32)
                     + fc2b_ref[...], 0.0)                       # (B, 84)
    z3 = jnp.dot(z2, fc3w_ref[...], preferred_element_type=f32) + fc3b_ref[...]
    out_ref[...] = z3                                            # (B, 128) dense store


# ---------------------------------------------------------------------------
# Wrapper: trace-time weight re-layout (Toeplitz / selection matrices) + pallas_call
# ---------------------------------------------------------------------------

def lenet_forward(params, x_nchw, block_b=8):
    """x_nchw: (N, 1, 28, 28) PyTorch-layout input; returns (N, num_classes) logits."""
    N = x_nchw.shape[0]
    nc = params["fc3_w"].shape[0]
    assert nc <= 128
    f32 = jnp.float32

    x = x_nchw[:, 0, :, :].astype(f32)                           # (N, 28, 28)
    npad = ((N + block_b - 1) // block_b) * block_b
    if npad != N:
        x = jnp.pad(x, ((0, npad - N), (0, 0), (0, 0)))

    kx = jnp.arange(5)

    # conv1 Toeplitz: t1[ky, c, co*24+x'] = w1[co, ky, c-x'] for 0 <= c-x' < 5
    w1 = params["conv1_w"].reshape(6, 5, 5).astype(f32)          # (co, ky, kx)
    oh1 = (jnp.arange(28)[:, None] - jnp.arange(24)[None, :]
           == kx[:, None, None]).astype(f32)                     # (5, 28, 24)
    t1 = jnp.einsum("oyk,kcx->ycox", w1, oh1).reshape(5, 28, 144)
    b1 = jnp.repeat(params["conv1_b"].astype(f32), 24)[None, :]  # (1, 144)

    # pool1 lane-downsample selection: selw1[ci*24+2*x2, ci*12+x2] = 1
    ci_i, x2_i = np.arange(6), np.arange(12)
    r1 = (ci_i[:, None] * 24 + 2 * x2_i[None, :]).reshape(-1)
    c1 = (ci_i[:, None] * 12 + x2_i[None, :]).reshape(-1)
    selw1 = jnp.zeros((143, 72), f32).at[r1, c1].set(1.0)

    # conv2 Toeplitz: t2[ky, ci*12+c, co*8+x2] = w2[co, ci, ky, c-x2] for 0 <= c-x2 < 5
    w2 = params["conv2_w"].astype(f32)                           # (16, 6, 5, 5)
    oh2 = (jnp.arange(12)[:, None] - jnp.arange(8)[None, :]
           == kx[:, None, None]).astype(f32)                     # (5, 12, 8)
    t2 = jnp.einsum("oiyk,kcx->yicox", w2, oh2).reshape(5, 72, 128)
    b2 = jnp.repeat(params["conv2_b"].astype(f32), 8)[None, :]   # (1, 128)

    # pool2 lane-downsample selection: selw2[co*8+2*x3, co*4+x3] = 1
    co_i, x3_i = np.arange(16), np.arange(4)
    r2 = (co_i[:, None] * 8 + 2 * x3_i[None, :]).reshape(-1)
    c2 = (co_i[:, None] * 4 + x3_i[None, :]).reshape(-1)
    selw2 = jnp.zeros((127, 64), f32).at[r2, c2].set(1.0)

    # fc1 weights reordered so kernel rows are y3*64 + co*4 + x3 (matches pw2 lanes)
    fc1w = jnp.transpose(params["fc1_w"].astype(f32).T.reshape(16, 4, 4, 120),
                         (1, 0, 2, 3)).reshape(256, 120)
    fc1b = params["fc1_b"].astype(f32)[None, :]                  # (1, 120)
    fc2w = params["fc2_w"].astype(f32).T                         # (120, 84)
    fc2b = params["fc2_b"].astype(f32)[None, :]                  # (1, 84)
    fc3w = jnp.pad(params["fc3_w"].astype(f32).T, ((0, 0), (0, 128 - nc)))  # (84, 128)
    fc3b = jnp.pad(params["fc3_b"].astype(f32), (0, 128 - nc))[None, :]     # (1, 128)

    out = pl.pallas_call(
        _lenet_kernel,
        out_shape=jax.ShapeDtypeStruct((npad, 128), jnp.float32),
        grid=(npad // block_b,),
        in_specs=[
            pl.BlockSpec((block_b, 28, 28), lambda i: (i, 0, 0)),   # image block
            pl.BlockSpec((5, 28, 144), lambda i: (0, 0, 0)),        # conv1 Toeplitz
            pl.BlockSpec((1, 144), lambda i: (0, 0)),               # conv1 bias row
            pl.BlockSpec((143, 72), lambda i: (0, 0)),              # pool1 selection
            pl.BlockSpec((5, 72, 128), lambda i: (0, 0, 0)),        # conv2 Toeplitz
            pl.BlockSpec((1, 128), lambda i: (0, 0)),               # conv2 bias row
            pl.BlockSpec((127, 64), lambda i: (0, 0)),              # pool2 selection
            pl.BlockSpec((256, 120), lambda i: (0, 0)),             # fc1 w (reordered)
            pl.BlockSpec((1, 120), lambda i: (0, 0)),               # fc1 b
            pl.BlockSpec((120, 84), lambda i: (0, 0)),              # fc2 w
            pl.BlockSpec((1, 84), lambda i: (0, 0)),                # fc2 b
            pl.BlockSpec((84, 128), lambda i: (0, 0)),              # fc3 w (padded)
            pl.BlockSpec((1, 128), lambda i: (0, 0)),               # fc3 b (padded)
        ],
        out_specs=pl.BlockSpec((block_b, 128), lambda i: (i, 0)),
        compiler_params=pltpu.CompilerParams(dimension_semantics=("parallel",)),
    )(x, t1, b1, selw1, t2, b2, selw2, fc1w, fc1b, fc2w, fc2b, fc3w, fc3b)

    return out[:N, :nc]


# ---------------------------------------------------------------------------
# Parameter init (matches the PyTorch _weights_init shapes/scales)
# ---------------------------------------------------------------------------

def init_params(key, num_classes=10):
    ks = jax.random.split(key, 10)

    def kaiming_fan_out(k, shape):
        fan_out = shape[0] * shape[2] * shape[3]
        return jax.random.normal(k, shape, jnp.float32) * np.sqrt(2.0 / fan_out)

    def xavier(k, shape):
        fan_out, fan_in = shape
        return jax.random.normal(k, shape, jnp.float32) * np.sqrt(2.0 / (fan_in + fan_out))

    # NOTE: the PyTorch init sets biases to 0; small random biases are used here
    # purely so the bias paths of the kernel are exercised by the numeric check.
    return {
        "conv1_w": kaiming_fan_out(ks[0], (6, 1, 5, 5)),
        "conv1_b": 0.1 * jax.random.normal(ks[1], (6,), jnp.float32),
        "conv2_w": kaiming_fan_out(ks[2], (16, 6, 5, 5)),
        "conv2_b": 0.1 * jax.random.normal(ks[3], (16,), jnp.float32),
        "fc1_w": xavier(ks[4], (120, 256)),
        "fc1_b": 0.1 * jax.random.normal(ks[5], (120,), jnp.float32),
        "fc2_w": xavier(ks[6], (84, 120)),
        "fc2_b": 0.1 * jax.random.normal(ks[7], (84,), jnp.float32),
        "fc3_w": xavier(ks[8], (num_classes, 84)),
        "fc3_b": 0.1 * jax.random.normal(ks[9], (num_classes,), jnp.float32),
    }


# ---------------------------------------------------------------------------
# Pure-JAX reference (exactly mirrors the PyTorch forward, NCHW + .view flatten)
# ---------------------------------------------------------------------------

def reference_forward(params, x_nchw):
    hp = lax.Precision.HIGHEST
    x = x_nchw.astype(jnp.float32)

    def conv(h, w, b):
        y = lax.conv_general_dilated(h, w, (1, 1), "VALID",
                                     dimension_numbers=("NCHW", "OIHW", "NCHW"),
                                     precision=hp)
        return jax.nn.relu(y + b[None, :, None, None])

    def pool(h):
        return lax.reduce_window(h, -jnp.inf, lax.max,
                                 (1, 1, 2, 2), (1, 1, 2, 2), "VALID")

    out = pool(conv(x, params["conv1_w"], params["conv1_b"]))
    out = pool(conv(out, params["conv2_w"], params["conv2_b"]))
    out = out.reshape(out.shape[0], -1)                           # PyTorch NCHW .view()
    out = jax.nn.relu(jnp.dot(out, params["fc1_w"].T, precision=hp) + params["fc1_b"])
    out = jax.nn.relu(jnp.dot(out, params["fc2_w"].T, precision=hp) + params["fc2_b"])
    return jnp.dot(out, params["fc3_w"].T, precision=hp) + params["fc3_b"]


if __name__ == "__main__":
    key = jax.random.PRNGKey(0)
    pkey, xkey = jax.random.split(key)
    params = init_params(pkey, num_classes=10)
    # LeNet's 16*4*4 flatten implies 1x28x28 inputs (MNIST-shaped).
    # N=16 with block_b=8 -> 2 parallel grid steps (exercises batching + megacore).
    x = jax.random.uniform(xkey, (16, 1, 28, 28), jnp.float32)

    logits = jax.block_until_ready(jax.jit(lenet_forward)(params, x))

    ref = reference_forward(params, x)
    np.testing.assert_allclose(np.asarray(logits), np.asarray(ref),
                               rtol=1e-3, atol=1e-3)
    assert logits.shape == (16, 10)
    print("KERNEL_OK")
</pallas_src>

<mosaic_0001>
module attributes {stable_mosaic.version = 11 : i64} {
  func.func @_lenet_kernel(%arg0: i32, %arg1: memref<8x28x28xf32, #tpu.memory_space<vmem>>, %arg2: memref<5x28x144xf32, #tpu.memory_space<vmem>>, %arg3: memref<1x144xf32, #tpu.memory_space<vmem>>, %arg4: memref<143x72xf32, #tpu.memory_space<vmem>>, %arg5: memref<5x72x128xf32, #tpu.memory_space<vmem>>, %arg6: memref<1x128xf32, #tpu.memory_space<vmem>>, %arg7: memref<127x64xf32, #tpu.memory_space<vmem>>, %arg8: memref<256x120xf32, #tpu.memory_space<vmem>>, %arg9: memref<1x120xf32, #tpu.memory_space<vmem>>, %arg10: memref<120x84xf32, #tpu.memory_space<vmem>>, %arg11: memref<1x84xf32, #tpu.memory_space<vmem>>, %arg12: memref<84x128xf32, #tpu.memory_space<vmem>>, %arg13: memref<1x128xf32, #tpu.memory_space<vmem>>, %arg14: memref<8x128xf32, #tpu.memory_space<vmem>>) attributes {dimension_semantics = [#tpu.dimension_semantics<parallel>], iteration_bounds = array<i64: 2>, scalar_prefetch = 0 : i64, scratch_operands = 0 : i64, tpu.core_type = #tpu.core_type<tc>, window_params = [{transform_indices = @transform_0, window_bounds = array<i64: 8, 28, 28>}, {pipeline_mode = #tpu.pipeline_mode<synchronous>, transform_indices = @transform_1, window_bounds = array<i64: 5, 28, 144>}, {pipeline_mode = #tpu.pipeline_mode<synchronous>, transform_indices = @transform_2, window_bounds = array<i64: 1, 144>}, {pipeline_mode = #tpu.pipeline_mode<synchronous>, transform_indices = @transform_3, window_bounds = array<i64: 143, 72>}, {pipeline_mode = #tpu.pipeline_mode<synchronous>, transform_indices = @transform_4, window_bounds = array<i64: 5, 72, 128>}, {pipeline_mode = #tpu.pipeline_mode<synchronous>, transform_indices = @transform_5, window_bounds = array<i64: 1, 128>}, {pipeline_mode = #tpu.pipeline_mode<synchronous>, transform_indices = @transform_6, window_bounds = array<i64: 127, 64>}, {pipeline_mode = #tpu.pipeline_mode<synchronous>, transform_indices = @transform_7, window_bounds = array<i64: 256, 120>}, {pipeline_mode = #tpu.pipeline_mode<synchronous>, transform_indices = @transform_8, window_bounds = array<i64: 1, 120>}, {pipeline_mode = #tpu.pipeline_mode<synchronous>, transform_indices = @transform_9, window_bounds = array<i64: 120, 84>}, {pipeline_mode = #tpu.pipeline_mode<synchronous>, transform_indices = @transform_10, window_bounds = array<i64: 1, 84>}, {pipeline_mode = #tpu.pipeline_mode<synchronous>, transform_indices = @transform_11, window_bounds = array<i64: 84, 128>}, {pipeline_mode = #tpu.pipeline_mode<synchronous>, transform_indices = @transform_12, window_bounds = array<i64: 1, 128>}, {transform_indices = @transform_13, window_bounds = array<i64: 8, 128>}]} {
    %c0 = arith.constant 0 : index
    %c0_0 = arith.constant 0 : index
    %c0_1 = arith.constant 0 : index
    %0 = vector.load %arg1[%c0, %c0_0, %c0_1] : memref<8x28x28xf32, #tpu.memory_space<vmem>>, vector<8x28x28xf32>
    %cst = arith.constant 0.000000e+00 : f32
    %1 = vector.broadcast %cst : f32 to vector<192x144xf32>
    %2 = vector.extract_strided_slice %0 {offsets = [0, 0, 0], sizes = [8, 24, 28], strides = [1, 1, 1]} : vector<8x28x28xf32> to vector<8x24x28xf32>
    %3 = vector.shape_cast %2 : vector<8x24x28xf32> to vector<192x28xf32>
    %c0_2 = arith.constant 0 : index
    %c0_3 = arith.constant 0 : index
    %c0_4 = arith.constant 0 : index
    %4 = vector.load %arg2[%c0_2, %c0_3, %c0_4] : memref<5x28x144xf32, #tpu.memory_space<vmem>>, vector<1x28x144xf32>
    %5 = vector.shape_cast %4 : vector<1x28x144xf32> to vector<28x144xf32>
    %cst_5 = arith.constant dense<0.000000e+00> : vector<192x144xf32>
    %6 = tpu.matmul %3, %5, %cst_5 {dimension_numbers = #tpu.dot_dimension_numbers<[1], [0], [0], [1], [0, 0, 1, 1], [], []>} : vector<192x28xf32>, vector<28x144xf32>, vector<192x144xf32> -> vector<192x144xf32>
    %7 = arith.addf %1, %6 : vector<192x144xf32>
    %8 = vector.extract_strided_slice %0 {offsets = [0, 1, 0], sizes = [8, 24, 28], strides = [1, 1, 1]} : vector<8x28x28xf32> to vector<8x24x28xf32>
    %9 = vector.shape_cast %8 : vector<8x24x28xf32> to vector<192x28xf32>
    %c1 = arith.constant 1 : index
    %c0_6 = arith.constant 0 : index
    %c0_7 = arith.constant 0 : index
    %10 = vector.load %arg2[%c1, %c0_6, %c0_7] : memref<5x28x144xf32, #tpu.memory_space<vmem>>, vector<1x28x144xf32>
    %11 = vector.shape_cast %10 : vector<1x28x144xf32> to vector<28x144xf32>
    %cst_8 = arith.constant dense<0.000000e+00> : vector<192x144xf32>
    %12 = tpu.matmul %9, %11, %cst_8 {dimension_numbers = #tpu.dot_dimension_numbers<[1], [0], [0], [1], [0, 0, 1, 1], [], []>} : vector<192x28xf32>, vector<28x144xf32>, vector<192x144xf32> -> vector<192x144xf32>
    %13 = arith.addf %7, %12 : vector<192x144xf32>
    %14 = vector.extract_strided_slice %0 {offsets = [0, 2, 0], sizes = [8, 24, 28], strides = [1, 1, 1]} : vector<8x28x28xf32> to vector<8x24x28xf32>
    %15 = vector.shape_cast %14 : vector<8x24x28xf32> to vector<192x28xf32>
    %c2 = arith.constant 2 : index
    %c0_9 = arith.constant 0 : index
    %c0_10 = arith.constant 0 : index
    %16 = vector.load %arg2[%c2, %c0_9, %c0_10] : memref<5x28x144xf32, #tpu.memory_space<vmem>>, vector<1x28x144xf32>
    %17 = vector.shape_cast %16 : vector<1x28x144xf32> to vector<28x144xf32>
    %cst_11 = arith.constant dense<0.000000e+00> : vector<192x144xf32>
    %18 = tpu.matmul %15, %17, %cst_11 {dimension_numbers = #tpu.dot_dimension_numbers<[1], [0], [0], [1], [0, 0, 1, 1], [], []>} : vector<192x28xf32>, vector<28x144xf32>, vector<192x144xf32> -> vector<192x144xf32>
    %19 = arith.addf %13, %18 : vector<192x144xf32>
    %20 = vector.extract_strided_slice %0 {offsets = [0, 3, 0], sizes = [8, 24, 28], strides = [1, 1, 1]} : vector<8x28x28xf32> to vector<8x24x28xf32>
    %21 = vector.shape_cast %20 : vector<8x24x28xf32> to vector<192x28xf32>
    %c3 = arith.constant 3 : index
    %c0_12 = arith.constant 0 : index
    %c0_13 = arith.constant 0 : index
    %22 = vector.load %arg2[%c3, %c0_12, %c0_13] : memref<5x28x144xf32, #tpu.memory_space<vmem>>, vector<1x28x144xf32>
    %23 = vector.shape_cast %22 : vector<1x28x144xf32> to vector<28x144xf32>
    %cst_14 = arith.constant dense<0.000000e+00> : vector<192x144xf32>
    %24 = tpu.matmul %21, %23, %cst_14 {dimension_numbers = #tpu.dot_dimension_numbers<[1], [0], [0], [1], [0, 0, 1, 1], [], []>} : vector<192x28xf32>, vector<28x144xf32>, vector<192x144xf32> -> vector<192x144xf32>
    %25 = arith.addf %19, %24 : vector<192x144xf32>
    %26 = vector.extract_strided_slice %0 {offsets = [0, 4, 0], sizes = [8, 24, 28], strides = [1, 1, 1]} : vector<8x28x28xf32> to vector<8x24x28xf32>
    %27 = vector.shape_cast %26 : vector<8x24x28xf32> to vector<192x28xf32>
    %c4 = arith.constant 4 : index
    %c0_15 = arith.constant 0 : index
    %c0_16 = arith.constant 0 : index
    %28 = vector.load %arg2[%c4, %c0_15, %c0_16] : memref<5x28x144xf32, #tpu.memory_space<vmem>>, vector<1x28x144xf32>
    %29 = vector.shape_cast %28 : vector<1x28x144xf32> to vector<28x144xf32>
    %cst_17 = arith.constant dense<0.000000e+00> : vector<192x144xf32>
    %30 = tpu.matmul %27, %29, %cst_17 {dimension_numbers = #tpu.dot_dimension_numbers<[1], [0], [0], [1], [0, 0, 1, 1], [], []>} : vector<192x28xf32>, vector<28x144xf32>, vector<192x144xf32> -> vector<192x144xf32>
    %31 = arith.addf %25, %30 : vector<192x144xf32>
    %c0_18 = arith.constant 0 : index
    %c0_19 = arith.constant 0 : index
    %32 = vector.load %arg3[%c0_18, %c0_19] : memref<1x144xf32, #tpu.memory_space<vmem>>, vector<1x144xf32>
    %33 = vector.broadcast %32 : vector<1x144xf32> to vector<192x144xf32>
    %34 = arith.addf %31, %33 : vector<192x144xf32>
    %cst_20 = arith.constant 0.000000e+00 : f32
    %35 = vector.broadcast %cst_20 : f32 to vector<192x144xf32>
    %36 = arith.maximumf %34, %35 : vector<192x144xf32>
    %37 = vector.extract_strided_slice %36 {offsets = [0, 0], sizes = [192, 143], strides = [1, 1]} : vector<192x144xf32> to vector<192x143xf32>
    %38 = vector.extract_strided_slice %36 {offsets = [0, 1], sizes = [192, 143], strides = [1, 1]} : vector<192x144xf32> to vector<192x143xf32>
    %39 = arith.maximumf %37, %38 : vector<192x143xf32>
    %c0_21 = arith.constant 0 : index
    %c0_22 = arith.constant 0 : index
    %40 = vector.load %arg4[%c0_21, %c0_22] : memref<143x72xf32, #tpu.memory_space<vmem>>, vector<143x72xf32>
    %cst_23 = arith.constant dense<0.000000e+00> : vector<192x72xf32>
    %41 = tpu.matmul %39, %40, %cst_23 {dimension_numbers = #tpu.dot_dimension_numbers<[1], [0], [0], [1], [0, 0, 1, 1], [], []>} : vector<192x143xf32>, vector<143x72xf32>, vector<192x72xf32> -> vector<192x72xf32>
    %42 = vector.shape_cast %41 : vector<192x72xf32> to vector<8x24x72xf32>
    %43 = vector.extract_strided_slice %42 {offsets = [0, 0, 0], sizes = [8, 1, 72], strides = [1, 1, 1]} : vector<8x24x72xf32> to vector<8x1x72xf32>
    %44 = vector.extract_strided_slice %42 {offsets = [0, 1, 0], sizes = [8, 1, 72], strides = [1, 1, 1]} : vector<8x24x72xf32> to vector<8x1x72xf32>
    %45 = arith.maximumf %43, %44 : vector<8x1x72xf32>
    %46 = vector.extract_strided_slice %42 {offsets = [0, 2, 0], sizes = [8, 1, 72], strides = [1, 1, 1]} : vector<8x24x72xf32> to vector<8x1x72xf32>
    %47 = vector.extract_strided_slice %42 {offsets = [0, 3, 0], sizes = [8, 1, 72], strides = [1, 1, 1]} : vector<8x24x72xf32> to vector<8x1x72xf32>
    %48 = arith.maximumf %46, %47 : vector<8x1x72xf32>
    %49 = vector.extract_strided_slice %42 {offsets = [0, 4, 0], sizes = [8, 1, 72], strides = [1, 1, 1]} : vector<8x24x72xf32> to vector<8x1x72xf32>
    %50 = vector.extract_strided_slice %42 {offsets = [0, 5, 0], sizes = [8, 1, 72], strides = [1, 1, 1]} : vector<8x24x72xf32> to vector<8x1x72xf32>
    %51 = arith.maximumf %49, %50 : vector<8x1x72xf32>
    %52 = vector.extract_strided_slice %42 {offsets = [0, 6, 0], sizes = [8, 1, 72], strides = [1, 1, 1]} : vector<8x24x72xf32> to vector<8x1x72xf32>
    %53 = vector.extract_strided_slice %42 {offsets = [0, 7, 0], sizes = [8, 1, 72], strides = [1, 1, 1]} : vector<8x24x72xf32> to vector<8x1x72xf32>
    %54 = arith.maximumf %52, %53 : vector<8x1x72xf32>
    %55 = vector.extract_strided_slice %42 {offsets = [0, 8, 0], sizes = [8, 1, 72], strides = [1, 1, 1]} : vector<8x24x72xf32> to vector<8x1x72xf32>
    %56 = vector.extract_strided_slice %42 {offsets = [0, 9, 0], sizes = [8, 1, 72], strides = [1, 1, 1]} : vector<8x24x72xf32> to vector<8x1x72xf32>
    %57 = arith.maximumf %55, %56 : vector<8x1x72xf32>
    %58 = vector.extract_strided_slice %42 {offsets = [0, 10, 0], sizes = [8, 1, 72], strides = [1, 1, 1]} : vector<8x24x72xf32> to vector<8x1x72xf32>
    %59 = vector.extract_strided_slice %42 {offsets = [0, 11, 0], sizes = [8, 1, 72], strides = [1, 1, 1]} : vector<8x24x72xf32> to vector<8x1x72xf32>
    %60 = arith.maximumf %58, %59 : vector<8x1x72xf32>
    %61 = vector.extract_strided_slice %42 {offsets = [0, 12, 0], sizes = [8, 1, 72], strides = [1, 1, 1]} : vector<8x24x72xf32> to vector<8x1x72xf32>
    %62 = vector.extract_strided_slice %42 {offsets = [0, 13, 0], sizes = [8, 1, 72], strides = [1, 1, 1]} : vector<8x24x72xf32> to vector<8x1x72xf32>
    %63 = arith.maximumf %61, %62 : vector<8x1x72xf32>
    %64 = vector.extract_strided_slice %42 {offsets = [0, 14, 0], sizes = [8, 1, 72], strides = [1, 1, 1]} : vector<8x24x72xf32> to vector<8x1x72xf32>
    %65 = vector.extract_strided_slice %42 {offsets = [0, 15, 0], sizes = [8, 1, 72], strides = [1, 1, 1]} : vector<8x24x72xf32> to vector<8x1x72xf32>
    %66 = arith.maximumf %64, %65 : vector<8x1x72xf32>
    %67 = vector.extract_strided_slice %42 {offsets = [0, 16, 0], sizes = [8, 1, 72], strides = [1, 1, 1]} : vector<8x24x72xf32> to vector<8x1x72xf32>
    %68 = vector.extract_strided_slice %42 {offsets = [0, 17, 0], sizes = [8, 1, 72], strides = [1, 1, 1]} : vector<8x24x72xf32> to vector<8x1x72xf32>
    %69 = arith.maximumf %67, %68 : vector<8x1x72xf32>
    %70 = vector.extract_strided_slice %42 {offsets = [0, 18, 0], sizes = [8, 1, 72], strides = [1, 1, 1]} : vector<8x24x72xf32> to vector<8x1x72xf32>
    %71 = vector.extract_strided_slice %42 {offsets = [0, 19, 0], sizes = [8, 1, 72], strides = [1, 1, 1]} : vector<8x24x72xf32> to vector<8x1x72xf32>
    %72 = arith.maximumf %70, %71 : vector<8x1x72xf32>
    %73 = vector.extract_strided_slice %42 {offsets = [0, 20, 0], sizes = [8, 1, 72], strides = [1, 1, 1]} : vector<8x24x72xf32> to vector<8x1x72xf32>
    %74 = vector.extract_strided_slice %42 {offsets = [0, 21, 0], sizes = [8, 1, 72], strides = [1, 1, 1]} : vector<8x24x72xf32> to vector<8x1x72xf32>
    %75 = arith.maximumf %73, %74 : vector<8x1x72xf32>
    %76 = vector.extract_strided_slice %42 {offsets = [0, 22, 0], sizes = [8, 1, 72], strides = [1, 1, 1]} : vector<8x24x72xf32> to vector<8x1x72xf32>
    %77 = vector.extract_strided_slice %42 {offsets = [0, 23, 0], sizes = [8, 1, 72], strides = [1, 1, 1]} : vector<8x24x72xf32> to vector<8x1x72xf32>
    %78 = arith.maximumf %76, %77 : vector<8x1x72xf32>
    %79 = tpu.concatenate %45, %48, %51, %54, %57, %60, %63, %66, %69, %72, %75, %78 in 1 : vector<8x1x72xf32>, vector<8x1x72xf32>, vector<8x1x72xf32>, vector<8x1x72xf32>, vector<8x1x72xf32>, vector<8x1x72xf32>, vector<8x1x72xf32>, vector<8x1x72xf32>, vector<8x1x72xf32>, vector<8x1x72xf32>, vector<8x1x72xf32>, vector<8x1x72xf32> -> vector<8x12x72xf32>
    %cst_24 = arith.constant 0.000000e+00 : f32
    %80 = vector.broadcast %cst_24 : f32 to vector<64x128xf32>
    %81 = vector.extract_strided_slice %79 {offsets = [0, 0, 0], sizes = [8, 8, 72], strides = [1, 1, 1]} : vector<8x12x72xf32> to vector<8x8x72xf32>
    %82 = vector.shape_cast %81 : vector<8x8x72xf32> to vector<64x72xf32>
    %c0_25 = arith.constant 0 : index
    %c0_26 = arith.constant 0 : index
    %c0_27 = arith.constant 0 : index
    %83 = vector.load %arg5[%c0_25, %c0_26, %c0_27] : memref<5x72x128xf32, #tpu.memory_space<vmem>>, vector<1x72x128xf32>
    %84 = vector.shape_cast %83 : vector<1x72x128xf32> to vector<72x128xf32>
    %cst_28 = arith.constant dense<0.000000e+00> : vector<64x128xf32>
    %85 = tpu.matmul %82, %84, %cst_28 {dimension_numbers = #tpu.dot_dimension_numbers<[1], [0], [0], [1], [0, 0, 1, 1], [], []>} : vector<64x72xf32>, vector<72x128xf32>, vector<64x128xf32> -> vector<64x128xf32>
    %86 = arith.addf %80, %85 : vector<64x128xf32>
    %87 = vector.extract_strided_slice %79 {offsets = [0, 1, 0], sizes = [8, 8, 72], strides = [1, 1, 1]} : vector<8x12x72xf32> to vector<8x8x72xf32>
    %88 = vector.shape_cast %87 : vector<8x8x72xf32> to vector<64x72xf32>
    %c1_29 = arith.constant 1 : index
    %c0_30 = arith.constant 0 : index
    %c0_31 = arith.constant 0 : index
    %89 = vector.load %arg5[%c1_29, %c0_30, %c0_31] : memref<5x72x128xf32, #tpu.memory_space<vmem>>, vector<1x72x128xf32>
    %90 = vector.shape_cast %89 : vector<1x72x128xf32> to vector<72x128xf32>
    %cst_32 = arith.constant dense<0.000000e+00> : vector<64x128xf32>
    %91 = tpu.matmul %88, %90, %cst_32 {dimension_numbers = #tpu.dot_dimension_numbers<[1], [0], [0], [1], [0, 0, 1, 1], [], []>} : vector<64x72xf32>, vector<72x128xf32>, vector<64x128xf32> -> vector<64x128xf32>
    %92 = arith.addf %86, %91 : vector<64x128xf32>
    %93 = vector.extract_strided_slice %79 {offsets = [0, 2, 0], sizes = [8, 8, 72], strides = [1, 1, 1]} : vector<8x12x72xf32> to vector<8x8x72xf32>
    %94 = vector.shape_cast %93 : vector<8x8x72xf32> to vector<64x72xf32>
    %c2_33 = arith.constant 2 : index
    %c0_34 = arith.constant 0 : index
    %c0_35 = arith.constant 0 : index
    %95 = vector.load %arg5[%c2_33, %c0_34, %c0_35] : memref<5x72x128xf32, #tpu.memory_space<vmem>>, vector<1x72x128xf32>
    %96 = vector.shape_cast %95 : vector<1x72x128xf32> to vector<72x128xf32>
    %cst_36 = arith.constant dense<0.000000e+00> : vector<64x128xf32>
    %97 = tpu.matmul %94, %96, %cst_36 {dimension_numbers = #tpu.dot_dimension_numbers<[1], [0], [0], [1], [0, 0, 1, 1], [], []>} : vector<64x72xf32>, vector<72x128xf32>, vector<64x128xf32> -> vector<64x128xf32>
    %98 = arith.addf %92, %97 : vector<64x128xf32>
    %99 = vector.extract_strided_slice %79 {offsets = [0, 3, 0], sizes = [8, 8, 72], strides = [1, 1, 1]} : vector<8x12x72xf32> to vector<8x8x72xf32>
    %100 = vector.shape_cast %99 : vector<8x8x72xf32> to vector<64x72xf32>
    %c3_37 = arith.constant 3 : index
    %c0_38 = arith.constant 0 : index
    %c0_39 = arith.constant 0 : index
    %101 = vector.load %arg5[%c3_37, %c0_38, %c0_39] : memref<5x72x128xf32, #tpu.memory_space<vmem>>, vector<1x72x128xf32>
    %102 = vector.shape_cast %101 : vector<1x72x128xf32> to vector<72x128xf32>
    %cst_40 = arith.constant dense<0.000000e+00> : vector<64x128xf32>
    %103 = tpu.matmul %100, %102, %cst_40 {dimension_numbers = #tpu.dot_dimension_numbers<[1], [0], [0], [1], [0, 0, 1, 1], [], []>} : vector<64x72xf32>, vector<72x128xf32>, vector<64x128xf32> -> vector<64x128xf32>
    %104 = arith.addf %98, %103 : vector<64x128xf32>
    %105 = vector.extract_strided_slice %79 {offsets = [0, 4, 0], sizes = [8, 8, 72], strides = [1, 1, 1]} : vector<8x12x72xf32> to vector<8x8x72xf32>
    %106 = vector.shape_cast %105 : vector<8x8x72xf32> to vector<64x72xf32>
    %c4_41 = arith.constant 4 : index
    %c0_42 = arith.constant 0 : index
    %c0_43 = arith.constant 0 : index
    %107 = vector.load %arg5[%c4_41, %c0_42, %c0_43] : memref<5x72x128xf32, #tpu.memory_space<vmem>>, vector<1x72x128xf32>
    %108 = vector.shape_cast %107 : vector<1x72x128xf32> to vector<72x128xf32>
    %cst_44 = arith.constant dense<0.000000e+00> : vector<64x128xf32>
    %109 = tpu.matmul %106, %108, %cst_44 {dimension_numbers = #tpu.dot_dimension_numbers<[1], [0], [0], [1], [0, 0, 1, 1], [], []>} : vector<64x72xf32>, vector<72x128xf32>, vector<64x128xf32> -> vector<64x128xf32>
    %110 = arith.addf %104, %109 : vector<64x128xf32>
    %c0_45 = arith.constant 0 : index
    %c0_46 = arith.constant 0 : index
    %111 = vector.load %arg6[%c0_45, %c0_46] : memref<1x128xf32, #tpu.memory_space<vmem>>, vector<1x128xf32>
    %112 = vector.broadcast %111 : vector<1x128xf32> to vector<64x128xf32>
    %113 = arith.addf %110, %112 : vector<64x128xf32>
    %cst_47 = arith.constant 0.000000e+00 : f32
    %114 = vector.broadcast %cst_47 : f32 to vector<64x128xf32>
    %115 = arith.maximumf %113, %114 : vector<64x128xf32>
    %116 = vector.extract_strided_slice %115 {offsets = [0, 0], sizes = [64, 127], strides = [1, 1]} : vector<64x128xf32> to vector<64x127xf32>
    %117 = vector.extract_strided_slice %115 {offsets = [0, 1], sizes = [64, 127], strides = [1, 1]} : vector<64x128xf32> to vector<64x127xf32>
    %118 = arith.maximumf %116, %117 : vector<64x127xf32>
    %c0_48 = arith.constant 0 : index
    %c0_49 = arith.constant 0 : index
    %119 = vector.load %arg7[%c0_48, %c0_49] : memref<127x64xf32, #tpu.memory_space<vmem>>, vector<127x64xf32>
    %cst_50 = arith.constant dense<0.000000e+00> : vector<64x64xf32>
    %120 = tpu.matmul %118, %119, %cst_50 {dimension_numbers = #tpu.dot_dimension_numbers<[1], [0], [0], [1], [0, 0, 1, 1], [], []>} : vector<64x127xf32>, vector<127x64xf32>, vector<64x64xf32> -> vector<64x64xf32>
    %121 = vector.shape_cast %120 : vector<64x64xf32> to vector<8x8x64xf32>
    %cst_51 = arith.constant 0.000000e+00 : f32
    %122 = vector.broadcast %cst_51 : f32 to vector<8x120xf32>
    %123 = vector.extract_strided_slice %121 {offsets = [0, 0, 0], sizes = [8, 1, 64], strides = [1, 1, 1]} : vector<8x8x64xf32> to vector<8x1x64xf32>
    %124 = vector.shape_cast %123 : vector<8x1x64xf32> to vector<8x64xf32>
    %125 = vector.extract_strided_slice %121 {offsets = [0, 1, 0], sizes = [8, 1, 64], strides = [1, 1, 1]} : vector<8x8x64xf32> to vector<8x1x64xf32>
    %126 = vector.shape_cast %125 : vector<8x1x64xf32> to vector<8x64xf32>
    %127 = arith.maximumf %124, %126 : vector<8x64xf32>
    %c0_52 = arith.constant 0 : index
    %c0_53 = arith.constant 0 : index
    %128 = vector.load %arg8[%c0_52, %c0_53] : memref<256x120xf32, #tpu.memory_space<vmem>>, vector<64x120xf32>
    %cst_54 = arith.constant dense<0.000000e+00> : vector<8x120xf32>
    %129 = tpu.matmul %127, %128, %cst_54 {dimension_numbers = #tpu.dot_dimension_numbers<[1], [0], [0], [1], [0, 0, 1, 1], [], []>} : vector<8x64xf32>, vector<64x120xf32>, vector<8x120xf32> -> vector<8x120xf32>
    %130 = arith.addf %122, %129 : vector<8x120xf32>
    %131 = vector.extract_strided_slice %121 {offsets = [0, 2, 0], sizes = [8, 1, 64], strides = [1, 1, 1]} : vector<8x8x64xf32> to vector<8x1x64xf32>
    %132 = vector.shape_cast %131 : vector<8x1x64xf32> to vector<8x64xf32>
    %133 = vector.extract_strided_slice %121 {offsets = [0, 3, 0], sizes = [8, 1, 64], strides = [1, 1, 1]} : vector<8x8x64xf32> to vector<8x1x64xf32>
    %134 = vector.shape_cast %133 : vector<8x1x64xf32> to vector<8x64xf32>
    %135 = arith.maximumf %132, %134 : vector<8x64xf32>
    %c64 = arith.constant 64 : index
    %c0_55 = arith.constant 0 : index
    %136 = vector.load %arg8[%c64, %c0_55] : memref<256x120xf32, #tpu.memory_space<vmem>>, vector<64x120xf32>
    %cst_56 = arith.constant dense<0.000000e+00> : vector<8x120xf32>
    %137 = tpu.matmul %135, %136, %cst_56 {dimension_numbers = #tpu.dot_dimension_numbers<[1], [0], [0], [1], [0, 0, 1, 1], [], []>} : vector<8x64xf32>, vector<64x120xf32>, vector<8x120xf32> -> vector<8x120xf32>
    %138 = arith.addf %130, %137 : vector<8x120xf32>
    %139 = vector.extract_strided_slice %121 {offsets = [0, 4, 0], sizes = [8, 1, 64], strides = [1, 1, 1]} : vector<8x8x64xf32> to vector<8x1x64xf32>
    %140 = vector.shape_cast %139 : vector<8x1x64xf32> to vector<8x64xf32>
    %141 = vector.extract_strided_slice %121 {offsets = [0, 5, 0], sizes = [8, 1, 64], strides = [1, 1, 1]} : vector<8x8x64xf32> to vector<8x1x64xf32>
    %142 = vector.shape_cast %141 : vector<8x1x64xf32> to vector<8x64xf32>
    %143 = arith.maximumf %140, %142 : vector<8x64xf32>
    %c128 = arith.constant 128 : index
    %c0_57 = arith.constant 0 : index
    %144 = vector.load %arg8[%c128, %c0_57] : memref<256x120xf32, #tpu.memory_space<vmem>>, vector<64x120xf32>
    %cst_58 = arith.constant dense<0.000000e+00> : vector<8x120xf32>
    %145 = tpu.matmul %143, %144, %cst_58 {dimension_numbers = #tpu.dot_dimension_numbers<[1], [0], [0], [1], [0, 0, 1, 1], [], []>} : vector<8x64xf32>, vector<64x120xf32>, vector<8x120xf32> -> vector<8x120xf32>
    %146 = arith.addf %138, %145 : vector<8x120xf32>
    %147 = vector.extract_strided_slice %121 {offsets = [0, 6, 0], sizes = [8, 1, 64], strides = [1, 1, 1]} : vector<8x8x64xf32> to vector<8x1x64xf32>
    %148 = vector.shape_cast %147 : vector<8x1x64xf32> to vector<8x64xf32>
    %149 = vector.extract_strided_slice %121 {offsets = [0, 7, 0], sizes = [8, 1, 64], strides = [1, 1, 1]} : vector<8x8x64xf32> to vector<8x1x64xf32>
    %150 = vector.shape_cast %149 : vector<8x1x64xf32> to vector<8x64xf32>
    %151 = arith.maximumf %148, %150 : vector<8x64xf32>
    %c192 = arith.constant 192 : index
    %c0_59 = arith.constant 0 : index
    %152 = vector.load %arg8[%c192, %c0_59] : memref<256x120xf32, #tpu.memory_space<vmem>>, vector<64x120xf32>
    %cst_60 = arith.constant dense<0.000000e+00> : vector<8x120xf32>
    %153 = tpu.matmul %151, %152, %cst_60 {dimension_numbers = #tpu.dot_dimension_numbers<[1], [0], [0], [1], [0, 0, 1, 1], [], []>} : vector<8x64xf32>, vector<64x120xf32>, vector<8x120xf32> -> vector<8x120xf32>
    %154 = arith.addf %146, %153 : vector<8x120xf32>
    %c0_61 = arith.constant 0 : index
    %c0_62 = arith.constant 0 : index
    %155 = vector.load %arg9[%c0_61, %c0_62] : memref<1x120xf32, #tpu.memory_space<vmem>>, vector<1x120xf32>
    %156 = vector.broadcast %155 : vector<1x120xf32> to vector<8x120xf32>
    %157 = arith.addf %154, %156 : vector<8x120xf32>
    %cst_63 = arith.constant 0.000000e+00 : f32
    %158 = vector.broadcast %cst_63 : f32 to vector<8x120xf32>
    %159 = arith.maximumf %157, %158 : vector<8x120xf32>
    %c0_64 = arith.constant 0 : index
    %c0_65 = arith.constant 0 : index
    %160 = vector.load %arg10[%c0_64, %c0_65] : memref<120x84xf32, #tpu.memory_space<vmem>>, vector<120x84xf32>
    %cst_66 = arith.constant dense<0.000000e+00> : vector<8x84xf32>
    %161 = tpu.matmul %159, %160, %cst_66 {dimension_numbers = #tpu.dot_dimension_numbers<[1], [0], [0], [1], [0, 0, 1, 1], [], []>} : vector<8x120xf32>, vector<120x84xf32>, vector<8x84xf32> -> vector<8x84xf32>
    %c0_67 = arith.constant 0 : index
    %c0_68 = arith.constant 0 : index
    %162 = vector.load %arg11[%c0_67, %c0_68] : memref<1x84xf32, #tpu.memory_space<vmem>>, vector<1x84xf32>
    %163 = vector.broadcast %162 : vector<1x84xf32> to vector<8x84xf32>
    %164 = arith.addf %161, %163 : vector<8x84xf32>
    %cst_69 = arith.constant 0.000000e+00 : f32
    %165 = vector.broadcast %cst_69 : f32 to vector<8x84xf32>
    %166 = arith.maximumf %164, %165 : vector<8x84xf32>
    %c0_70 = arith.constant 0 : index
    %c0_71 = arith.constant 0 : index
    %167 = vector.load %arg12[%c0_70, %c0_71] : memref<84x128xf32, #tpu.memory_space<vmem>>, vector<84x128xf32>
    %cst_72 = arith.constant dense<0.000000e+00> : vector<8x128xf32>
    %168 = tpu.matmul %166, %167, %cst_72 {dimension_numbers = #tpu.dot_dimension_numbers<[1], [0], [0], [1], [0, 0, 1, 1], [], []>} : vector<8x84xf32>, vector<84x128xf32>, vector<8x128xf32> -> vector<8x128xf32>
    %c0_73 = arith.constant 0 : index
    %c0_74 = arith.constant 0 : index
    %169 = vector.load %arg13[%c0_73, %c0_74] : memref<1x128xf32, #tpu.memory_space<vmem>>, vector<1x128xf32>
    %170 = vector.broadcast %169 : vector<1x128xf32> to vector<8x128xf32>
    %171 = arith.addf %168, %170 : vector<8x128xf32>
    %c0_75 = arith.constant 0 : index
    %c0_76 = arith.constant 0 : index
    %172 = vector.load %arg14[%c0_75, %c0_76] : memref<8x128xf32, #tpu.memory_space<vmem>>, vector<8x128xf32>
    tpu.vector_store %arg14[%c0_75, %c0_76], %171 {strides = array<i32>} : memref<8x128xf32, #tpu.memory_space<vmem>>, vector<8x128xf32>,
    return
  }
  func.func @transform_0(%arg0: i32) -> (i32, i32, i32) {
    %c0_i32 = arith.constant 0 : i32
    %c0_i32_0 = arith.constant 0 : i32
    %c0_i32_1 = arith.constant 0 : i32
    return %arg0, %c0_i32, %c0_i32_0 : i32, i32, i32
  }
  func.func @transform_1(%arg0: i32) -> (i32, i32, i32) {
    %c0_i32 = arith.constant 0 : i32
    %c0_i32_0 = arith.constant 0 : i32
    %c0_i32_1 = arith.constant 0 : i32
    %c0_i32_2 = arith.constant 0 : i32
    return %c0_i32, %c0_i32_0, %c0_i32_1 : i32, i32, i32
  }
  func.func @transform_2(%arg0: i32) -> (i32, i32) {
    %c0_i32 = arith.constant 0 : i32
    %c0_i32_0 = arith.constant 0 : i32
    %c0_i32_1 = arith.constant 0 : i32
    return %c0_i32, %c0_i32_0 : i32, i32
  }
  func.func @transform_3(%arg0: i32) -> (i32, i32) {
    %c0_i32 = arith.constant 0 : i32
    %c0_i32_0 = arith.constant 0 : i32
    %c0_i32_1 = arith.constant 0 : i32
    return %c0_i32, %c0_i32_0 : i32, i32
  }
  func.func @transform_4(%arg0: i32) -> (i32, i32, i32) {
    %c0_i32 = arith.constant 0 : i32
    %c0_i32_0 = arith.constant 0 : i32
    %c0_i32_1 = arith.constant 0 : i32
    %c0_i32_2 = arith.constant 0 : i32
    return %c0_i32, %c0_i32_0, %c0_i32_1 : i32, i32, i32
  }
  func.func @transform_5(%arg0: i32) -> (i32, i32) {
    %c0_i32 = arith.constant 0 : i32
    %c0_i32_0 = arith.constant 0 : i32
    %c0_i32_1 = arith.constant 0 : i32
    return %c0_i32, %c0_i32_0 : i32, i32
  }
  func.func @transform_6(%arg0: i32) -> (i32, i32) {
    %c0_i32 = arith.constant 0 : i32
    %c0_i32_0 = arith.constant 0 : i32
    %c0_i32_1 = arith.constant 0 : i32
    return %c0_i32, %c0_i32_0 : i32, i32
  }
  func.func @transform_7(%arg0: i32) -> (i32, i32) {
    %c0_i32 = arith.constant 0 : i32
    %c0_i32_0 = arith.constant 0 : i32
    %c0_i32_1 = arith.constant 0 : i32
    return %c0_i32, %c0_i32_0 : i32, i32
  }
  func.func @transform_8(%arg0: i32) -> (i32, i32) {
    %c0_i32 = arith.constant 0 : i32
    %c0_i32_0 = arith.constant 0 : i32
    %c0_i32_1 = arith.constant 0 : i32
    return %c0_i32, %c0_i32_0 : i32, i32
  }
  func.func @transform_9(%arg0: i32) -> (i32, i32) {
    %c0_i32 = arith.constant 0 : i32
    %c0_i32_0 = arith.constant 0 : i32
    %c0_i32_1 = arith.constant 0 : i32
    return %c0_i32, %c0_i32_0 : i32, i32
  }
  func.func @transform_10(%arg0: i32) -> (i32, i32) {
    %c0_i32 = arith.constant 0 : i32
    %c0_i32_0 = arith.constant 0 : i32
    %c0_i32_1 = arith.constant 0 : i32
    return %c0_i32, %c0_i32_0 : i32, i32
  }
  func.func @transform_11(%arg0: i32) -> (i32, i32) {
    %c0_i32 = arith.constant 0 : i32
    %c0_i32_0 = arith.constant 0 : i32
    %c0_i32_1 = arith.constant 0 : i32
    return %c0_i32, %c0_i32_0 : i32, i32
  }
  func.func @transform_12(%arg0: i32) -> (i32, i32) {
    %c0_i32 = arith.constant 0 : i32
    %c0_i32_0 = arith.constant 0 : i32
    %c0_i32_1 = arith.constant 0 : i32
    return %c0_i32, %c0_i32_0 : i32, i32
  }
  func.func @transform_13(%arg0: i32) -> (i32, i32) {
    %c0_i32 = arith.constant 0 : i32
    %c0_i32_0 = arith.constant 0 : i32
    return %arg0, %c0_i32 : i32, i32
  }
}

</mosaic_0001>

<llo_original>
// kernel: lenet_forward.1
$region0: #{lenet_forward.1}
  #allocation0 [shape = 'u32[]', space=smem, size = 0x4, offset = 0x4, fixed_abs, tag = 'smem constant byte address 0x4 - core index']
  #allocation1 [shape = 'u32[72,128]{1,0:T(1,128)}', space=vmem, size = 0x9000, scoped, tag = 'internal scratch']
  %s0 = inlined_call_operand.vmem [shape: f32[16,28,28], index: 0, kind: input, shape index: {}]
  %s1 = inlined_call_operand.vmem [shape: f32[5,28,144], index: 1, kind: input, shape index: {}]
  %s2 = inlined_call_operand.vmem [shape: f32[1,144], index: 2, kind: input, shape index: {}]
  %s3 = inlined_call_operand.vmem [shape: f32[143,72], index: 3, kind: input, shape index: {}]
  %s4 = inlined_call_operand.vmem [shape: f32[5,72,128], index: 4, kind: input, shape index: {}]
  %s5 = inlined_call_operand.vmem [shape: f32[1,128], index: 5, kind: input, shape index: {}]
  %s6 = inlined_call_operand.vmem [shape: f32[127,64], index: 6, kind: input, shape index: {}]
  %s7 = inlined_call_operand.vmem [shape: f32[256,120], index: 7, kind: input, shape index: {}]
  %s8 = inlined_call_operand.vmem [shape: f32[1,120], index: 8, kind: input, shape index: {}]
  %s9 = inlined_call_operand.vmem [shape: f32[120,84], index: 9, kind: input, shape index: {}]
  %s10 = inlined_call_operand.vmem [shape: f32[1,84], index: 10, kind: input, shape index: {}]
  %s11 = inlined_call_operand.vmem [shape: f32[84,128], index: 11, kind: input, shape index: {}]
  %s12 = inlined_call_operand.vmem [shape: f32[1,128], index: 12, kind: input, shape index: {}]
  %s13 = inlined_call_operand.hbm [shape: f32[16,128], index: 13, kind: output, shape index: {}]
  %s14 = sld [smem:[#allocation0]]
  $region85: #{lenet_forward.1} parent=0
    _
  %s16 = ssub.s32 1, %s14
  %s17 = scalar_select 0, %s16, %s14
  $region1: #{lenet_forward.1} parent=0
    #allocation2 [shape = 'u8[8192]{0}', space=vmem, size = 0x2000, scoped, tag = 'output window, operand 0']
    #allocation3 [shape = 's32[2]{0}', space=sflag, size = 0x8, scoped, tag = 'scoped memory for lenet_forward.1']
    %18 = vsyncpa [#allocation3], 0
    %s19 = scalar_lea.sflag [#allocation3], 1
    %20 = vsyncpa %s19, 0
    loop: start=0, step=1, limit=4
    $region2: #{lenet_forward.1} parent=1 // loop_pre_header
      _
    $region3: #{lenet_forward.1} parent=1 // loop_header
      %s22 = sphi 0, %s26
      %p23 = scmp.ge.s32.totalorder %s22, 4
      %s32 = sphi 0, %s34
      %s35 = sphi 0, %s32
      %s36 = sphi 0, %s35
      %s52 = sphi 0, %s36
      %s56 = sphi 0, %s56
      %s58 = sphi 0, %s56
      %s59 = sphi 0, %s58
      %s73 = sphi 0, %s59
      %s77 = sphi 0, %s77
      %s79 = sphi 0, %s77
      %s80 = sphi 0, %s79
      %s94 = sphi 0, %s80
      %s98 = sphi 0, %s98
      %s100 = sphi 0, %s98
      %s101 = sphi 0, %s100
      %s115 = sphi 0, %s101
      %s119 = sphi 0, %s119
      %s121 = sphi 0, %s119
      %s122 = sphi 0, %s121
      %s136 = sphi 0, %s122
      %s140 = sphi 0, %s140
      %s142 = sphi 0, %s140
      %s143 = sphi 0, %s142
      %s157 = sphi 0, %s143
      %s161 = sphi 0, %s161
      %s163 = sphi 0, %s161
      %s164 = sphi 0, %s163
      %s178 = sphi 0, %s164
      %s182 = sphi 0, %s182
      %s184 = sphi 0, %s182
      %s185 = sphi 0, %s184
      %s199 = sphi 0, %s185
      %s203 = sphi 0, %s203
      %s205 = sphi 0, %s203
      %s206 = sphi 0, %s205
      %s220 = sphi 0, %s206
      %s224 = sphi 0, %s224
      %s226 = sphi 0, %s224
      %s227 = sphi 0, %s226
      %s241 = sphi 0, %s227
      %s245 = sphi 0, %s245
      %s247 = sphi 0, %s245
      %s248 = sphi 0, %s247
      %s262 = sphi 0, %s248
      %s266 = sphi 0, %s266
      %s268 = sphi 0, %s266
      %s269 = sphi 0, %s268
      %s283 = sphi 0, %s269
      %s287 = sphi 0, %s287
      %s289 = sphi 0, %s287
      %s290 = sphi 0, %s289
      %s304 = sphi 0, %s290
      %s310 = sphi 0, %s312
      %s313 = sphi 0, %s310
      %s314 = sphi 0, %s313
      %s330 = sphi 0, %s314
    $region4: #{lenet_forward.1} parent=1 // loop_header_branch
      %25 = sbr.rel (%p23) target = $region8
    $region5: #{lenet_forward.1} parent=1 // loop_body
      %s27 = ssub.s32 %s22, 1
      %s28 = ssub.s32 %s22, 2
      %s29 = sadd.s32 %s22, 1
      %s30 = ssub.s32 %s22, %s29
      %p31 = scmp.eq.s32.totalorder %s30, 0
      %s33 = sadd.s32 %s32, 1
      %s34 = scalar_select %p31, %s32, %s33
      %p37 = pneg %p31
      %p38 = scmp.eq.s32.totalorder %s22, 1
      %p39 = por %p37, %p38
      %p40 = scmp.ne.s32.totalorder %s32, %s35
      %p41 = scmp.eq.s32.totalorder %s22, 0
      %p42 = por %p40, %p41
      %p43 = scmp.ne.s32.totalorder %s32, %s35
      %p44 = scmp.eq.s32.totalorder %s27, 1
      %p45 = por %p43, %p44
      %p46 = scmp.ne.s32.totalorder %s35, %s36
      %p47 = scmp.eq.s32.totalorder %s27, 0
      %p48 = por %p46, %p47
      %p49 = scmp.ne.s32.totalorder %s35, %s36
      %p50 = scmp.eq.s32.totalorder %s28, 1
      %p51 = por %p49, %p50
      %p53 = scmp.ne.s32.totalorder %s36, %s52
      %p54 = scmp.eq.s32.totalorder %s28, 0
      %p55 = por %p53, %p54
      %s57 = sadd.s32 %s56, 1
      %p60 = scmp.eq.s32.totalorder %s22, 1
      %p61 = scmp.ne.s32.totalorder %s56, %s58
      %p62 = scmp.eq.s32.totalorder %s22, 0
      %p63 = por %p61, %p62
      %p64 = scmp.ne.s32.totalorder %s56, %s58
      %p65 = scmp.eq.s32.totalorder %s27, 1
      %p66 = por %p64, %p65
      %p67 = scmp.ne.s32.totalorder %s58, %s59
      %p68 = scmp.eq.s32.totalorder %s27, 0
      %p69 = por %p67, %p68
      %p70 = scmp.ne.s32.totalorder %s58, %s59
      %p71 = scmp.eq.s32.totalorder %s28, 1
      %p72 = por %p70, %p71
      %p74 = scmp.ne.s32.totalorder %s59, %s73
      %p75 = scmp.eq.s32.totalorder %s28, 0
      %p76 = por %p74, %p75
      %s78 = sadd.s32 %s77, 1
      %p81 = scmp.eq.s32.totalorder %s22, 1
      %p82 = scmp.ne.s32.totalorder %s77, %s79
      %p83 = scmp.eq.s32.totalorder %s22, 0
      %p84 = por %p82, %p83
      %p85 = scmp.ne.s32.totalorder %s77, %s79
      %p86 = scmp.eq.s32.totalorder %s27, 1
      %p87 = por %p85, %p86
      %p88 = scmp.ne.s32.totalorder %s79, %s80
      %p89 = scmp.eq.s32.totalorder %s27, 0
      %p90 = por %p88, %p89
      %p91 = scmp.ne.s32.totalorder %s79, %s80
      %p92 = scmp.eq.s32.totalorder %s28, 1
      %p93 = por %p91, %p92
      %p95 = scmp.ne.s32.totalorder %s80, %s94
      %p96 = scmp.eq.s32.totalorder %s28, 0
      %p97 = por %p95, %p96
      %s99 = sadd.s32 %s98, 1
      %p102 = scmp.eq.s32.totalorder %s22, 1
      %p103 = scmp.ne.s32.totalorder %s98, %s100
      %p104 = scmp.eq.s32.totalorder %s22, 0
      %p105 = por %p103, %p104
      %p106 = scmp.ne.s32.totalorder %s98, %s100
      %p107 = scmp.eq.s32.totalorder %s27, 1
      %p108 = por %p106, %p107
      %p109 = scmp.ne.s32.totalorder %s100, %s101
      %p110 = scmp.eq.s32.totalorder %s27, 0
      %p111 = por %p109, %p110
      %p112 = scmp.ne.s32.totalorder %s100, %s101
      %p113 = scmp.eq.s32.totalorder %s28, 1
      %p114 = por %p112, %p113
      %p116 = scmp.ne.s32.totalorder %s101, %s115
      %p117 = scmp.eq.s32.totalorder %s28, 0
      %p118 = por %p116, %p117
      %s120 = sadd.s32 %s119, 1
      %p123 = scmp.eq.s32.totalorder %s22, 1
      %p124 = scmp.ne.s32.totalorder %s119, %s121
      %p125 = scmp.eq.s32.totalorder %s22, 0
      %p126 = por %p124, %p125
      %p127 = scmp.ne.s32.totalorder %s119, %s121
      %p128 = scmp.eq.s32.totalorder %s27, 1
      %p129 = por %p127, %p128
      %p130 = scmp.ne.s32.totalorder %s121, %s122
      %p131 = scmp.eq.s32.totalorder %s27, 0
      %p132 = por %p130, %p131
      %p133 = scmp.ne.s32.totalorder %s121, %s122
      %p134 = scmp.eq.s32.totalorder %s28, 1
      %p135 = por %p133, %p134
      %p137 = scmp.ne.s32.totalorder %s122, %s136
      %p138 = scmp.eq.s32.totalorder %s28, 0
      %p139 = por %p137, %p138
      %s141 = sadd.s32 %s140, 1
      %p144 = scmp.eq.s32.totalorder %s22, 1
      %p145 = scmp.ne.s32.totalorder %s140, %s142
      %p146 = scmp.eq.s32.totalorder %s22, 0
      %p147 = por %p145, %p146
      %p148 = scmp.ne.s32.totalorder %s140, %s142
      %p149 = scmp.eq.s32.totalorder %s27, 1
      %p150 = por %p148, %p149
      %p151 = scmp.ne.s32.totalorder %s142, %s143
      %p152 = scmp.eq.s32.totalorder %s27, 0
      %p153 = por %p151, %p152
      %p154 = scmp.ne.s32.totalorder %s142, %s143
      %p155 = scmp.eq.s32.totalorder %s28, 1
      %p156 = por %p154, %p155
      %p158 = scmp.ne.s32.totalorder %s143, %s157
      %p159 = scmp.eq.s32.totalorder %s28, 0
      %p160 = por %p158, %p159
      %s162 = sadd.s32 %s161, 1
      %p165 = scmp.eq.s32.totalorder %s22, 1
      %p166 = scmp.ne.s32.totalorder %s161, %s163
      %p167 = scmp.eq.s32.totalorder %s22, 0
      %p168 = por %p166, %p167
      %p169 = scmp.ne.s32.totalorder %s161, %s163
      %p170 = scmp.eq.s32.totalorder %s27, 1
      %p171 = por %p169, %p170
      %p172 = scmp.ne.s32.totalorder %s163, %s164
      %p173 = scmp.eq.s32.totalorder %s27, 0
      %p174 = por %p172, %p173
      %p175 = scmp.ne.s32.totalorder %s163, %s164
      %p176 = scmp.eq.s32.totalorder %s28, 1
      %p177 = por %p175, %p176
      %p179 = scmp.ne.s32.totalorder %s164, %s178
      %p180 = scmp.eq.s32.totalorder %s28, 0
      %p181 = por %p179, %p180
      %s183 = sadd.s32 %s182, 1
      %p186 = scmp.eq.s32.totalorder %s22, 1
      %p187 = scmp.ne.s32.totalorder %s182, %s184
      %p188 = scmp.eq.s32.totalorder %s22, 0
      %p189 = por %p187, %p188
      %p190 = scmp.ne.s32.totalorder %s182, %s184
      %p191 = scmp.eq.s32.totalorder %s27, 1
      %p192 = por %p190, %p191
      %p193 = scmp.ne.s32.totalorder %s184, %s185
      %p194 = scmp.eq.s32.totalorder %s27, 0
      %p195 = por %p193, %p194
      %p196 = scmp.ne.s32.totalorder %s184, %s185
      %p197 = scmp.eq.s32.totalorder %s28, 1
      %p198 = por %p196, %p197
      %p200 = scmp.ne.s32.totalorder %s185, %s199
      %p201 = scmp.eq.s32.totalorder %s28, 0
      %p202 = por %p200, %p201
      %s204 = sadd.s32 %s203, 1
      %p207 = scmp.eq.s32.totalorder %s22, 1
      %p208 = scmp.ne.s32.totalorder %s203, %s205
      %p209 = scmp.eq.s32.totalorder %s22, 0
      %p210 = por %p208, %p209
      %p211 = scmp.ne.s32.totalorder %s203, %s205
      %p212 = scmp.eq.s32.totalorder %s27, 1
      %p213 = por %p211, %p212
      %p214 = scmp.ne.s32.totalorder %s205, %s206
      %p215 = scmp.eq.s32.totalorder %s27, 0
      %p216 = por %p214, %p215
      %p217 = scmp.ne.s32.totalorder %s205, %s206
      %p218 = scmp.eq.s32.totalorder %s28, 1
      %p219 = por %p217, %p218
      %p221 = scmp.ne.s32.totalorder %s206, %s220
      %p222 = scmp.eq.s32.totalorder %s28, 0
      %p223 = por %p221, %p222
      %s225 = sadd.s32 %s224, 1
      %p228 = scmp.eq.s32.totalorder %s22, 1
      %p229 = scmp.ne.s32.totalorder %s224, %s226
      %p230 = scmp.eq.s32.totalorder %s22, 0
      %p231 = por %p229, %p230
      %p232 = scmp.ne.s32.totalorder %s224, %s226
      %p233 = scmp.eq.s32.totalorder %s27, 1
      %p234 = por %p232, %p233
      %p235 = scmp.ne.s32.totalorder %s226, %s227
      %p236 = scmp.eq.s32.totalorder %s27, 0
      %p237 = por %p235, %p236
      %p238 = scmp.ne.s32.totalorder %s226, %s227
      %p239 = scmp.eq.s32.totalorder %s28, 1
      %p240 = por %p238, %p239
      %p242 = scmp.ne.s32.totalorder %s227, %s241
      %p243 = scmp.eq.s32.totalorder %s28, 0
      %p244 = por %p242, %p243
      %s246 = sadd.s32 %s245, 1
      %p249 = scmp.eq.s32.totalorder %s22, 1
      %p250 = scmp.ne.s32.totalorder %s245, %s247
      %p251 = scmp.eq.s32.totalorder %s22, 0
      %p252 = por %p250, %p251
      %p253 = scmp.ne.s32.totalorder %s245, %s247
      %p254 = scmp.eq.s32.totalorder %s27, 1
      %p255 = por %p253, %p254
      %p256 = scmp.ne.s32.totalorder %s247, %s248
      %p257 = scmp.eq.s32.totalorder %s27, 0
      %p258 = por %p256, %p257
      %p259 = scmp.ne.s32.totalorder %s247, %s248
      %p260 = scmp.eq.s32.totalorder %s28, 1
      %p261 = por %p259, %p260
      %p263 = scmp.ne.s32.totalorder %s248, %s262
      %p264 = scmp.eq.s32.totalorder %s28, 0
      %p265 = por %p263, %p264
      %s267 = sadd.s32 %s266, 1
      %p270 = scmp.eq.s32.totalorder %s22, 1
      %p271 = scmp.ne.s32.totalorder %s266, %s268
      %p272 = scmp.eq.s32.totalorder %s22, 0
      %p273 = por %p271, %p272
      %p274 = scmp.ne.s32.totalorder %s266, %s268
      %p275 = scmp.eq.s32.totalorder %s27, 1
      %p276 = por %p274, %p275
      %p277 = scmp.ne.s32.totalorder %s268, %s269
      %p278 = scmp.eq.s32.totalorder %s27, 0
      %p279 = por %p277, %p278
      %p280 = scmp.ne.s32.totalorder %s268, %s269
      %p281 = scmp.eq.s32.totalorder %s28, 1
      %p282 = por %p280, %p281
      %p284 = scmp.ne.s32.totalorder %s269, %s283
      %p285 = scmp.eq.s32.totalorder %s28, 0
      %p286 = por %p284, %p285
      %s288 = sadd.s32 %s287, 1
      %p291 = scmp.eq.s32.totalorder %s22, 1
      %p292 = scmp.ne.s32.totalorder %s287, %s289
      %p293 = scmp.eq.s32.totalorder %s22, 0
      %p294 = por %p292, %p293
      %p295 = scmp.ne.s32.totalorder %s287, %s289
      %p296 = scmp.eq.s32.totalorder %s27, 1
      %p297 = por %p295, %p296
      %p298 = scmp.ne.s32.totalorder %s289, %s290
      %p299 = scmp.eq.s32.totalorder %s27, 0
      %p300 = por %p298, %p299
      %p301 = scmp.ne.s32.totalorder %s289, %s290
      %p302 = scmp.eq.s32.totalorder %s28, 1
      %p303 = por %p301, %p302
      %p305 = scmp.ne.s32.totalorder %s290, %s304
      %p306 = scmp.eq.s32.totalorder %s28, 0
      %p307 = por %p305, %p306
      %s308 = ssub.s32 %s22, %s29
      %p309 = scmp.eq.s32.totalorder %s308, 0
      %s311 = sadd.s32 %s310, 1
      %s312 = scalar_select %p309, %s310, %s311
      %p315 = pneg %p309
      %p316 = scmp.eq.s32.totalorder %s22, 1
      %p317 = por %p315, %p316
      %p318 = scmp.ne.s32.totalorder %s310, %s313
      %p319 = scmp.eq.s32.totalorder %s22, 0
      %p320 = por %p318, %p319
      %p321 = scmp.ne.s32.totalorder %s310, %s313
      %p322 = scmp.eq.s32.totalorder %s27, 1
      %p323 = por %p321, %p322
      %p324 = scmp.ne.s32.totalorder %s313, %s314
      %p325 = scmp.eq.s32.totalorder %s27, 0
      %p326 = por %p324, %p325
      %p327 = scmp.ne.s32.totalorder %s313, %s314
      %p328 = scmp.eq.s32.totalorder %s28, 1
      %p329 = por %p327, %p328
      %p331 = scmp.ne.s32.totalorder %s314, %s330
      %p332 = scmp.eq.s32.totalorder %s28, 0
      %p333 = por %p331, %p332
      %p334 = scmp.le.s32.totalorder 1, %s22
      %p335 = scmp.lt.s32.totalorder %s22, 3
      %p336 = pnand %p334, %p335
      %p337 = pneg %p336
      // Predicated region
      $region9: #{lenet_forward.1} parent=5 // pred_check
        _
      $region10: #{lenet_forward.1} parent=5 // pred_check_branch
        %339 = sbr.rel (%p336) target = $region12
      $region11: #{lenet_forward.1} parent=5 // pred_region
        %s340 = ssub.s32 %s22, 1
        // Predicated region
        $region13: #{lenet_forward.1} parent=11 // pred_check
          %p341 = pneg %p69
        $region14: #{lenet_forward.1} parent=11 // pred_check_branch
          %343 = sbr.rel (%p341) target = $region16
        $region15: #{lenet_forward.1} parent=11 // pred_region
          _
        $region16: #{lenet_forward.1} parent=11 // pred_fallthru
          _
        // Predicated region
        $region17: #{lenet_forward.1} parent=11 // pred_check
          %p344 = pneg %p90
        $region18: #{lenet_forward.1} parent=11 // pred_check_branch
          %346 = sbr.rel (%p344) target = $region20
        $region19: #{lenet_forward.1} parent=11 // pred_region
          _
        $region20: #{lenet_forward.1} parent=11 // pred_fallthru
          _
        // Predicated region
        $region21: #{lenet_forward.1} parent=11 // pred_check
          %p347 = pneg %p111
        $region22: #{lenet_forward.1} parent=11 // pred_check_branch
          %349 = sbr.rel (%p347) target = $region24
        $region23: #{lenet_forward.1} parent=11 // pred_region
          _
        $region24: #{lenet_forward.1} parent=11 // pred_fallthru
          _
        // Predicated region
        $region25: #{lenet_forward.1} parent=11 // pred_check
          %p350 = pneg %p132
        $region26: #{lenet_forward.1} parent=11 // pred_check_branch
          %352 = sbr.rel (%p350) target = $region28
        $region27: #{lenet_forward.1} parent=11 // pred_region
          _
        $region28: #{lenet_forward.1} parent=11 // pred_fallthru
          _
        // Predicated region
        $region29: #{lenet_forward.1} parent=11 // pred_check
          %p353 = pneg %p153
        $region30: #{lenet_forward.1} parent=11 // pred_check_branch
          %355 = sbr.rel (%p353) target = $region32
        $region31: #{lenet_forward.1} parent=11 // pred_region
          _
        $region32: #{lenet_forward.1} parent=11 // pred_fallthru
          _
        // Predicated region
        $region33: #{lenet_forward.1} parent=11 // pred_check
          %p356 = pneg %p174
        $region34: #{lenet_forward.1} parent=11 // pred_check_branch
          %358 = sbr.rel (%p356) target = $region36
        $region35: #{lenet_forward.1} parent=11 // pred_region
          _
        $region36: #{lenet_forward.1} parent=11 // pred_fallthru
          _
        // Predicated region
        $region37: #{lenet_forward.1} parent=11 // pred_check
          %p359 = pneg %p195
        $region38: #{lenet_forward.1} parent=11 // pred_check_branch
          %361 = sbr.rel (%p359) target = $region40
        $region39: #{lenet_forward.1} parent=11 // pred_region
          _
        $region40: #{lenet_forward.1} parent=11 // pred_fallthru
          _
        // Predicated region
        $region41: #{lenet_forward.1} parent=11 // pred_check
          %p362 = pneg %p216
        $region42: #{lenet_forward.1} parent=11 // pred_check_branch
          %364 = sbr.rel (%p362) target = $region44
        $region43: #{lenet_forward.1} parent=11 // pred_region
          _
        $region44: #{lenet_forward.1} parent=11 // pred_fallthru
          _
        // Predicated region
        $region45: #{lenet_forward.1} parent=11 // pred_check
          %p365 = pneg %p237
        $region46: #{lenet_forward.1} parent=11 // pred_check_branch
          %367 = sbr.rel (%p365) target = $region48
        $region47: #{lenet_forward.1} parent=11 // pred_region
          _
        $region48: #{lenet_forward.1} parent=11 // pred_fallthru
          _
        // Predicated region
        $region49: #{lenet_forward.1} parent=11 // pred_check
          %p368 = pneg %p258
        $region50: #{lenet_forward.1} parent=11 // pred_check_branch
          %370 = sbr.rel (%p368) target = $region52
        $region51: #{lenet_forward.1} parent=11 // pred_region
          _
        $region52: #{lenet_forward.1} parent=11 // pred_fallthru
          _
        // Predicated region
        $region53: #{lenet_forward.1} parent=11 // pred_check
          %p371 = pneg %p279
        $region54: #{lenet_forward.1} parent=11 // pred_check_branch
          %373 = sbr.rel (%p371) target = $region56
        $region55: #{lenet_forward.1} parent=11 // pred_region
          _
        $region56: #{lenet_forward.1} parent=11 // pred_fallthru
          _
        // Predicated region
        $region57: #{lenet_forward.1} parent=11 // pred_check
          %p374 = pneg %p300
        $region58: #{lenet_forward.1} parent=11 // pred_check_branch
          %376 = sbr.rel (%p374) target = $region60
        $region59: #{lenet_forward.1} parent=11 // pred_region
          _
        $region60: #{lenet_forward.1} parent=11 // pred_fallthru
          _
      $region12: #{lenet_forward.1} parent=5 // pred_fallthru
        _
      %p377 = scmp.lt.s32.totalorder %s22, 2
      // Predicated region
      $region61: #{lenet_forward.1} parent=5 // pred_check
        %p378 = pneg %p377
      $region62: #{lenet_forward.1} parent=5 // pred_check_branch
        %380 = sbr.rel (%p378) target = $region64
      $region63: #{lenet_forward.1} parent=5 // pred_region
        // Predicated region
        $region65: #{lenet_forward.1} parent=63 // pred_check
          %p381 = pneg %p42
        $region66: #{lenet_forward.1} parent=63 // pred_check_branch
          %383 = sbr.rel (%p381) target = $region68
        $region67: #{lenet_forward.1} parent=63 // pred_region
          %s384 = smul.u32 8, %s22
          %p385 = scmp.lt.s32.totalorder %s384, 15
          %s386 = scalar_select %p385, %s384, 15
          %s387 = smul.addr %s386, 4
          %s388 = smul.addr %s387, 8
          %s389 = scalar_lea.vmem %s0, %s388
          %s390 = smul.u32 8, %s22
        $region68: #{lenet_forward.1} parent=63 // pred_fallthru
          _
      $region64: #{lenet_forward.1} parent=5 // pred_fallthru
        _
      %p391 = scmp.le.s32.totalorder 1, %s22
      %p392 = scmp.lt.s32.totalorder %s22, 3
      %p393 = pnand %p391, %p392
      %p394 = pneg %p393
      // Predicated region
      $region69: #{lenet_forward.1} parent=5 // pred_check
        _
      $region70: #{lenet_forward.1} parent=5 // pred_check_branch
        %396 = sbr.rel (%p393) target = $region72
      $region71: #{lenet_forward.1} parent=5 // pred_region
        %s397 = ssub.s32 %s22, 1
        %s398 = smul.u32 8, %s27
        %p399 = scmp.lt.s32.totalorder %s398, 15
        %s400 = scalar_select %p399, %s398, 15
        %s401 = smul.addr %s400, 4
        %s402 = smul.addr %s401, 8
        %s403 = scalar_lea.vmem %s0, %s402
        %p404 = pneg %p48
        %p405 = pneg %p45
        %p406 = pneg %p69
        %p407 = pneg %p66
        %p408 = pneg %p90
        %p409 = pneg %p87
        %p410 = pneg %p111
        %p411 = pneg %p108
        %p412 = pneg %p132
        %p413 = pneg %p129
        %p414 = pneg %p153
        %p415 = pneg %p150
        %p416 = pneg %p174
        %p417 = pneg %p171
        %p418 = pneg %p195
        %p419 = pneg %p192
        %p420 = pneg %p216
        %p421 = pneg %p213
        %p422 = pneg %p237
        %p423 = pneg %p234
        %p424 = pneg %p258
        %p425 = pneg %p255
        %p426 = pneg %p279
        %p427 = pneg %p276
        %p428 = pneg %p300
        %p429 = pneg %p297
        %p430 = pneg %p326
        %p431 = pneg %p323
        %s432 = sand.u32 %s313, 1
        %s433 = scalar_lea.sflag [#allocation3], %s432
        %s434 = sand.u32 %s313, 1
        %s435 = smul.addr %s434, 8
        %s436 = scalar_lea.vmem [#allocation2], %s435
        %s437 = smul.u32 8, %s27
        %p438 = scmp.lt.s32.totalorder %s437, 15
        %s439 = scalar_select %p438, %s437, 15
        %s440 = smul.addr %s439, 4
        %s441 = smul.addr %s440, 8
        %s442 = scalar_lea.vmem %s0, %s441
        %s443 = smul.u32 8, %s27
        %v444 = vld [vmem:[%s442] sm:$0xff]
        %v445 = vld [vmem:[%s442 + $0x8] sm:$0xff]
        %v446 = vld [vmem:[%s442 + $0x10] sm:$0xff]
        %v447 = vld [vmem:[%s442 + $0x18] sm:$0xf]
        %v448 = vld [vmem:[%s442 + $0x20] sm:$0xff]
        %v449 = vld [vmem:[%s442 + $0x28] sm:$0xff]
        %v450 = vld [vmem:[%s442 + $0x30] sm:$0xff]
        %v451 = vld [vmem:[%s442 + $0x38] sm:$0xf]
        %v452 = vld [vmem:[%s442 + $0x40] sm:$0xff]
        %v453 = vld [vmem:[%s442 + $0x48] sm:$0xff]
        %v454 = vld [vmem:[%s442 + $0x50] sm:$0xff]
        %v455 = vld [vmem:[%s442 + $0x58] sm:$0xf]
        %v456 = vld [vmem:[%s442 + $0x60] sm:$0xff]
        %v457 = vld [vmem:[%s442 + $0x68] sm:$0xff]
        %v458 = vld [vmem:[%s442 + $0x70] sm:$0xff]
        %v459 = vld [vmem:[%s442 + $0x78] sm:$0xf]
        %v460 = vld [vmem:[%s442 + $0x80] sm:$0xff]
        %v461 = vld [vmem:[%s442 + $0x88] sm:$0xff]
        %v462 = vld [vmem:[%s442 + $0x90] sm:$0xff]
        %v463 = vld [vmem:[%s442 + $0x98] sm:$0xf]
        %v464 = vld [vmem:[%s442 + $0xa0] sm:$0xff]
        %v465 = vld [vmem:[%s442 + $0xa8] sm:$0xff]
        %v466 = vld [vmem:[%s442 + $0xb0] sm:$0xff]
        %v467 = vld [vmem:[%s442 + $0xb8] sm:$0xf]
        %v468 = vld [vmem:[%s442 + $0xc0] sm:$0xff]
        %v469 = vld [vmem:[%s442 + $0xc8] sm:$0xff]
        %v470 = vld [vmem:[%s442 + $0xd0] sm:$0xff]
        %v471 = vld [vmem:[%s442 + $0xd8] sm:$0xf]
        %v472 = vld [vmem:[%s442 + $0xe0] sm:$0xff]
        %v473 = vld [vmem:[%s442 + $0xe8] sm:$0xff]
        %v474 = vld [vmem:[%s442 + $0xf0] sm:$0xff]
        %v475 = vld [vmem:[%s442 + $0xf8] sm:$0xf]
        %v476 = vld [vmem:[%s1] sm:$0xff]
        %v477 = vld [vmem:[%s1 + $0x8] sm:$0xff]
        %v478 = vld [vmem:[%s1 + $0x10] sm:$0xff]
        %v479 = vld [vmem:[%s1 + $0x18] sm:$0xff]
        %v480 = vld [vmem:[%s1 + $0x20] sm:$0xff]
        %v481 = vld [vmem:[%s1 + $0x28] sm:$0xff]
        %v482 = vld [vmem:[%s1 + $0x30] sm:$0xf]
        %v483 = vld [vmem:[%s1 + $0x38] sm:$0xf]
        %vm516 = vcmask 1046528
        %v517 = vrot.slane %v444, 1
        %v518 = vrot.slane %v445, 1
        %v519 = vsel %vm516, %v517, %v518
        %v520 = vrot.slane %v446, 1
        %v521 = vsel %vm516, %v518, %v520
        %v522 = vrot.slane %v447, 1
        %v523 = vsel %vm516, %v520, %v522
        %v524 = vrot.slane %v448, 1
        %v525 = vrot.slane %v449, 1
        %v526 = vsel %vm516, %v524, %v525
        %v527 = vrot.slane %v450, 1
        %v528 = vsel %vm516, %v525, %v527
        %v529 = vrot.slane %v451, 1
        %v530 = vsel %vm516, %v527, %v529
        %v531 = vrot.slane %v452, 1
        %v532 = vrot.slane %v453, 1
        %v533 = vsel %vm516, %v531, %v532
        %v534 = vrot.slane %v454, 1
        %v535 = vsel %vm516, %v532, %v534
        %v536 = vrot.slane %v455, 1
        %v537 = vsel %vm516, %v534, %v536
        %v538 = vrot.slane %v456, 1
        %v539 = vrot.slane %v457, 1
        %v540 = vsel %vm516, %v538, %v539
        %v541 = vrot.slane %v458, 1
        %v542 = vsel %vm516, %v539, %v541
        %v543 = vrot.slane %v459, 1
        %v544 = vsel %vm516, %v541, %v543
        %v545 = vrot.slane %v460, 1
        %v546 = vrot.slane %v461, 1
        %v547 = vsel %vm516, %v545, %v546
        %v548 = vrot.slane %v462, 1
        %v549 = vsel %vm516, %v546, %v548
        %v550 = vrot.slane %v463, 1
        %v551 = vsel %vm516, %v548, %v550
        %v552 = vrot.slane %v464, 1
        %v553 = vrot.slane %v465, 1
        %v554 = vsel %vm516, %v552, %v553
        %v555 = vrot.slane %v466, 1
        %v556 = vsel %vm516, %v553, %v555
        %v557 = vrot.slane %v467, 1
        %v558 = vsel %vm516, %v555, %v557
        %v559 = vrot.slane %v468, 1
        %v560 = vrot.slane %v469, 1
        %v561 = vsel %vm516, %v559, %v560
        %v562 = vrot.slane %v470, 1
        %v563 = vsel %vm516, %v560, %v562
        %v564 = vrot.slane %v471, 1
        %v565 = vsel %vm516, %v562, %v564
        %v566 = vrot.slane %v472, 1
        %v567 = vrot.slane %v473, 1
        %v568 = vsel %vm516, %v566, %v567
        %v569 = vrot.slane %v474, 1
        %v570 = vsel %vm516, %v567, %v569
        %v571 = vrot.slane %v475, 1
        %v572 = vsel %vm516, %v569, %v571
        %s573 = scalar_lea.vmem %s1, 64
        %v574 = vld [vmem:[%s573] sm:$0xff]
        %v575 = vld [vmem:[%s573 + $0x8] sm:$0xff]
        %v576 = vld [vmem:[%s573 + $0x10] sm:$0xff]
        %v577 = vld [vmem:[%s573 + $0x18] sm:$0xff]
        %v578 = vld [vmem:[%s573 + $0x20] sm:$0xff]
        %v579 = vld [vmem:[%s573 + $0x28] sm:$0xff]
        %v580 = vld [vmem:[%s573 + $0x30] sm:$0xf]
        %v581 = vld [vmem:[%s573 + $0x38] sm:$0xf]
        %vm582 = vcmask 228352
        %v583 = vsel %vm582, %v519, 0
        %v585 = vsel %vm582, %v521, 0
        %v587 = vsel %vm582, %v523, 0
        %v589 = vsel %vm582, %v526, 0
        %v591 = vsel %vm582, %v528, 0
        %v593 = vsel %vm582, %v530, 0
        %v595 = vsel %vm582, %v533, 0
        %v597 = vsel %vm582, %v535, 0
        %v599 = vsel %vm582, %v537, 0
        %v601 = vsel %vm582, %v540, 0
        %v603 = vsel %vm582, %v542, 0
        %v605 = vsel %vm582, %v544, 0
        %v607 = vsel %vm582, %v547, 0
        %v609 = vsel %vm582, %v549, 0
        %v611 = vsel %vm582, %v551, 0
        %v613 = vsel %vm582, %v554, 0
        %v615 = vsel %vm582, %v556, 0
        %v617 = vsel %vm582, %v558, 0
        %v619 = vsel %vm582, %v561, 0
        %v621 = vsel %vm582, %v563, 0
        %v623 = vsel %vm582, %v565, 0
        %v625 = vsel %vm582, %v568, 0
        %v627 = vsel %vm582, %v570, 0
        %v629 = vsel %vm582, %v572, 0
        %vm631 = vcmask 1043456
        %v633 = vsel %vm631, %v580, 0
        %v636 = vsel %vm631, %v581, 0
        %638 = vmatpush.msra.mxu0 0.0
        %639 = vmatpush.msra.mxu0 0.0
        %640 = vmatpush.msra.mxu0 0.0
        %641 = vmatpush.msra.mxu0 0.0
        %642 = vmatpush.msra.mxu0 0.0
        %643 = vmatpush.msra.mxu0 0.0
        %644 = vmatpush.msra.mxu0 0.0
        %645 = vmatpush.msra.mxu0 0.0
        %646 = vmatpush.msra.mxu0 0.0
        %647 = vmatpush.msra.mxu0 0.0
        %648 = vmatpush.msra.mxu0 0.0
        %649 = vmatpush.msra.mxu0 0.0
        %650 = vmatpush.msra.mxu0 %v633
        %651 = vmatpush.msra.mxu0 %v578
        %652 = vmatpush.msra.mxu0 %v576
        %653 = vmatpush.msra.mxu0 %v574
        %654 = vmatmul.f32.gmra.mxu0 %v583
        %v655 = vpop.f32.mrf.mxu0
        %v656 = vadd.f32 0.0, %v655
        %657 = vmatmul.f32.gmra.mxu0 %v585
        %v658 = vpop.f32.mrf.mxu0
        %v659 = vadd.f32 0.0, %v658
        %660 = vmatmul.f32.gmra.mxu0 %v587
        %v661 = vpop.f32.mrf.mxu0
        %v662 = vadd.f32 0.0, %v661
        %663 = vmatmul.f32.gmra.mxu0 %v589
        %v664 = vpop.f32.mrf.mxu0
        %v665 = vadd.f32 0.0, %v664
        %666 = vmatmul.f32.gmra.mxu0 %v591
        %v667 = vpop.f32.mrf.mxu0
        %v668 = vadd.f32 0.0, %v667
        %669 = vmatmul.f32.gmra.mxu0 %v593
        %v670 = vpop.f32.mrf.mxu0
        %v671 = vadd.f32 0.0, %v670
        %672 = vmatmul.f32.gmra.mxu0 %v595
        %v673 = vpop.f32.mrf.mxu0
        %v674 = vadd.f32 0.0, %v673
        %675 = vmatmul.f32.gmra.mxu0 %v597
        %v676 = vpop.f32.mrf.mxu0
        %v677 = vadd.f32 0.0, %v676
        %678 = vmatmul.f32.gmra.mxu0 %v599
        %v679 = vpop.f32.mrf.mxu0
        %v680 = vadd.f32 0.0, %v679
        %681 = vmatmul.f32.gmra.mxu0 %v601
        %v682 = vpop.f32.mrf.mxu0
        %v683 = vadd.f32 0.0, %v682
        %684 = vmatmul.f32.gmra.mxu0 %v603
        %v685 = vpop.f32.mrf.mxu0
        %v686 = vadd.f32 0.0, %v685
        %687 = vmatmul.f32.gmra.mxu0 %v605
        %v688 = vpop.f32.mrf.mxu0
        %v689 = vadd.f32 0.0, %v688
        %690 = vmatmul.f32.gmra.mxu0 %v607
        %v691 = vpop.f32.mrf.mxu0
        %v692 = vadd.f32 0.0, %v691
        %693 = vmatmul.f32.gmra.mxu0 %v609
        %v694 = vpop.f32.mrf.mxu0
        %v695 = vadd.f32 0.0, %v694
        %696 = vmatmul.f32.gmra.mxu0 %v611
        %v697 = vpop.f32.mrf.mxu0
        %v698 = vadd.f32 0.0, %v697
        %699 = vmatmul.f32.gmra.mxu0 %v613
        %v700 = vpop.f32.mrf.mxu0
        %v701 = vadd.f32 0.0, %v700
        %702 = vmatmul.f32.gmra.mxu0 %v615
        %v703 = vpop.f32.mrf.mxu0
        %v704 = vadd.f32 0.0, %v703
        %705 = vmatmul.f32.gmra.mxu0 %v617
        %v706 = vpop.f32.mrf.mxu0
        %v707 = vadd.f32 0.0, %v706
        %708 = vmatmul.f32.gmra.mxu0 %v619
        %v709 = vpop.f32.mrf.mxu0
        %v710 = vadd.f32 0.0, %v709
        %711 = vmatmul.f32.gmra.mxu0 %v621
        %v712 = vpop.f32.mrf.mxu0
        %v713 = vadd.f32 0.0, %v712
        %714 = vmatmul.f32.gmra.mxu0 %v623
        %v715 = vpop.f32.mrf.mxu0
        %v716 = vadd.f32 0.0, %v715
        %717 = vmatmul.f32.gmra.mxu0 %v625
        %v718 = vpop.f32.mrf.mxu0
        %v719 = vadd.f32 0.0, %v718
        %720 = vmatmul.f32.gmra.mxu0 %v627
        %v721 = vpop.f32.mrf.mxu0
        %v722 = vadd.f32 0.0, %v721
        %723 = vmatmul.f32.gmra.mxu0 %v629
        %v724 = vpop.f32.mrf.mxu0
        %v725 = vadd.f32 0.0, %v724
        %726 = vdwg.mxu0
        %727 = vmatpush.msra.mxu0 0.0
        %728 = vmatpush.msra.mxu0 0.0
        %729 = vmatpush.msra.mxu0 0.0
        %730 = vmatpush.msra.mxu0 0.0
        %731 = vmatpush.msra.mxu0 0.0
        %732 = vmatpush.msra.mxu0 0.0
        %733 = vmatpush.msra.mxu0 0.0
        %734 = vmatpush.msra.mxu0 0.0
        %735 = vmatpush.msra.mxu0 0.0
        %736 = vmatpush.msra.mxu0 0.0
        %737 = vmatpush.msra.mxu0 0.0
        %738 = vmatpush.msra.mxu0 0.0
        %739 = vmatpush.msra.mxu0 %v636
        %740 = vmatpush.msra.mxu0 %v579
        %741 = vmatpush.msra.mxu0 %v577
        %742 = vmatpush.msra.mxu0 %v575
        %743 = vmatmul.f32.gmra.mxu0 %v583
        %v744 = vpop.f32.mrf.mxu0
        %v745 = vadd.f32 0.0, %v744
        %746 = vmatmul.f32.gmra.mxu0 %v585
        %v747 = vpop.f32.mrf.mxu0
        %v748 = vadd.f32 0.0, %v747
        %749 = vmatmul.f32.gmra.mxu0 %v587
        %v750 = vpop.f32.mrf.mxu0
        %v751 = vadd.f32 0.0, %v750
        %752 = vmatmul.f32.gmra.mxu0 %v589
        %v753 = vpop.f32.mrf.mxu0
        %v754 = vadd.f32 0.0, %v753
        %755 = vmatmul.f32.gmra.mxu0 %v591
        %v756 = vpop.f32.mrf.mxu0
        %v757 = vadd.f32 0.0, %v756
        %758 = vmatmul.f32.gmra.mxu0 %v593
        %v759 = vpop.f32.mrf.mxu0
        %v760 = vadd.f32 0.0, %v759
        %761 = vmatmul.f32.gmra.mxu0 %v595
        %v762 = vpop.f32.mrf.mxu0
        %v763 = vadd.f32 0.0, %v762
        %764 = vmatmul.f32.gmra.mxu0 %v597
        %v765 = vpop.f32.mrf.mxu0
        %v766 = vadd.f32 0.0, %v765
        %767 = vmatmul.f32.gmra.mxu0 %v599
        %v768 = vpop.f32.mrf.mxu0
        %v769 = vadd.f32 0.0, %v768
        %770 = vmatmul.f32.gmra.mxu0 %v601
        %v771 = vpop.f32.mrf.mxu0
        %v772 = vadd.f32 0.0, %v771
        %773 = vmatmul.f32.gmra.mxu0 %v603
        %v774 = vpop.f32.mrf.mxu0
        %v775 = vadd.f32 0.0, %v774
        %776 = vmatmul.f32.gmra.mxu0 %v605
        %v777 = vpop.f32.mrf.mxu0
        %v778 = vadd.f32 0.0, %v777
        %779 = vmatmul.f32.gmra.mxu0 %v607
        %v780 = vpop.f32.mrf.mxu0
        %v781 = vadd.f32 0.0, %v780
        %782 = vmatmul.f32.gmra.mxu0 %v609
        %v783 = vpop.f32.mrf.mxu0
        %v784 = vadd.f32 0.0, %v783
        %785 = vmatmul.f32.gmra.mxu0 %v611
        %v786 = vpop.f32.mrf.mxu0
        %v787 = vadd.f32 0.0, %v786
        %788 = vmatmul.f32.gmra.mxu0 %v613
        %v789 = vpop.f32.mrf.mxu0
        %v790 = vadd.f32 0.0, %v789
        %791 = vmatmul.f32.gmra.mxu0 %v615
        %v792 = vpop.f32.mrf.mxu0
        %v793 = vadd.f32 0.0, %v792
        %794 = vmatmul.f32.gmra.mxu0 %v617
        %v795 = vpop.f32.mrf.mxu0
        %v796 = vadd.f32 0.0, %v795
        %797 = vmatmul.f32.gmra.mxu0 %v619
        %v798 = vpop.f32.mrf.mxu0
        %v799 = vadd.f32 0.0, %v798
        %800 = vmatmul.f32.gmra.mxu0 %v621
        %v801 = vpop.f32.mrf.mxu0
        %v802 = vadd.f32 0.0, %v801
        %803 = vmatmul.f32.gmra.mxu0 %v623
        %v804 = vpop.f32.mrf.mxu0
        %v805 = vadd.f32 0.0, %v804
        %806 = vmatmul.f32.gmra.mxu0 %v625
        %v807 = vpop.f32.mrf.mxu0
        %v808 = vadd.f32 0.0, %v807
        %809 = vmatmul.f32.gmra.mxu0 %v627
        %v810 = vpop.f32.mrf.mxu0
        %v811 = vadd.f32 0.0, %v810
        %812 = vmatmul.f32.gmra.mxu0 %v629
        %v813 = vpop.f32.mrf.mxu0
        %v814 = vadd.f32 0.0, %v813
        %815 = vdwg.mxu0
        %v816 = vsel %vm582, %v444, 0
        %v818 = vsel %vm582, %v445, 0
        %v820 = vsel %vm582, %v446, 0
        %v822 = vsel %vm582, %v448, 0
        %v824 = vsel %vm582, %v449, 0
        %v826 = vsel %vm582, %v450, 0
        %v828 = vsel %vm582, %v452, 0
        %v830 = vsel %vm582, %v453, 0
        %v832 = vsel %vm582, %v454, 0
        %v834 = vsel %vm582, %v456, 0
        %v836 = vsel %vm582, %v457, 0
        %v838 = vsel %vm582, %v458, 0
        %v840 = vsel %vm582, %v460, 0
        %v842 = vsel %vm582, %v461, 0
        %v844 = vsel %vm582, %v462, 0
        %v846 = vsel %vm582, %v464, 0
        %v848 = vsel %vm582, %v465, 0
        %v850 = vsel %vm582, %v466, 0
        %v852 = vsel %vm582, %v468, 0
        %v854 = vsel %vm582, %v469, 0
        %v856 = vsel %vm582, %v470, 0
        %v858 = vsel %vm582, %v472, 0
        %v860 = vsel %vm582, %v473, 0
        %v862 = vsel %vm582, %v474, 0
        %v865 = vsel %vm631, %v482, 0
        %v868 = vsel %vm631, %v483, 0
        %870 = vmatpush.msra.mxu0 0.0
        %871 = vmatpush.msra.mxu0 0.0
        %872 = vmatpush.msra.mxu0 0.0
        %873 = vmatpush.msra.mxu0 0.0
        %874 = vmatpush.msra.mxu0 0.0
        %875 = vmatpush.msra.mxu0 0.0
        %876 = vmatpush.msra.mxu0 0.0
        %877 = vmatpush.msra.mxu0 0.0
        %878 = vmatpush.msra.mxu0 0.0
        %879 = vmatpush.msra.mxu0 0.0
        %880 = vmatpush.msra.mxu0 0.0
        %881 = vmatpush.msra.mxu0 0.0
        %882 = vmatpush.msra.mxu0 %v865
        %883 = vmatpush.msra.mxu0 %v480
        %884 = vmatpush.msra.mxu0 %v478
        %885 = vmatpush.msra.mxu0 %v476
        %886 = vmatmul.f32.gmra.mxu0 %v816
        %v887 = vpop.f32.mrf.mxu0
        %v888 = vadd.f32 %v656, %v887
        %889 = vmatmul.f32.gmra.mxu0 %v818
        %v890 = vpop.f32.mrf.mxu0
        %v891 = vadd.f32 %v659, %v890
        %892 = vmatmul.f32.gmra.mxu0 %v820
        %v893 = vpop.f32.mrf.mxu0
        %v894 = vadd.f32 %v662, %v893
        %895 = vmatmul.f32.gmra.mxu0 %v822
        %v896 = vpop.f32.mrf.mxu0
        %v897 = vadd.f32 %v665, %v896
        %898 = vmatmul.f32.gmra.mxu0 %v824
        %v899 = vpop.f32.mrf.mxu0
        %v900 = vadd.f32 %v668, %v899
        %901 = vmatmul.f32.gmra.mxu0 %v826
        %v902 = vpop.f32.mrf.mxu0
        %v903 = vadd.f32 %v671, %v902
        %904 = vmatmul.f32.gmra.mxu0 %v828
        %v905 = vpop.f32.mrf.mxu0
        %v906 = vadd.f32 %v674, %v905
        %907 = vmatmul.f32.gmra.mxu0 %v830
        %v908 = vpop.f32.mrf.mxu0
        %v909 = vadd.f32 %v677, %v908
        %910 = vmatmul.f32.gmra.mxu0 %v832
        %v911 = vpop.f32.mrf.mxu0
        %v912 = vadd.f32 %v680, %v911
        %913 = vmatmul.f32.gmra.mxu0 %v834
        %v914 = vpop.f32.mrf.mxu0
        %v915 = vadd.f32 %v683, %v914
        %916 = vmatmul.f32.gmra.mxu0 %v836
        %v917 = vpop.f32.mrf.mxu0
        %v918 = vadd.f32 %v686, %v917
        %919 = vmatmul.f32.gmra.mxu0 %v838
        %v920 = vpop.f32.mrf.mxu0
        %v921 = vadd.f32 %v689, %v920
        %922 = vmatmul.f32.gmra.mxu0 %v840
        %v923 = vpop.f32.mrf.mxu0
        %v924 = vadd.f32 %v692, %v923
        %925 = vmatmul.f32.gmra.mxu0 %v842
        %v926 = vpop.f32.mrf.mxu0
        %v927 = vadd.f32 %v695, %v926
        %928 = vmatmul.f32.gmra.mxu0 %v844
        %v929 = vpop.f32.mrf.mxu0
        %v930 = vadd.f32 %v698, %v929
        %931 = vmatmul.f32.gmra.mxu0 %v846
        %v932 = vpop.f32.mrf.mxu0
        %v933 = vadd.f32 %v701, %v932
        %934 = vmatmul.f32.gmra.mxu0 %v848
        %v935 = vpop.f32.mrf.mxu0
        %v936 = vadd.f32 %v704, %v935
        %937 = vmatmul.f32.gmra.mxu0 %v850
        %v938 = vpop.f32.mrf.mxu0
        %v939 = vadd.f32 %v707, %v938
        %940 = vmatmul.f32.gmra.mxu0 %v852
        %v941 = vpop.f32.mrf.mxu0
        %v942 = vadd.f32 %v710, %v941
        %943 = vmatmul.f32.gmra.mxu0 %v854
        %v944 = vpop.f32.mrf.mxu0
        %v945 = vadd.f32 %v713, %v944
        %946 = vmatmul.f32.gmra.mxu0 %v856
        %v947 = vpop.f32.mrf.mxu0
        %v948 = vadd.f32 %v716, %v947
        %949 = vmatmul.f32.gmra.mxu0 %v858
        %v950 = vpop.f32.mrf.mxu0
        %v951 = vadd.f32 %v719, %v950
        %952 = vmatmul.f32.gmra.mxu0 %v860
        %v953 = vpop.f32.mrf.mxu0
        %v954 = vadd.f32 %v722, %v953
        %955 = vmatmul.f32.gmra.mxu0 %v862
        %v956 = vpop.f32.mrf.mxu0
        %v957 = vadd.f32 %v725, %v956
        %958 = vdwg.mxu0
        %959 = vmatpush.msra.mxu0 0.0
        %960 = vmatpush.msra.mxu0 0.0
        %961 = vmatpush.msra.mxu0 0.0
        %962 = vmatpush.msra.mxu0 0.0
        %963 = vmatpush.msra.mxu0 0.0
        %964 = vmatpush.msra.mxu0 0.0
        %965 = vmatpush.msra.mxu0 0.0
        %966 = vmatpush.msra.mxu0 0.0
        %967 = vmatpush.msra.mxu0 0.0
        %968 = vmatpush.msra.mxu0 0.0
        %969 = vmatpush.msra.mxu0 0.0
        %970 = vmatpush.msra.mxu0 0.0
        %971 = vmatpush.msra.mxu0 %v868
        %972 = vmatpush.msra.mxu0 %v481
        %973 = vmatpush.msra.mxu0 %v479
        %974 = vmatpush.msra.mxu0 %v477
        %975 = vmatmul.f32.gmra.mxu0 %v816
        %v976 = vpop.f32.mrf.mxu0
        %v977 = vadd.f32 %v745, %v976
        %978 = vmatmul.f32.gmra.mxu0 %v818
        %v979 = vpop.f32.mrf.mxu0
        %v980 = vadd.f32 %v748, %v979
        %981 = vmatmul.f32.gmra.mxu0 %v820
        %v982 = vpop.f32.mrf.mxu0
        %v983 = vadd.f32 %v751, %v982
        %984 = vmatmul.f32.gmra.mxu0 %v822
        %v985 = vpop.f32.mrf.mxu0
        %v986 = vadd.f32 %v754, %v985
        %987 = vmatmul.f32.gmra.mxu0 %v824
        %v988 = vpop.f32.mrf.mxu0
        %v989 = vadd.f32 %v757, %v988
        %990 = vmatmul.f32.gmra.mxu0 %v826
        %v991 = vpop.f32.mrf.mxu0
        %v992 = vadd.f32 %v760, %v991
        %993 = vmatmul.f32.gmra.mxu0 %v828
        %v994 = vpop.f32.mrf.mxu0
        %v995 = vadd.f32 %v763, %v994
        %996 = vmatmul.f32.gmra.mxu0 %v830
        %v997 = vpop.f32.mrf.mxu0
        %v998 = vadd.f32 %v766, %v997
        %999 = vmatmul.f32.gmra.mxu0 %v832
        %v1000 = vpop.f32.mrf.mxu0
        %v1001 = vadd.f32 %v769, %v1000
        %1002 = vmatmul.f32.gmra.mxu0 %v834
        %v1003 = vpop.f32.mrf.mxu0
        %v1004 = vadd.f32 %v772, %v1003
        %1005 = vmatmul.f32.gmra.mxu0 %v836
        %v1006 = vpop.f32.mrf.mxu0
        %v1007 = vadd.f32 %v775, %v1006
        %1008 = vmatmul.f32.gmra.mxu0 %v838
        %v1009 = vpop.f32.mrf.mxu0
        %v1010 = vadd.f32 %v778, %v1009
        %1011 = vmatmul.f32.gmra.mxu0 %v840
        %v1012 = vpop.f32.mrf.mxu0
        %v1013 = vadd.f32 %v781, %v1012
        %1014 = vmatmul.f32.gmra.mxu0 %v842
        %v1015 = vpop.f32.mrf.mxu0
        %v1016 = vadd.f32 %v784, %v1015
        %1017 = vmatmul.f32.gmra.mxu0 %v844
        %v1018 = vpop.f32.mrf.mxu0
        %v1019 = vadd.f32 %v787, %v1018
        %1020 = vmatmul.f32.gmra.mxu0 %v846
        %v1021 = vpop.f32.mrf.mxu0
        %v1022 = vadd.f32 %v790, %v1021
        %1023 = vmatmul.f32.gmra.mxu0 %v848
        %v1024 = vpop.f32.mrf.mxu0
        %v1025 = vadd.f32 %v793, %v1024
        %1026 = vmatmul.f32.gmra.mxu0 %v850
        %v1027 = vpop.f32.mrf.mxu0
        %v1028 = vadd.f32 %v796, %v1027
        %1029 = vmatmul.f32.gmra.mxu0 %v852
        %v1030 = vpop.f32.mrf.mxu0
        %v1031 = vadd.f32 %v799, %v1030
        %1032 = vmatmul.f32.gmra.mxu0 %v854
        %v1033 = vpop.f32.mrf.mxu0
        %v1034 = vadd.f32 %v802, %v1033
        %1035 = vmatmul.f32.gmra.mxu0 %v856
        %v1036 = vpop.f32.mrf.mxu0
        %v1037 = vadd.f32 %v805, %v1036
        %1038 = vmatmul.f32.gmra.mxu0 %v858
        %v1039 = vpop.f32.mrf.mxu0
        %v1040 = vadd.f32 %v808, %v1039
        %1041 = vmatmul.f32.gmra.mxu0 %v860
        %v1042 = vpop.f32.mrf.mxu0
        %v1043 = vadd.f32 %v811, %v1042
        %1044 = vmatmul.f32.gmra.mxu0 %v862
        %v1045 = vpop.f32.mrf.mxu0
        %v1046 = vadd.f32 %v814, %v1045
        %1047 = vdwg.mxu0
        %vm1048 = vcmask 1045504
        %v1049 = vrot.slane %v444, 2
        %v1050 = vrot.slane %v445, 2
        %v1051 = vsel %vm1048, %v1049, %v1050
        %v1052 = vrot.slane %v446, 2
        %v1053 = vsel %vm1048, %v1050, %v1052
        %v1054 = vrot.slane %v447, 2
        %v1055 = vsel %vm1048, %v1052, %v1054
        %v1056 = vrot.slane %v448, 2
        %v1057 = vrot.slane %v449, 2
        %v1058 = vsel %vm1048, %v1056, %v1057
        %v1059 = vrot.slane %v450, 2
        %v1060 = vsel %vm1048, %v1057, %v1059
        %v1061 = vrot.slane %v451, 2
        %v1062 = vsel %vm1048, %v1059, %v1061
        %v1063 = vrot.slane %v452, 2
        %v1064 = vrot.slane %v453, 2
        %v1065 = vsel %vm1048, %v1063, %v1064
        %v1066 = vrot.slane %v454, 2
        %v1067 = vsel %vm1048, %v1064, %v1066
        %v1068 = vrot.slane %v455, 2
        %v1069 = vsel %vm1048, %v1066, %v1068
        %v1070 = vrot.slane %v456, 2
        %v1071 = vrot.slane %v457, 2
        %v1072 = vsel %vm1048, %v1070, %v1071
        %v1073 = vrot.slane %v458, 2
        %v1074 = vsel %vm1048, %v1071, %v1073
        %v1075 = vrot.slane %v459, 2
        %v1076 = vsel %vm1048, %v1073, %v1075
        %v1077 = vrot.slane %v460, 2
        %v1078 = vrot.slane %v461, 2
        %v1079 = vsel %vm1048, %v1077, %v1078
        %v1080 = vrot.slane %v462, 2
        %v1081 = vsel %vm1048, %v1078, %v1080
        %v1082 = vrot.slane %v463, 2
        %v1083 = vsel %vm1048, %v1080, %v1082
        %v1084 = vrot.slane %v464, 2
        %v1085 = vrot.slane %v465, 2
        %v1086 = vsel %vm1048, %v1084, %v1085
        %v1087 = vrot.slane %v466, 2
        %v1088 = vsel %vm1048, %v1085, %v1087
        %v1089 = vrot.slane %v467, 2
        %v1090 = vsel %vm1048, %v1087, %v1089
        %v1091 = vrot.slane %v468, 2
        %v1092 = vrot.slane %v469, 2
        %v1093 = vsel %vm1048, %v1091, %v1092
        %v1094 = vrot.slane %v470, 2
        %v1095 = vsel %vm1048, %v1092, %v1094
        %v1096 = vrot.slane %v471, 2
        %v1097 = vsel %vm1048, %v1094, %v1096
        %v1098 = vrot.slane %v472, 2
        %v1099 = vrot.slane %v473, 2
        %v1100 = vsel %vm1048, %v1098, %v1099
        %v1101 = vrot.slane %v474, 2
        %v1102 = vsel %vm1048, %v1099, %v1101
        %v1103 = vrot.slane %v475, 2
        %v1104 = vsel %vm1048, %v1101, %v1103
        %s1105 = scalar_lea.vmem %s1, 128
        %v1106 = vld [vmem:[%s1105] sm:$0xff]
        %v1107 = vld [vmem:[%s1105 + $0x8] sm:$0xff]
        %v1108 = vld [vmem:[%s1105 + $0x10] sm:$0xff]
        %v1109 = vld [vmem:[%s1105 + $0x18] sm:$0xff]
        %v1110 = vld [vmem:[%s1105 + $0x20] sm:$0xff]
        %v1111 = vld [vmem:[%s1105 + $0x28] sm:$0xff]
        %v1112 = vld [vmem:[%s1105 + $0x30] sm:$0xf]
        %v1113 = vld [vmem:[%s1105 + $0x38] sm:$0xf]
        %v1114 = vsel %vm582, %v1051, 0
        %v1116 = vsel %vm582, %v1053, 0
        %v1118 = vsel %vm582, %v1055, 0
        %v1120 = vsel %vm582, %v1058, 0
        %v1122 = vsel %vm582, %v1060, 0
        %v1124 = vsel %vm582, %v1062, 0
        %v1126 = vsel %vm582, %v1065, 0
        %v1128 = vsel %vm582, %v1067, 0
        %v1130 = vsel %vm582, %v1069, 0
        %v1132 = vsel %vm582, %v1072, 0
        %v1134 = vsel %vm582, %v1074, 0
        %v1136 = vsel %vm582, %v1076, 0
        %v1138 = vsel %vm582, %v1079, 0
        %v1140 = vsel %vm582, %v1081, 0
        %v1142 = vsel %vm582, %v1083, 0
        %v1144 = vsel %vm582, %v1086, 0
        %v1146 = vsel %vm582, %v1088, 0
        %v1148 = vsel %vm582, %v1090, 0
        %v1150 = vsel %vm582, %v1093, 0
        %v1152 = vsel %vm582, %v1095, 0
        %v1154 = vsel %vm582, %v1097, 0
        %v1156 = vsel %vm582, %v1100, 0
        %v1158 = vsel %vm582, %v1102, 0
        %v1160 = vsel %vm582, %v1104, 0
        %v1163 = vsel %vm631, %v1112, 0
        %v1166 = vsel %vm631, %v1113, 0
        %1168 = vmatpush.msra.mxu0 0.0
        %1169 = vmatpush.msra.mxu0 0.0
        %1170 = vmatpush.msra.mxu0 0.0
        %1171 = vmatpush.msra.mxu0 0.0
        %1172 = vmatpush.msra.mxu0 0.0
        %1173 = vmatpush.msra.mxu0 0.0
        %1174 = vmatpush.msra.mxu0 0.0
        %1175 = vmatpush.msra.mxu0 0.0
        %1176 = vmatpush.msra.mxu0 0.0
        %1177 = vmatpush.msra.mxu0 0.0
        %1178 = vmatpush.msra.mxu0 0.0
        %1179 = vmatpush.msra.mxu0 0.0
        %1180 = vmatpush.msra.mxu0 %v1163
        %1181 = vmatpush.msra.mxu0 %v1110
        %1182 = vmatpush.msra.mxu0 %v1108
        %1183 = vmatpush.msra.mxu0 %v1106
        %1184 = vmatmul.f32.gmra.mxu0 %v1114
        %v1185 = vpop.f32.mrf.mxu0
        %v1186 = vadd.f32 0.0, %v1185
        %1187 = vmatmul.f32.gmra.mxu0 %v1116
        %v1188 = vpop.f32.mrf.mxu0
        %v1189 = vadd.f32 0.0, %v1188
        %1190 = vmatmul.f32.gmra.mxu0 %v1118
        %v1191 = vpop.f32.mrf.mxu0
        %v1192 = vadd.f32 0.0, %v1191
        %1193 = vmatmul.f32.gmra.mxu0 %v1120
        %v1194 = vpop.f32.mrf.mxu0
        %v1195 = vadd.f32 0.0, %v1194
        %1196 = vmatmul.f32.gmra.mxu0 %v1122
        %v1197 = vpop.f32.mrf.mxu0
        %v1198 = vadd.f32 0.0, %v1197
        %1199 = vmatmul.f32.gmra.mxu0 %v1124
        %v1200 = vpop.f32.mrf.mxu0
        %v1201 = vadd.f32 0.0, %v1200
        %1202 = vmatmul.f32.gmra.mxu0 %v1126
        %v1203 = vpop.f32.mrf.mxu0
        %v1204 = vadd.f32 0.0, %v1203
        %1205 = vmatmul.f32.gmra.mxu0 %v1128
        %v1206 = vpop.f32.mrf.mxu0
        %v1207 = vadd.f32 0.0, %v1206
        %1208 = vmatmul.f32.gmra.mxu0 %v1130
        %v1209 = vpop.f32.mrf.mxu0
        %v1210 = vadd.f32 0.0, %v1209
        %1211 = vmatmul.f32.gmra.mxu0 %v1132
        %v1212 = vpop.f32.mrf.mxu0
        %v1213 = vadd.f32 0.0, %v1212
        %1214 = vmatmul.f32.gmra.mxu0 %v1134
        %v1215 = vpop.f32.mrf.mxu0
        %v1216 = vadd.f32 0.0, %v1215
        %1217 = vmatmul.f32.gmra.mxu0 %v1136
        %v1218 = vpop.f32.mrf.mxu0
        %v1219 = vadd.f32 0.0, %v1218
        %1220 = vmatmul.f32.gmra.mxu0 %v1138
        %v1221 = vpop.f32.mrf.mxu0
        %v1222 = vadd.f32 0.0, %v1221
        %1223 = vmatmul.f32.gmra.mxu0 %v1140
        %v1224 = vpop.f32.mrf.mxu0
        %v1225 = vadd.f32 0.0, %v1224
        %1226 = vmatmul.f32.gmra.mxu0 %v1142
        %v1227 = vpop.f32.mrf.mxu0
        %v1228 = vadd.f32 0.0, %v1227
        %1229 = vmatmul.f32.gmra.mxu0 %v1144
        %v1230 = vpop.f32.mrf.mxu0
        %v1231 = vadd.f32 0.0, %v1230
        %1232 = vmatmul.f32.gmra.mxu0 %v1146
        %v1233 = vpop.f32.mrf.mxu0
        %v1234 = vadd.f32 0.0, %v1233
        %1235 = vmatmul.f32.gmra.mxu0 %v1148
        %v1236 = vpop.f32.mrf.mxu0
        %v1237 = vadd.f32 0.0, %v1236
        %1238 = vmatmul.f32.gmra.mxu0 %v1150
        %v1239 = vpop.f32.mrf.mxu0
        %v1240 = vadd.f32 0.0, %v1239
        %1241 = vmatmul.f32.gmra.mxu0 %v1152
        %v1242 = vpop.f32.mrf.mxu0
        %v1243 = vadd.f32 0.0, %v1242
        %1244 = vmatmul.f32.gmra.mxu0 %v1154
        %v1245 = vpop.f32.mrf.mxu0
        %v1246 = vadd.f32 0.0, %v1245
        %1247 = vmatmul.f32.gmra.mxu0 %v1156
        %v1248 = vpop.f32.mrf.mxu0
        %v1249 = vadd.f32 0.0, %v1248
        %1250 = vmatmul.f32.gmra.mxu0 %v1158
        %v1251 = vpop.f32.mrf.mxu0
        %v1252 = vadd.f32 0.0, %v1251
        %1253 = vmatmul.f32.gmra.mxu0 %v1160
        %v1254 = vpop.f32.mrf.mxu0
        %v1255 = vadd.f32 0.0, %v1254
        %1256 = vdwg.mxu0
        %1257 = vmatpush.msra.mxu0 0.0
        %1258 = vmatpush.msra.mxu0 0.0
        %1259 = vmatpush.msra.mxu0 0.0
        %1260 = vmatpush.msra.mxu0 0.0
        %1261 = vmatpush.msra.mxu0 0.0
        %1262 = vmatpush.msra.mxu0 0.0
        %1263 = vmatpush.msra.mxu0 0.0
        %1264 = vmatpush.msra.mxu0 0.0
        %1265 = vmatpush.msra.mxu0 0.0
        %1266 = vmatpush.msra.mxu0 0.0
        %1267 = vmatpush.msra.mxu0 0.0
        %1268 = vmatpush.msra.mxu0 0.0
        %1269 = vmatpush.msra.mxu0 %v1166
        %1270 = vmatpush.msra.mxu0 %v1111
        %1271 = vmatpush.msra.mxu0 %v1109
        %1272 = vmatpush.msra.mxu0 %v1107
        %1273 = vmatmul.f32.gmra.mxu0 %v1114
        %v1274 = vpop.f32.mrf.mxu0
        %v1275 = vadd.f32 0.0, %v1274
        %1276 = vmatmul.f32.gmra.mxu0 %v1116
        %v1277 = vpop.f32.mrf.mxu0
        %v1278 = vadd.f32 0.0, %v1277
        %1279 = vmatmul.f32.gmra.mxu0 %v1118
        %v1280 = vpop.f32.mrf.mxu0
        %v1281 = vadd.f32 0.0, %v1280
        %1282 = vmatmul.f32.gmra.mxu0 %v1120
        %v1283 = vpop.f32.mrf.mxu0
        %v1284 = vadd.f32 0.0, %v1283
        %1285 = vmatmul.f32.gmra.mxu0 %v1122
        %v1286 = vpop.f32.mrf.mxu0
        %v1287 = vadd.f32 0.0, %v1286
        %1288 = vmatmul.f32.gmra.mxu0 %v1124
        %v1289 = vpop.f32.mrf.mxu0
        %v1290 = vadd.f32 0.0, %v1289
        %1291 = vmatmul.f32.gmra.mxu0 %v1126
        %v1292 = vpop.f32.mrf.mxu0
        %v1293 = vadd.f32 0.0, %v1292
        %1294 = vmatmul.f32.gmra.mxu0 %v1128
        %v1295 = vpop.f32.mrf.mxu0
        %v1296 = vadd.f32 0.0, %v1295
        %1297 = vmatmul.f32.gmra.mxu0 %v1130
        %v1298 = vpop.f32.mrf.mxu0
        %v1299 = vadd.f32 0.0, %v1298
        %1300 = vmatmul.f32.gmra.mxu0 %v1132
        %v1301 = vpop.f32.mrf.mxu0
        %v1302 = vadd.f32 0.0, %v1301
        %1303 = vmatmul.f32.gmra.mxu0 %v1134
        %v1304 = vpop.f32.mrf.mxu0
        %v1305 = vadd.f32 0.0, %v1304
        %1306 = vmatmul.f32.gmra.mxu0 %v1136
        %v1307 = vpop.f32.mrf.mxu0
        %v1308 = vadd.f32 0.0, %v1307
        %1309 = vmatmul.f32.gmra.mxu0 %v1138
        %v1310 = vpop.f32.mrf.mxu0
        %v1311 = vadd.f32 0.0, %v1310
        %1312 = vmatmul.f32.gmra.mxu0 %v1140
        %v1313 = vpop.f32.mrf.mxu0
        %v1314 = vadd.f32 0.0, %v1313
        %1315 = vmatmul.f32.gmra.mxu0 %v1142
        %v1316 = vpop.f32.mrf.mxu0
        %v1317 = vadd.f32 0.0, %v1316
        %1318 = vmatmul.f32.gmra.mxu0 %v1144
        %v1319 = vpop.f32.mrf.mxu0
        %v1320 = vadd.f32 0.0, %v1319
        %1321 = vmatmul.f32.gmra.mxu0 %v1146
        %v1322 = vpop.f32.mrf.mxu0
        %v1323 = vadd.f32 0.0, %v1322
        %1324 = vmatmul.f32.gmra.mxu0 %v1148
        %v1325 = vpop.f32.mrf.mxu0
        %v1326 = vadd.f32 0.0, %v1325
        %1327 = vmatmul.f32.gmra.mxu0 %v1150
        %v1328 = vpop.f32.mrf.mxu0
        %v1329 = vadd.f32 0.0, %v1328
        %1330 = vmatmul.f32.gmra.mxu0 %v1152
        %v1331 = vpop.f32.mrf.mxu0
        %v1332 = vadd.f32 0.0, %v1331
        %1333 = vmatmul.f32.gmra.mxu0 %v1154
        %v1334 = vpop.f32.mrf.mxu0
        %v1335 = vadd.f32 0.0, %v1334
        %1336 = vmatmul.f32.gmra.mxu0 %v1156
        %v1337 = vpop.f32.mrf.mxu0
        %v1338 = vadd.f32 0.0, %v1337
        %1339 = vmatmul.f32.gmra.mxu0 %v1158
        %v1340 = vpop.f32.mrf.mxu0
        %v1341 = vadd.f32 0.0, %v1340
        %1342 = vmatmul.f32.gmra.mxu0 %v1160
        %v1343 = vpop.f32.mrf.mxu0
        %v1344 = vadd.f32 0.0, %v1343
        %1345 = vdwg.mxu0
        %v1346 = vadd.f32 %v888, %v1186
        %v1347 = vadd.f32 %v977, %v1275
        %v1348 = vadd.f32 %v891, %v1189
        %v1349 = vadd.f32 %v980, %v1278
        %v1350 = vadd.f32 %v894, %v1192
        %v1351 = vadd.f32 %v983, %v1281
        %v1352 = vadd.f32 %v897, %v1195
        %v1353 = vadd.f32 %v986, %v1284
        %v1354 = vadd.f32 %v900, %v1198
        %v1355 = vadd.f32 %v989, %v1287
        %v1356 = vadd.f32 %v903, %v1201
        %v1357 = vadd.f32 %v992, %v1290
        %v1358 = vadd.f32 %v906, %v1204
        %v1359 = vadd.f32 %v995, %v1293
        %v1360 = vadd.f32 %v909, %v1207
        %v1361 = vadd.f32 %v998, %v1296
        %v1362 = vadd.f32 %v912, %v1210
        %v1363 = vadd.f32 %v1001, %v1299
        %v1364 = vadd.f32 %v915, %v1213
        %v1365 = vadd.f32 %v1004, %v1302
        %v1366 = vadd.f32 %v918, %v1216
        %v1367 = vadd.f32 %v1007, %v1305
        %v1368 = vadd.f32 %v921, %v1219
        %v1369 = vadd.f32 %v1010, %v1308
        %v1370 = vadd.f32 %v924, %v1222
        %v1371 = vadd.f32 %v1013, %v1311
        %v1372 = vadd.f32 %v927, %v1225
        %v1373 = vadd.f32 %v1016, %v1314
        %v1374 = vadd.f32 %v930, %v1228
        %v1375 = vadd.f32 %v1019, %v1317
        %v1376 = vadd.f32 %v933, %v1231
        %v1377 = vadd.f32 %v1022, %v1320
        %v1378 = vadd.f32 %v936, %v1234
        %v1379 = vadd.f32 %v1025, %v1323
        %v1380 = vadd.f32 %v939, %v1237
        %v1381 = vadd.f32 %v1028, %v1326
        %v1382 = vadd.f32 %v942, %v1240
        %v1383 = vadd.f32 %v1031, %v1329
        %v1384 = vadd.f32 %v945, %v1243
        %v1385 = vadd.f32 %v1034, %v1332
        %v1386 = vadd.f32 %v948, %v1246
        %v1387 = vadd.f32 %v1037, %v1335
        %v1388 = vadd.f32 %v951, %v1249
        %v1389 = vadd.f32 %v1040, %v1338
        %v1390 = vadd.f32 %v954, %v1252
        %v1391 = vadd.f32 %v1043, %v1341
        %v1392 = vadd.f32 %v957, %v1255
        %v1393 = vadd.f32 %v1046, %v1344
        %vm1394 = vcmask 1044480
        %v1395 = vrot.slane %v444, 3
        %v1396 = vrot.slane %v445, 3
        %v1397 = vsel %vm1394, %v1395, %v1396
        %v1398 = vrot.slane %v446, 3
        %v1399 = vsel %vm1394, %v1396, %v1398
        %v1400 = vrot.slane %v447, 3
        %v1401 = vsel %vm1394, %v1398, %v1400
        %v1402 = vrot.slane %v448, 3
        %v1403 = vrot.slane %v449, 3
        %v1404 = vsel %vm1394, %v1402, %v1403
        %v1405 = vrot.slane %v450, 3
        %v1406 = vsel %vm1394, %v1403, %v1405
        %v1407 = vrot.slane %v451, 3
        %v1408 = vsel %vm1394, %v1405, %v1407
        %v1409 = vrot.slane %v452, 3
        %v1410 = vrot.slane %v453, 3
        %v1411 = vsel %vm1394, %v1409, %v1410
        %v1412 = vrot.slane %v454, 3
        %v1413 = vsel %vm1394, %v1410, %v1412
        %v1414 = vrot.slane %v455, 3
        %v1415 = vsel %vm1394, %v1412, %v1414
        %v1416 = vrot.slane %v456, 3
        %v1417 = vrot.slane %v457, 3
        %v1418 = vsel %vm1394, %v1416, %v1417
        %v1419 = vrot.slane %v458, 3
        %v1420 = vsel %vm1394, %v1417, %v1419
        %v1421 = vrot.slane %v459, 3
        %v1422 = vsel %vm1394, %v1419, %v1421
        %v1423 = vrot.slane %v460, 3
        %v1424 = vrot.slane %v461, 3
        %v1425 = vsel %vm1394, %v1423, %v1424
        %v1426 = vrot.slane %v462, 3
        %v1427 = vsel %vm1394, %v1424, %v1426
        %v1428 = vrot.slane %v463, 3
        %v1429 = vsel %vm1394, %v1426, %v1428
        %v1430 = vrot.slane %v464, 3
        %v1431 = vrot.slane %v465, 3
        %v1432 = vsel %vm1394, %v1430, %v1431
        %v1433 = vrot.slane %v466, 3
        %v1434 = vsel %vm1394, %v1431, %v1433
        %v1435 = vrot.slane %v467, 3
        %v1436 = vsel %vm1394, %v1433, %v1435
        %v1437 = vrot.slane %v468, 3
        %v1438 = vrot.slane %v469, 3
        %v1439 = vsel %vm1394, %v1437, %v1438
        %v1440 = vrot.slane %v470, 3
        %v1441 = vsel %vm1394, %v1438, %v1440
        %v1442 = vrot.slane %v471, 3
        %v1443 = vsel %vm1394, %v1440, %v1442
        %v1444 = vrot.slane %v472, 3
        %v1445 = vrot.slane %v473, 3
        %v1446 = vsel %vm1394, %v1444, %v1445
        %v1447 = vrot.slane %v474, 3
        %v1448 = vsel %vm1394, %v1445, %v1447
        %v1449 = vrot.slane %v475, 3
        %v1450 = vsel %vm1394, %v1447, %v1449
        %s1451 = scalar_lea.vmem %s1, 192
        %v1452 = vld [vmem:[%s1451] sm:$0xff]
        %v1453 = vld [vmem:[%s1451 + $0x8] sm:$0xff]
        %v1454 = vld [vmem:[%s1451 + $0x10] sm:$0xff]
        %v1455 = vld [vmem:[%s1451 + $0x18] sm:$0xff]
        %v1456 = vld [vmem:[%s1451 + $0x20] sm:$0xff]
        %v1457 = vld [vmem:[%s1451 + $0x28] sm:$0xff]
        %v1458 = vld [vmem:[%s1451 + $0x30] sm:$0xf]
        %v1459 = vld [vmem:[%s1451 + $0x38] sm:$0xf]
        %v1460 = vsel %vm582, %v1397, 0
        %v1462 = vsel %vm582, %v1399, 0
        %v1464 = vsel %vm582, %v1401, 0
        %v1466 = vsel %vm582, %v1404, 0
        %v1468 = vsel %vm582, %v1406, 0
        %v1470 = vsel %vm582, %v1408, 0
        %v1472 = vsel %vm582, %v1411, 0
        %v1474 = vsel %vm582, %v1413, 0
        %v1476 = vsel %vm582, %v1415, 0
        %v1478 = vsel %vm582, %v1418, 0
        %v1480 = vsel %vm582, %v1420, 0
        %v1482 = vsel %vm582, %v1422, 0
        %v1484 = vsel %vm582, %v1425, 0
        %v1486 = vsel %vm582, %v1427, 0
        %v1488 = vsel %vm582, %v1429, 0
        %v1490 = vsel %vm582, %v1432, 0
        %v1492 = vsel %vm582, %v1434, 0
        %v1494 = vsel %vm582, %v1436, 0
        %v1496 = vsel %vm582, %v1439, 0
        %v1498 = vsel %vm582, %v1441, 0
        %v1500 = vsel %vm582, %v1443, 0
        %v1502 = vsel %vm582, %v1446, 0
        %v1504 = vsel %vm582, %v1448, 0
        %v1506 = vsel %vm582, %v1450, 0
        %v1509 = vsel %vm631, %v1458, 0
        %v1512 = vsel %vm631, %v1459, 0
        %1514 = vmatpush.msra.mxu0 0.0
        %1515 = vmatpush.msra.mxu0 0.0
        %1516 = vmatpush.msra.mxu0 0.0
        %1517 = vmatpush.msra.mxu0 0.0
        %1518 = vmatpush.msra.mxu0 0.0
        %1519 = vmatpush.msra.mxu0 0.0
        %1520 = vmatpush.msra.mxu0 0.0
        %1521 = vmatpush.msra.mxu0 0.0
        %1522 = vmatpush.msra.mxu0 0.0
        %1523 = vmatpush.msra.mxu0 0.0
        %1524 = vmatpush.msra.mxu0 0.0
        %1525 = vmatpush.msra.mxu0 0.0
        %1526 = vmatpush.msra.mxu0 %v1509
        %1527 = vmatpush.msra.mxu0 %v1456
        %1528 = vmatpush.msra.mxu0 %v1454
        %1529 = vmatpush.msra.mxu0 %v1452
        %1530 = vmatmul.f32.gmra.mxu0 %v1460
        %v1531 = vpop.f32.mrf.mxu0
        %v1532 = vadd.f32 0.0, %v1531
        %1533 = vmatmul.f32.gmra.mxu0 %v1462
        %v1534 = vpop.f32.mrf.mxu0
        %v1535 = vadd.f32 0.0, %v1534
        %1536 = vmatmul.f32.gmra.mxu0 %v1464
        %v1537 = vpop.f32.mrf.mxu0
        %v1538 = vadd.f32 0.0, %v1537
        %1539 = vmatmul.f32.gmra.mxu0 %v1466
        %v1540 = vpop.f32.mrf.mxu0
        %v1541 = vadd.f32 0.0, %v1540
        %1542 = vmatmul.f32.gmra.mxu0 %v1468
        %v1543 = vpop.f32.mrf.mxu0
        %v1544 = vadd.f32 0.0, %v1543
        %1545 = vmatmul.f32.gmra.mxu0 %v1470
        %v1546 = vpop.f32.mrf.mxu0
        %v1547 = vadd.f32 0.0, %v1546
        %1548 = vmatmul.f32.gmra.mxu0 %v1472
        %v1549 = vpop.f32.mrf.mxu0
        %v1550 = vadd.f32 0.0, %v1549
        %1551 = vmatmul.f32.gmra.mxu0 %v1474
        %v1552 = vpop.f32.mrf.mxu0
        %v1553 = vadd.f32 0.0, %v1552
        %1554 = vmatmul.f32.gmra.mxu0 %v1476
        %v1555 = vpop.f32.mrf.mxu0
        %v1556 = vadd.f32 0.0, %v1555
        %1557 = vmatmul.f32.gmra.mxu0 %v1478
        %v1558 = vpop.f32.mrf.mxu0
        %v1559 = vadd.f32 0.0, %v1558
        %1560 = vmatmul.f32.gmra.mxu0 %v1480
        %v1561 = vpop.f32.mrf.mxu0
        %v1562 = vadd.f32 0.0, %v1561
        %1563 = vmatmul.f32.gmra.mxu0 %v1482
        %v1564 = vpop.f32.mrf.mxu0
        %v1565 = vadd.f32 0.0, %v1564
        %1566 = vmatmul.f32.gmra.mxu0 %v1484
        %v1567 = vpop.f32.mrf.mxu0
        %v1568 = vadd.f32 0.0, %v1567
        %1569 = vmatmul.f32.gmra.mxu0 %v1486
        %v1570 = vpop.f32.mrf.mxu0
        %v1571 = vadd.f32 0.0, %v1570
        %1572 = vmatmul.f32.gmra.mxu0 %v1488
        %v1573 = vpop.f32.mrf.mxu0
        %v1574 = vadd.f32 0.0, %v1573
        %1575 = vmatmul.f32.gmra.mxu0 %v1490
        %v1576 = vpop.f32.mrf.mxu0
        %v1577 = vadd.f32 0.0, %v1576
        %1578 = vmatmul.f32.gmra.mxu0 %v1492
        %v1579 = vpop.f32.mrf.mxu0
        %v1580 = vadd.f32 0.0, %v1579
        %1581 = vmatmul.f32.gmra.mxu0 %v1494
        %v1582 = vpop.f32.mrf.mxu0
        %v1583 = vadd.f32 0.0, %v1582
        %1584 = vmatmul.f32.gmra.mxu0 %v1496
        %v1585 = vpop.f32.mrf.mxu0
        %v1586 = vadd.f32 0.0, %v1585
        %1587 = vmatmul.f32.gmra.mxu0 %v1498
        %v1588 = vpop.f32.mrf.mxu0
        %v1589 = vadd.f32 0.0, %v1588
        %1590 = vmatmul.f32.gmra.mxu0 %v1500
        %v1591 = vpop.f32.mrf.mxu0
        %v1592 = vadd.f32 0.0, %v1591
        %1593 = vmatmul.f32.gmra.mxu0 %v1502
        %v1594 = vpop.f32.mrf.mxu0
        %v1595 = vadd.f32 0.0, %v1594
        %1596 = vmatmul.f32.gmra.mxu0 %v1504
        %v1597 = vpop.f32.mrf.mxu0
        %v1598 = vadd.f32 0.0, %v1597
        %1599 = vmatmul.f32.gmra.mxu0 %v1506
        %v1600 = vpop.f32.mrf.mxu0
        %v1601 = vadd.f32 0.0, %v1600
        %1602 = vdwg.mxu0
        %1603 = vmatpush.msra.mxu0 0.0
        %1604 = vmatpush.msra.mxu0 0.0
        %1605 = vmatpush.msra.mxu0 0.0
        %1606 = vmatpush.msra.mxu0 0.0
        %1607 = vmatpush.msra.mxu0 0.0
        %1608 = vmatpush.msra.mxu0 0.0
        %1609 = vmatpush.msra.mxu0 0.0
        %1610 = vmatpush.msra.mxu0 0.0
        %1611 = vmatpush.msra.mxu0 0.0
        %1612 = vmatpush.msra.mxu0 0.0
        %1613 = vmatpush.msra.mxu0 0.0
        %1614 = vmatpush.msra.mxu0 0.0
        %1615 = vmatpush.msra.mxu0 %v1512
        %1616 = vmatpush.msra.mxu0 %v1457
        %1617 = vmatpush.msra.mxu0 %v1455
        %1618 = vmatpush.msra.mxu0 %v1453
        %1619 = vmatmul.f32.gmra.mxu0 %v1460
        %v1620 = vpop.f32.mrf.mxu0
        %v1621 = vadd.f32 0.0, %v1620
        %1622 = vmatmul.f32.gmra.mxu0 %v1462
        %v1623 = vpop.f32.mrf.mxu0
        %v1624 = vadd.f32 0.0, %v1623
        %1625 = vmatmul.f32.gmra.mxu0 %v1464
        %v1626 = vpop.f32.mrf.mxu0
        %v1627 = vadd.f32 0.0, %v1626
        %1628 = vmatmul.f32.gmra.mxu0 %v1466
        %v1629 = vpop.f32.mrf.mxu0
        %v1630 = vadd.f32 0.0, %v1629
        %1631 = vmatmul.f32.gmra.mxu0 %v1468
        %v1632 = vpop.f32.mrf.mxu0
        %v1633 = vadd.f32 0.0, %v1632
        %1634 = vmatmul.f32.gmra.mxu0 %v1470
        %v1635 = vpop.f32.mrf.mxu0
        %v1636 = vadd.f32 0.0, %v1635
        %1637 = vmatmul.f32.gmra.mxu0 %v1472
        %v1638 = vpop.f32.mrf.mxu0
        %v1639 = vadd.f32 0.0, %v1638
        %1640 = vmatmul.f32.gmra.mxu0 %v1474
        %v1641 = vpop.f32.mrf.mxu0
        %v1642 = vadd.f32 0.0, %v1641
        %1643 = vmatmul.f32.gmra.mxu0 %v1476
        %v1644 = vpop.f32.mrf.mxu0
        %v1645 = vadd.f32 0.0, %v1644
        %1646 = vmatmul.f32.gmra.mxu0 %v1478
        %v1647 = vpop.f32.mrf.mxu0
        %v1648 = vadd.f32 0.0, %v1647
        %1649 = vmatmul.f32.gmra.mxu0 %v1480
        %v1650 = vpop.f32.mrf.mxu0
        %v1651 = vadd.f32 0.0, %v1650
        %1652 = vmatmul.f32.gmra.mxu0 %v1482
        %v1653 = vpop.f32.mrf.mxu0
        %v1654 = vadd.f32 0.0, %v1653
        %1655 = vmatmul.f32.gmra.mxu0 %v1484
        %v1656 = vpop.f32.mrf.mxu0
        %v1657 = vadd.f32 0.0, %v1656
        %1658 = vmatmul.f32.gmra.mxu0 %v1486
        %v1659 = vpop.f32.mrf.mxu0
        %v1660 = vadd.f32 0.0, %v1659
        %1661 = vmatmul.f32.gmra.mxu0 %v1488
        %v1662 = vpop.f32.mrf.mxu0
        %v1663 = vadd.f32 0.0, %v1662
        %1664 = vmatmul.f32.gmra.mxu0 %v1490
        %v1665 = vpop.f32.mrf.mxu0
        %v1666 = vadd.f32 0.0, %v1665
        %1667 = vmatmul.f32.gmra.mxu0 %v1492
        %v1668 = vpop.f32.mrf.mxu0
        %v1669 = vadd.f32 0.0, %v1668
        %1670 = vmatmul.f32.gmra.mxu0 %v1494
        %v1671 = vpop.f32.mrf.mxu0
        %v1672 = vadd.f32 0.0, %v1671
        %1673 = vmatmul.f32.gmra.mxu0 %v1496
        %v1674 = vpop.f32.mrf.mxu0
        %v1675 = vadd.f32 0.0, %v1674
        %1676 = vmatmul.f32.gmra.mxu0 %v1498
        %v1677 = vpop.f32.mrf.mxu0
        %v1678 = vadd.f32 0.0, %v1677
        %1679 = vmatmul.f32.gmra.mxu0 %v1500
        %v1680 = vpop.f32.mrf.mxu0
        %v1681 = vadd.f32 0.0, %v1680
        %1682 = vmatmul.f32.gmra.mxu0 %v1502
        %v1683 = vpop.f32.mrf.mxu0
        %v1684 = vadd.f32 0.0, %v1683
        %1685 = vmatmul.f32.gmra.mxu0 %v1504
        %v1686 = vpop.f32.mrf.mxu0
        %v1687 = vadd.f32 0.0, %v1686
        %1688 = vmatmul.f32.gmra.mxu0 %v1506
        %v1689 = vpop.f32.mrf.mxu0
        %v1690 = vadd.f32 0.0, %v1689
        %1691 = vdwg.mxu0
        %v1692 = vadd.f32 %v1346, %v1532
        %v1693 = vadd.f32 %v1347, %v1621
        %v1694 = vadd.f32 %v1348, %v1535
        %v1695 = vadd.f32 %v1349, %v1624
        %v1696 = vadd.f32 %v1350, %v1538
        %v1697 = vadd.f32 %v1351, %v1627
        %v1698 = vadd.f32 %v1352, %v1541
        %v1699 = vadd.f32 %v1353, %v1630
        %v1700 = vadd.f32 %v1354, %v1544
        %v1701 = vadd.f32 %v1355, %v1633
        %v1702 = vadd.f32 %v1356, %v1547
        %v1703 = vadd.f32 %v1357, %v1636
        %v1704 = vadd.f32 %v1358, %v1550
        %v1705 = vadd.f32 %v1359, %v1639
        %v1706 = vadd.f32 %v1360, %v1553
        %v1707 = vadd.f32 %v1361, %v1642
        %v1708 = vadd.f32 %v1362, %v1556
        %v1709 = vadd.f32 %v1363, %v1645
        %v1710 = vadd.f32 %v1364, %v1559
        %v1711 = vadd.f32 %v1365, %v1648
        %v1712 = vadd.f32 %v1366, %v1562
        %v1713 = vadd.f32 %v1367, %v1651
        %v1714 = vadd.f32 %v1368, %v1565
        %v1715 = vadd.f32 %v1369, %v1654
        %v1716 = vadd.f32 %v1370, %v1568
        %v1717 = vadd.f32 %v1371, %v1657
        %v1718 = vadd.f32 %v1372, %v1571
        %v1719 = vadd.f32 %v1373, %v1660
        %v1720 = vadd.f32 %v1374, %v1574
        %v1721 = vadd.f32 %v1375, %v1663
        %v1722 = vadd.f32 %v1376, %v1577
        %v1723 = vadd.f32 %v1377, %v1666
        %v1724 = vadd.f32 %v1378, %v1580
        %v1725 = vadd.f32 %v1379, %v1669
        %v1726 = vadd.f32 %v1380, %v1583
        %v1727 = vadd.f32 %v1381, %v1672
        %v1728 = vadd.f32 %v1382, %v1586
        %v1729 = vadd.f32 %v1383, %v1675
        %v1730 = vadd.f32 %v1384, %v1589
        %v1731 = vadd.f32 %v1385, %v1678
        %v1732 = vadd.f32 %v1386, %v1592
        %v1733 = vadd.f32 %v1387, %v1681
        %v1734 = vadd.f32 %v1388, %v1595
        %v1735 = vadd.f32 %v1389, %v1684
        %v1736 = vadd.f32 %v1390, %v1598
        %v1737 = vadd.f32 %v1391, %v1687
        %v1738 = vadd.f32 %v1392, %v1601
        %v1739 = vadd.f32 %v1393, %v1690
        %v1740 = vrot.slane %v444, 4
        %v1741 = vrot.slane %v445, 4
        %v1742 = vsel %vm631, %v1740, %v1741
        %v1743 = vrot.slane %v446, 4
        %v1744 = vsel %vm631, %v1741, %v1743
        %v1745 = vrot.slane %v447, 4
        %v1746 = vsel %vm631, %v1743, %v1745
        %v1747 = vrot.slane %v448, 4
        %v1748 = vrot.slane %v449, 4
        %v1749 = vsel %vm631, %v1747, %v1748
        %v1750 = vrot.slane %v450, 4
        %v1751 = vsel %vm631, %v1748, %v1750
        %v1752 = vrot.slane %v451, 4
        %v1753 = vsel %vm631, %v1750, %v1752
        %v1754 = vrot.slane %v452, 4
        %v1755 = vrot.slane %v453, 4
        %v1756 = vsel %vm631, %v1754, %v1755
        %v1757 = vrot.slane %v454, 4
        %v1758 = vsel %vm631, %v1755, %v1757
        %v1759 = vrot.slane %v455, 4
        %v1760 = vsel %vm631, %v1757, %v1759
        %v1761 = vrot.slane %v456, 4
        %v1762 = vrot.slane %v457, 4
        %v1763 = vsel %vm631, %v1761, %v1762
        %v1764 = vrot.slane %v458, 4
        %v1765 = vsel %vm631, %v1762, %v1764
        %v1766 = vrot.slane %v459, 4
        %v1767 = vsel %vm631, %v1764, %v1766
        %v1768 = vrot.slane %v460, 4
        %v1769 = vrot.slane %v461, 4
        %v1770 = vsel %vm631, %v1768, %v1769
        %v1771 = vrot.slane %v462, 4
        %v1772 = vsel %vm631, %v1769, %v1771
        %v1773 = vrot.slane %v463, 4
        %v1774 = vsel %vm631, %v1771, %v1773
        %v1775 = vrot.slane %v464, 4
        %v1776 = vrot.slane %v465, 4
        %v1777 = vsel %vm631, %v1775, %v1776
        %v1778 = vrot.slane %v466, 4
        %v1779 = vsel %vm631, %v1776, %v1778
        %v1780 = vrot.slane %v467, 4
        %v1781 = vsel %vm631, %v1778, %v1780
        %v1782 = vrot.slane %v468, 4
        %v1783 = vrot.slane %v469, 4
        %v1784 = vsel %vm631, %v1782, %v1783
        %v1785 = vrot.slane %v470, 4
        %v1786 = vsel %vm631, %v1783, %v1785
        %v1787 = vrot.slane %v471, 4
        %v1788 = vsel %vm631, %v1785, %v1787
        %v1789 = vrot.slane %v472, 4
        %v1790 = vrot.slane %v473, 4
        %v1791 = vsel %vm631, %v1789, %v1790
        %v1792 = vrot.slane %v474, 4
        %v1793 = vsel %vm631, %v1790, %v1792
        %v1794 = vrot.slane %v475, 4
        %v1795 = vsel %vm631, %v1792, %v1794
        %s1796 = scalar_lea.vmem %s1, 256
        %v1797 = vld [vmem:[%s1796] sm:$0xff]
        %v1798 = vld [vmem:[%s1796 + $0x8] sm:$0xff]
        %v1799 = vld [vmem:[%s1796 + $0x10] sm:$0xff]
        %v1800 = vld [vmem:[%s1796 + $0x18] sm:$0xff]
        %v1801 = vld [vmem:[%s1796 + $0x20] sm:$0xff]
        %v1802 = vld [vmem:[%s1796 + $0x28] sm:$0xff]
        %v1803 = vld [vmem:[%s1796 + $0x30] sm:$0xf]
        %v1804 = vld [vmem:[%s1796 + $0x38] sm:$0xf]
        %v1805 = vsel %vm582, %v1742, 0
        %v1807 = vsel %vm582, %v1744, 0
        %v1809 = vsel %vm582, %v1746, 0
        %v1811 = vsel %vm582, %v1749, 0
        %v1813 = vsel %vm582, %v1751, 0
        %v1815 = vsel %vm582, %v1753, 0
        %v1817 = vsel %vm582, %v1756, 0
        %v1819 = vsel %vm582, %v1758, 0
        %v1821 = vsel %vm582, %v1760, 0
        %v1823 = vsel %vm582, %v1763, 0
        %v1825 = vsel %vm582, %v1765, 0
        %v1827 = vsel %vm582, %v1767, 0
        %v1829 = vsel %vm582, %v1770, 0
        %v1831 = vsel %vm582, %v1772, 0
        %v1833 = vsel %vm582, %v1774, 0
        %v1835 = vsel %vm582, %v1777, 0
        %v1837 = vsel %vm582, %v1779, 0
        %v1839 = vsel %vm582, %v1781, 0
        %v1841 = vsel %vm582, %v1784, 0
        %v1843 = vsel %vm582, %v1786, 0
        %v1845 = vsel %vm582, %v1788, 0
        %v1847 = vsel %vm582, %v1791, 0
        %v1849 = vsel %vm582, %v1793, 0
        %v1851 = vsel %vm582, %v1795, 0
        %v1854 = vsel %vm631, %v1803, 0
        %v1857 = vsel %vm631, %v1804, 0
        %1859 = vmatpush.msra.mxu0 0.0
        %1860 = vmatpush.msra.mxu0 0.0
        %1861 = vmatpush.msra.mxu0 0.0
        %1862 = vmatpush.msra.mxu0 0.0
        %1863 = vmatpush.msra.mxu0 0.0
        %1864 = vmatpush.msra.mxu0 0.0
        %1865 = vmatpush.msra.mxu0 0.0
        %1866 = vmatpush.msra.mxu0 0.0
        %1867 = vmatpush.msra.mxu0 0.0
        %1868 = vmatpush.msra.mxu0 0.0
        %1869 = vmatpush.msra.mxu0 0.0
        %1870 = vmatpush.msra.mxu0 0.0
        %1871 = vmatpush.msra.mxu0 %v1854
        %1872 = vmatpush.msra.mxu0 %v1801
        %1873 = vmatpush.msra.mxu0 %v1799
        %1874 = vmatpush.msra.mxu0 %v1797
        %1875 = vmatmul.f32.gmra.mxu0 %v1805
        %v1876 = vpop.f32.mrf.mxu0
        %v1877 = vadd.f32 0.0, %v1876
        %1878 = vmatmul.f32.gmra.mxu0 %v1807
        %v1879 = vpop.f32.mrf.mxu0
        %v1880 = vadd.f32 0.0, %v1879
        %1881 = vmatmul.f32.gmra.mxu0 %v1809
        %v1882 = vpop.f32.mrf.mxu0
        %v1883 = vadd.f32 0.0, %v1882
        %1884 = vmatmul.f32.gmra.mxu0 %v1811
        %v1885 = vpop.f32.mrf.mxu0
        %v1886 = vadd.f32 0.0, %v1885
        %1887 = vmatmul.f32.gmra.mxu0 %v1813
        %v1888 = vpop.f32.mrf.mxu0
        %v1889 = vadd.f32 0.0, %v1888
        %1890 = vmatmul.f32.gmra.mxu0 %v1815
        %v1891 = vpop.f32.mrf.mxu0
        %v1892 = vadd.f32 0.0, %v1891
        %1893 = vmatmul.f32.gmra.mxu0 %v1817
        %v1894 = vpop.f32.mrf.mxu0
        %v1895 = vadd.f32 0.0, %v1894
        %1896 = vmatmul.f32.gmra.mxu0 %v1819
        %v1897 = vpop.f32.mrf.mxu0
        %v1898 = vadd.f32 0.0, %v1897
        %1899 = vmatmul.f32.gmra.mxu0 %v1821
        %v1900 = vpop.f32.mrf.mxu0
        %v1901 = vadd.f32 0.0, %v1900
        %1902 = vmatmul.f32.gmra.mxu0 %v1823
        %v1903 = vpop.f32.mrf.mxu0
        %v1904 = vadd.f32 0.0, %v1903
        %1905 = vmatmul.f32.gmra.mxu0 %v1825
        %v1906 = vpop.f32.mrf.mxu0
        %v1907 = vadd.f32 0.0, %v1906
        %1908 = vmatmul.f32.gmra.mxu0 %v1827
        %v1909 = vpop.f32.mrf.mxu0
        %v1910 = vadd.f32 0.0, %v1909
        %1911 = vmatmul.f32.gmra.mxu0 %v1829
        %v1912 = vpop.f32.mrf.mxu0
        %v1913 = vadd.f32 0.0, %v1912
        %1914 = vmatmul.f32.gmra.mxu0 %v1831
        %v1915 = vpop.f32.mrf.mxu0
        %v1916 = vadd.f32 0.0, %v1915
        %1917 = vmatmul.f32.gmra.mxu0 %v1833
        %v1918 = vpop.f32.mrf.mxu0
        %v1919 = vadd.f32 0.0, %v1918
        %1920 = vmatmul.f32.gmra.mxu0 %v1835
        %v1921 = vpop.f32.mrf.mxu0
        %v1922 = vadd.f32 0.0, %v1921
        %1923 = vmatmul.f32.gmra.mxu0 %v1837
        %v1924 = vpop.f32.mrf.mxu0
        %v1925 = vadd.f32 0.0, %v1924
        %1926 = vmatmul.f32.gmra.mxu0 %v1839
        %v1927 = vpop.f32.mrf.mxu0
        %v1928 = vadd.f32 0.0, %v1927
        %1929 = vmatmul.f32.gmra.mxu0 %v1841
        %v1930 = vpop.f32.mrf.mxu0
        %v1931 = vadd.f32 0.0, %v1930
        %1932 = vmatmul.f32.gmra.mxu0 %v1843
        %v1933 = vpop.f32.mrf.mxu0
        %v1934 = vadd.f32 0.0, %v1933
        %1935 = vmatmul.f32.gmra.mxu0 %v1845
        %v1936 = vpop.f32.mrf.mxu0
        %v1937 = vadd.f32 0.0, %v1936
        %1938 = vmatmul.f32.gmra.mxu0 %v1847
        %v1939 = vpop.f32.mrf.mxu0
        %v1940 = vadd.f32 0.0, %v1939
        %1941 = vmatmul.f32.gmra.mxu0 %v1849
        %v1942 = vpop.f32.mrf.mxu0
        %v1943 = vadd.f32 0.0, %v1942
        %1944 = vmatmul.f32.gmra.mxu0 %v1851
        %v1945 = vpop.f32.mrf.mxu0
        %v1946 = vadd.f32 0.0, %v1945
        %1947 = vdwg.mxu0
        %1948 = vmatpush.msra.mxu0 0.0
        %1949 = vmatpush.msra.mxu0 0.0
        %1950 = vmatpush.msra.mxu0 0.0
        %1951 = vmatpush.msra.mxu0 0.0
        %1952 = vmatpush.msra.mxu0 0.0
        %1953 = vmatpush.msra.mxu0 0.0
        %1954 = vmatpush.msra.mxu0 0.0
        %1955 = vmatpush.msra.mxu0 0.0
        %1956 = vmatpush.msra.mxu0 0.0
        %1957 = vmatpush.msra.mxu0 0.0
        %1958 = vmatpush.msra.mxu0 0.0
        %1959 = vmatpush.msra.mxu0 0.0
        %1960 = vmatpush.msra.mxu0 %v1857
        %1961 = vmatpush.msra.mxu0 %v1802
        %1962 = vmatpush.msra.mxu0 %v1800
        %1963 = vmatpush.msra.mxu0 %v1798
        %1964 = vmatmul.f32.gmra.mxu0 %v1805
        %v1965 = vpop.f32.mrf.mxu0
        %v1966 = vadd.f32 0.0, %v1965
        %1967 = vmatmul.f32.gmra.mxu0 %v1807
        %v1968 = vpop.f32.mrf.mxu0
        %v1969 = vadd.f32 0.0, %v1968
        %1970 = vmatmul.f32.gmra.mxu0 %v1809
        %v1971 = vpop.f32.mrf.mxu0
        %v1972 = vadd.f32 0.0, %v1971
        %1973 = vmatmul.f32.gmra.mxu0 %v1811
        %v1974 = vpop.f32.mrf.mxu0
        %v1975 = vadd.f32 0.0, %v1974
        %1976 = vmatmul.f32.gmra.mxu0 %v1813
        %v1977 = vpop.f32.mrf.mxu0
        %v1978 = vadd.f32 0.0, %v1977
        %1979 = vmatmul.f32.gmra.mxu0 %v1815
        %v1980 = vpop.f32.mrf.mxu0
        %v1981 = vadd.f32 0.0, %v1980
        %1982 = vmatmul.f32.gmra.mxu0 %v1817
        %v1983 = vpop.f32.mrf.mxu0
        %v1984 = vadd.f32 0.0, %v1983
        %1985 = vmatmul.f32.gmra.mxu0 %v1819
        %v1986 = vpop.f32.mrf.mxu0
        %v1987 = vadd.f32 0.0, %v1986
        %1988 = vmatmul.f32.gmra.mxu0 %v1821
        %v1989 = vpop.f32.mrf.mxu0
        %v1990 = vadd.f32 0.0, %v1989
        %1991 = vmatmul.f32.gmra.mxu0 %v1823
        %v1992 = vpop.f32.mrf.mxu0
        %v1993 = vadd.f32 0.0, %v1992
        %1994 = vmatmul.f32.gmra.mxu0 %v1825
        %v1995 = vpop.f32.mrf.mxu0
        %v1996 = vadd.f32 0.0, %v1995
        %1997 = vmatmul.f32.gmra.mxu0 %v1827
        %v1998 = vpop.f32.mrf.mxu0
        %v1999 = vadd.f32 0.0, %v1998
        %2000 = vmatmul.f32.gmra.mxu0 %v1829
        %v2001 = vpop.f32.mrf.mxu0
        %v2002 = vadd.f32 0.0, %v2001
        %2003 = vmatmul.f32.gmra.mxu0 %v1831
        %v2004 = vpop.f32.mrf.mxu0
        %v2005 = vadd.f32 0.0, %v2004
        %2006 = vmatmul.f32.gmra.mxu0 %v1833
        %v2007 = vpop.f32.mrf.mxu0
        %v2008 = vadd.f32 0.0, %v2007
        %2009 = vmatmul.f32.gmra.mxu0 %v1835
        %v2010 = vpop.f32.mrf.mxu0
        %v2011 = vadd.f32 0.0, %v2010
        %2012 = vmatmul.f32.gmra.mxu0 %v1837
        %v2013 = vpop.f32.mrf.mxu0
        %v2014 = vadd.f32 0.0, %v2013
        %2015 = vmatmul.f32.gmra.mxu0 %v1839
        %v2016 = vpop.f32.mrf.mxu0
        %v2017 = vadd.f32 0.0, %v2016
        %2018 = vmatmul.f32.gmra.mxu0 %v1841
        %v2019 = vpop.f32.mrf.mxu0
        %v2020 = vadd.f32 0.0, %v2019
        %2021 = vmatmul.f32.gmra.mxu0 %v1843
        %v2022 = vpop.f32.mrf.mxu0
        %v2023 = vadd.f32 0.0, %v2022
        %2024 = vmatmul.f32.gmra.mxu0 %v1845
        %v2025 = vpop.f32.mrf.mxu0
        %v2026 = vadd.f32 0.0, %v2025
        %2027 = vmatmul.f32.gmra.mxu0 %v1847
        %v2028 = vpop.f32.mrf.mxu0
        %v2029 = vadd.f32 0.0, %v2028
        %2030 = vmatmul.f32.gmra.mxu0 %v1849
        %v2031 = vpop.f32.mrf.mxu0
        %v2032 = vadd.f32 0.0, %v2031
        %2033 = vmatmul.f32.gmra.mxu0 %v1851
        %v2034 = vpop.f32.mrf.mxu0
        %v2035 = vadd.f32 0.0, %v2034
        %2036 = vdwg.mxu0
        %v2037 = vadd.f32 %v1692, %v1877
        %v2038 = vadd.f32 %v1693, %v1966
        %v2039 = vadd.f32 %v1694, %v1880
        %v2040 = vadd.f32 %v1695, %v1969
        %v2041 = vadd.f32 %v1696, %v1883
        %v2042 = vadd.f32 %v1697, %v1972
        %v2043 = vadd.f32 %v1698, %v1886
        %v2044 = vadd.f32 %v1699, %v1975
        %v2045 = vadd.f32 %v1700, %v1889
        %v2046 = vadd.f32 %v1701, %v1978
        %v2047 = vadd.f32 %v1702, %v1892
        %v2048 = vadd.f32 %v1703, %v1981
        %v2049 = vadd.f32 %v1704, %v1895
        %v2050 = vadd.f32 %v1705, %v1984
        %v2051 = vadd.f32 %v1706, %v1898
        %v2052 = vadd.f32 %v1707, %v1987
        %v2053 = vadd.f32 %v1708, %v1901
        %v2054 = vadd.f32 %v1709, %v1990
        %v2055 = vadd.f32 %v1710, %v1904
        %v2056 = vadd.f32 %v1711, %v1993
        %v2057 = vadd.f32 %v1712, %v1907
        %v2058 = vadd.f32 %v1713, %v1996
        %v2059 = vadd.f32 %v1714, %v1910
        %v2060 = vadd.f32 %v1715, %v1999
        %v2061 = vadd.f32 %v1716, %v1913
        %v2062 = vadd.f32 %v1717, %v2002
        %v2063 = vadd.f32 %v1718, %v1916
        %v2064 = vadd.f32 %v1719, %v2005
        %v2065 = vadd.f32 %v1720, %v1919
        %v2066 = vadd.f32 %v1721, %v2008
        %v2067 = vadd.f32 %v1722, %v1922
        %v2068 = vadd.f32 %v1723, %v2011
        %v2069 = vadd.f32 %v1724, %v1925
        %v2070 = vadd.f32 %v1725, %v2014
        %v2071 = vadd.f32 %v1726, %v1928
        %v2072 = vadd.f32 %v1727, %v2017
        %v2073 = vadd.f32 %v1728, %v1931
        %v2074 = vadd.f32 %v1729, %v2020
        %v2075 = vadd.f32 %v1730, %v1934
        %v2076 = vadd.f32 %v1731, %v2023
        %v2077 = vadd.f32 %v1732, %v1937
        %v2078 = vadd.f32 %v1733, %v2026
        %v2079 = vadd.f32 %v1734, %v1940
        %v2080 = vadd.f32 %v1735, %v2029
        %v2081 = vadd.f32 %v1736, %v1943
        %v2082 = vadd.f32 %v1737, %v2032
        %v2083 = vadd.f32 %v1738, %v1946
        %v2084 = vadd.f32 %v1739, %v2035
        %v2085 = vld [vmem:[%s2] sm:$0x3]
        %v2087 = vperm.slane %v2085, 0
        %v2088 = vperm.slane %v2085, 1
        %v2091 = vadd.f32 %v2037, %v2087
        %v2092 = vadd.f32 %v2038, %v2088
        %v2093 = vadd.f32 %v2039, %v2087
        %v2094 = vadd.f32 %v2040, %v2088
        %v2095 = vadd.f32 %v2041, %v2087
        %v2096 = vadd.f32 %v2042, %v2088
        %v2097 = vadd.f32 %v2043, %v2087
        %v2098 = vadd.f32 %v2044, %v2088
        %v2099 = vadd.f32 %v2045, %v2087
        %v2100 = vadd.f32 %v2046, %v2088
        %v2101 = vadd.f32 %v2047, %v2087
        %v2102 = vadd.f32 %v2048, %v2088
        %v2103 = vadd.f32 %v2049, %v2087
        %v2104 = vadd.f32 %v2050, %v2088
        %v2105 = vadd.f32 %v2051, %v2087
        %v2106 = vadd.f32 %v2052, %v2088
        %v2107 = vadd.f32 %v2053, %v2087
        %v2108 = vadd.f32 %v2054, %v2088
        %v2109 = vadd.f32 %v2055, %v2087
        %v2110 = vadd.f32 %v2056, %v2088
        %v2111 = vadd.f32 %v2057, %v2087
        %v2112 = vadd.f32 %v2058, %v2088
        %v2113 = vadd.f32 %v2059, %v2087
        %v2114 = vadd.f32 %v2060, %v2088
        %v2115 = vadd.f32 %v2061, %v2087
        %v2116 = vadd.f32 %v2062, %v2088
        %v2117 = vadd.f32 %v2063, %v2087
        %v2118 = vadd.f32 %v2064, %v2088
        %v2119 = vadd.f32 %v2065, %v2087
        %v2120 = vadd.f32 %v2066, %v2088
        %v2121 = vadd.f32 %v2067, %v2087
        %v2122 = vadd.f32 %v2068, %v2088
        %v2123 = vadd.f32 %v2069, %v2087
        %v2124 = vadd.f32 %v2070, %v2088
        %v2125 = vadd.f32 %v2071, %v2087
        %v2126 = vadd.f32 %v2072, %v2088
        %v2127 = vadd.f32 %v2073, %v2087
        %v2128 = vadd.f32 %v2074, %v2088
        %v2129 = vadd.f32 %v2075, %v2087
        %v2130 = vadd.f32 %v2076, %v2088
        %v2131 = vadd.f32 %v2077, %v2087
        %v2132 = vadd.f32 %v2078, %v2088
        %v2133 = vadd.f32 %v2079, %v2087
        %v2134 = vadd.f32 %v2080, %v2088
        %v2135 = vadd.f32 %v2081, %v2087
        %v2136 = vadd.f32 %v2082, %v2088
        %v2137 = vadd.f32 %v2083, %v2087
        %v2138 = vadd.f32 %v2084, %v2088
        %v2139 = vmax.f32 %v2091, 0.0
        %v2140 = vmax.f32 %v2092, 0.0
        %v2141 = vmax.f32 %v2093, 0.0
        %v2142 = vmax.f32 %v2094, 0.0
        %v2143 = vmax.f32 %v2095, 0.0
        %v2144 = vmax.f32 %v2096, 0.0
        %v2145 = vmax.f32 %v2097, 0.0
        %v2146 = vmax.f32 %v2098, 0.0
        %v2147 = vmax.f32 %v2099, 0.0
        %v2148 = vmax.f32 %v2100, 0.0
        %v2149 = vmax.f32 %v2101, 0.0
        %v2150 = vmax.f32 %v2102, 0.0
        %v2151 = vmax.f32 %v2103, 0.0
        %v2152 = vmax.f32 %v2104, 0.0
        %v2153 = vmax.f32 %v2105, 0.0
        %v2154 = vmax.f32 %v2106, 0.0
        %v2155 = vmax.f32 %v2107, 0.0
        %v2156 = vmax.f32 %v2108, 0.0
        %v2157 = vmax.f32 %v2109, 0.0
        %v2158 = vmax.f32 %v2110, 0.0
        %v2159 = vmax.f32 %v2111, 0.0
        %v2160 = vmax.f32 %v2112, 0.0
        %v2161 = vmax.f32 %v2113, 0.0
        %v2162 = vmax.f32 %v2114, 0.0
        %v2163 = vmax.f32 %v2115, 0.0
        %v2164 = vmax.f32 %v2116, 0.0
        %v2165 = vmax.f32 %v2117, 0.0
        %v2166 = vmax.f32 %v2118, 0.0
        %v2167 = vmax.f32 %v2119, 0.0
        %v2168 = vmax.f32 %v2120, 0.0
        %v2169 = vmax.f32 %v2121, 0.0
        %v2170 = vmax.f32 %v2122, 0.0
        %v2171 = vmax.f32 %v2123, 0.0
        %v2172 = vmax.f32 %v2124, 0.0
        %v2173 = vmax.f32 %v2125, 0.0
        %v2174 = vmax.f32 %v2126, 0.0
        %v2175 = vmax.f32 %v2127, 0.0
        %v2176 = vmax.f32 %v2128, 0.0
        %v2177 = vmax.f32 %v2129, 0.0
        %v2178 = vmax.f32 %v2130, 0.0
        %v2179 = vmax.f32 %v2131, 0.0
        %v2180 = vmax.f32 %v2132, 0.0
        %v2181 = vmax.f32 %v2133, 0.0
        %v2182 = vmax.f32 %v2134, 0.0
        %v2183 = vmax.f32 %v2135, 0.0
        %v2184 = vmax.f32 %v2136, 0.0
        %v2185 = vmax.f32 %v2137, 0.0
        %v2186 = vmax.f32 %v2138, 0.0
        %2235 = vrot.lane.b32.xlu0 %v2139, 127
        %v2236 = vpop.permute.xlu0 %2235
        %2237 = vrot.lane.b32.xlu0 %v2140, 127
        %v2238 = vpop.permute.xlu0 %2237
        %2239 = vrot.lane.b32.xlu0 %v2141, 127
        %v2240 = vpop.permute.xlu0 %2239
        %2241 = vrot.lane.b32.xlu0 %v2142, 127
        %v2242 = vpop.permute.xlu0 %2241
        %2243 = vrot.lane.b32.xlu0 %v2143, 127
        %v2244 = vpop.permute.xlu0 %2243
        %2245 = vrot.lane.b32.xlu0 %v2144, 127
        %v2246 = vpop.permute.xlu0 %2245
        %2247 = vrot.lane.b32.xlu0 %v2145, 127
        %v2248 = vpop.permute.xlu0 %2247
        %2249 = vrot.lane.b32.xlu0 %v2146, 127
        %v2250 = vpop.permute.xlu0 %2249
        %2251 = vrot.lane.b32.xlu0 %v2147, 127
        %v2252 = vpop.permute.xlu0 %2251
        %2253 = vrot.lane.b32.xlu0 %v2148, 127
        %v2254 = vpop.permute.xlu0 %2253
        %2255 = vrot.lane.b32.xlu0 %v2149, 127
        %v2256 = vpop.permute.xlu0 %2255
        %2257 = vrot.lane.b32.xlu0 %v2150, 127
        %v2258 = vpop.permute.xlu0 %2257
        %2259 = vrot.lane.b32.xlu0 %v2151, 127
        %v2260 = vpop.permute.xlu0 %2259
        %2261 = vrot.lane.b32.xlu0 %v2152, 127
        %v2262 = vpop.permute.xlu0 %2261
        %2263 = vrot.lane.b32.xlu0 %v2153, 127
        %v2264 = vpop.permute.xlu0 %2263
        %2265 = vrot.lane.b32.xlu0 %v2154, 127
        %v2266 = vpop.permute.xlu0 %2265
        %2267 = vrot.lane.b32.xlu0 %v2155, 127
        %v2268 = vpop.permute.xlu0 %2267
        %2269 = vrot.lane.b32.xlu0 %v2156, 127
        %v2270 = vpop.permute.xlu0 %2269
        %2271 = vrot.lane.b32.xlu0 %v2157, 127
        %v2272 = vpop.permute.xlu0 %2271
        %2273 = vrot.lane.b32.xlu0 %v2158, 127
        %v2274 = vpop.permute.xlu0 %2273
        %2275 = vrot.lane.b32.xlu0 %v2159, 127
        %v2276 = vpop.permute.xlu0 %2275
        %2277 = vrot.lane.b32.xlu0 %v2160, 127
        %v2278 = vpop.permute.xlu0 %2277
        %2279 = vrot.lane.b32.xlu0 %v2161, 127
        %v2280 = vpop.permute.xlu0 %2279
        %2281 = vrot.lane.b32.xlu0 %v2162, 127
        %v2282 = vpop.permute.xlu0 %2281
        %2283 = vrot.lane.b32.xlu0 %v2163, 127
        %v2284 = vpop.permute.xlu0 %2283
        %2285 = vrot.lane.b32.xlu0 %v2164, 127
        %v2286 = vpop.permute.xlu0 %2285
        %2287 = vrot.lane.b32.xlu0 %v2165, 127
        %v2288 = vpop.permute.xlu0 %2287
        %2289 = vrot.lane.b32.xlu0 %v2166, 127
        %v2290 = vpop.permute.xlu0 %2289
        %2291 = vrot.lane.b32.xlu0 %v2167, 127
        %v2292 = vpop.permute.xlu0 %2291
        %2293 = vrot.lane.b32.xlu0 %v2168, 127
        %v2294 = vpop.permute.xlu0 %2293
        %2295 = vrot.lane.b32.xlu0 %v2169, 127
        %v2296 = vpop.permute.xlu0 %2295
        %2297 = vrot.lane.b32.xlu0 %v2170, 127
        %v2298 = vpop.permute.xlu0 %2297
        %2299 = vrot.lane.b32.xlu0 %v2171, 127
        %v2300 = vpop.permute.xlu0 %2299
        %2301 = vrot.lane.b32.xlu0 %v2172, 127
        %v2302 = vpop.permute.xlu0 %2301
        %2303 = vrot.lane.b32.xlu0 %v2173, 127
        %v2304 = vpop.permute.xlu0 %2303
        %2305 = vrot.lane.b32.xlu0 %v2174, 127
        %v2306 = vpop.permute.xlu0 %2305
        %2307 = vrot.lane.b32.xlu0 %v2175, 127
        %v2308 = vpop.permute.xlu0 %2307
        %2309 = vrot.lane.b32.xlu0 %v2176, 127
        %v2310 = vpop.permute.xlu0 %2309
        %2311 = vrot.lane.b32.xlu0 %v2177, 127
        %v2312 = vpop.permute.xlu0 %2311
        %2313 = vrot.lane.b32.xlu0 %v2178, 127
        %v2314 = vpop.permute.xlu0 %2313
        %2315 = vrot.lane.b32.xlu0 %v2179, 127
        %v2316 = vpop.permute.xlu0 %2315
        %2317 = vrot.lane.b32.xlu0 %v2180, 127
        %v2318 = vpop.permute.xlu0 %2317
        %2319 = vrot.lane.b32.xlu0 %v2181, 127
        %v2320 = vpop.permute.xlu0 %2319
        %2321 = vrot.lane.b32.xlu0 %v2182, 127
        %v2322 = vpop.permute.xlu0 %2321
        %2323 = vrot.lane.b32.xlu0 %v2183, 127
        %v2324 = vpop.permute.xlu0 %2323
        %2325 = vrot.lane.b32.xlu0 %v2184, 127
        %v2326 = vpop.permute.xlu0 %2325
        %2327 = vrot.lane.b32.xlu0 %v2185, 127
        %v2328 = vpop.permute.xlu0 %2327
        %2329 = vrot.lane.b32.xlu0 %v2186, 127
        %v2330 = vpop.permute.xlu0 %2329
        %vm2331 = vcmask 1039360
        %v2332 = vsel %vm2331, %v2236, %v2238
        %v2333 = vsel %vm2331, %v2240, %v2242
        %v2334 = vsel %vm2331, %v2244, %v2246
        %v2335 = vsel %vm2331, %v2248, %v2250
        %v2336 = vsel %vm2331, %v2252, %v2254
        %v2337 = vsel %vm2331, %v2256, %v2258
        %v2338 = vsel %vm2331, %v2260, %v2262
        %v2339 = vsel %vm2331, %v2264, %v2266
        %v2340 = vsel %vm2331, %v2268, %v2270
        %v2341 = vsel %vm2331, %v2272, %v2274
        %v2342 = vsel %vm2331, %v2276, %v2278
        %v2343 = vsel %vm2331, %v2280, %v2282
        %v2344 = vsel %vm2331, %v2284, %v2286
        %v2345 = vsel %vm2331, %v2288, %v2290
        %v2346 = vsel %vm2331, %v2292, %v2294
        %v2347 = vsel %vm2331, %v2296, %v2298
        %v2348 = vsel %vm2331, %v2300, %v2302
        %v2349 = vsel %vm2331, %v2304, %v2306
        %v2350 = vsel %vm2331, %v2308, %v2310
        %v2351 = vsel %vm2331, %v2312, %v2314
        %v2352 = vsel %vm2331, %v2316, %v2318
        %v2353 = vsel %vm2331, %v2320, %v2322
        %v2354 = vsel %vm2331, %v2324, %v2326
        %v2355 = vsel %vm2331, %v2328, %v2330
        %v2404 = vmax.f32 %v2139, %v2332
        %v2405 = vmax.f32 %v2140, %v2238
        %v2406 = vmax.f32 %v2141, %v2333
        %v2407 = vmax.f32 %v2142, %v2242
        %v2408 = vmax.f32 %v2143, %v2334
        %v2409 = vmax.f32 %v2144, %v2246
        %v2410 = vmax.f32 %v2145, %v2335
        %v2411 = vmax.f32 %v2146, %v2250
        %v2412 = vmax.f32 %v2147, %v2336
        %v2413 = vmax.f32 %v2148, %v2254
        %v2414 = vmax.f32 %v2149, %v2337
        %v2415 = vmax.f32 %v2150, %v2258
        %v2416 = vmax.f32 %v2151, %v2338
        %v2417 = vmax.f32 %v2152, %v2262
        %v2418 = vmax.f32 %v2153, %v2339
        %v2419 = vmax.f32 %v2154, %v2266
        %v2420 = vmax.f32 %v2155, %v2340
        %v2421 = vmax.f32 %v2156, %v2270
        %v2422 = vmax.f32 %v2157, %v2341
        %v2423 = vmax.f32 %v2158, %v2274
        %v2424 = vmax.f32 %v2159, %v2342
        %v2425 = vmax.f32 %v2160, %v2278
        %v2426 = vmax.f32 %v2161, %v2343
        %v2427 = vmax.f32 %v2162, %v2282
        %v2428 = vmax.f32 %v2163, %v2344
        %v2429 = vmax.f32 %v2164, %v2286
        %v2430 = vmax.f32 %v2165, %v2345
        %v2431 = vmax.f32 %v2166, %v2290
        %v2432 = vmax.f32 %v2167, %v2346
        %v2433 = vmax.f32 %v2168, %v2294
        %v2434 = vmax.f32 %v2169, %v2347
        %v2435 = vmax.f32 %v2170, %v2298
        %v2436 = vmax.f32 %v2171, %v2348
        %v2437 = vmax.f32 %v2172, %v2302
        %v2438 = vmax.f32 %v2173, %v2349
        %v2439 = vmax.f32 %v2174, %v2306
        %v2440 = vmax.f32 %v2175, %v2350
        %v2441 = vmax.f32 %v2176, %v2310
        %v2442 = vmax.f32 %v2177, %v2351
        %v2443 = vmax.f32 %v2178, %v2314
        %v2444 = vmax.f32 %v2179, %v2352
        %v2445 = vmax.f32 %v2180, %v2318
        %v2446 = vmax.f32 %v2181, %v2353
        %v2447 = vmax.f32 %v2182, %v2322
        %v2448 = vmax.f32 %v2183, %v2354
        %v2449 = vmax.f32 %v2184, %v2326
        %v2450 = vmax.f32 %v2185, %v2355
        %v2451 = vmax.f32 %v2186, %v2330
        %v2452 = vld [vmem:[%s3] sm:$0xff]
        %v2453 = vld [vmem:[%s3 + $0x8] sm:$0xff]
        %v2454 = vld [vmem:[%s3 + $0x10] sm:$0xff]
        %v2455 = vld [vmem:[%s3 + $0x18] sm:$0xff]
        %v2456 = vld [vmem:[%s3 + $0x20] sm:$0xff]
        %v2457 = vld [vmem:[%s3 + $0x28] sm:$0xff]
        %v2458 = vld [vmem:[%s3 + $0x30] sm:$0xff]
        %v2459 = vld [vmem:[%s3 + $0x38] sm:$0xff]
        %v2460 = vld [vmem:[%s3 + $0x40] sm:$0xff]
        %v2461 = vld [vmem:[%s3 + $0x48] sm:$0xff]
        %v2462 = vld [vmem:[%s3 + $0x50] sm:$0xff]
        %v2463 = vld [vmem:[%s3 + $0x58] sm:$0xff]
        %v2464 = vld [vmem:[%s3 + $0x60] sm:$0xff]
        %v2465 = vld [vmem:[%s3 + $0x68] sm:$0xff]
        %v2466 = vld [vmem:[%s3 + $0x70] sm:$0xff]
        %v2467 = vld [vmem:[%s3 + $0x78] sm:$0xff]
        %v2468 = vld [vmem:[%s3 + $0x80] sm:$0xff]
        %v2469 = vld [vmem:[%s3 + $0x88] sm:$0x7f]
        %vm2470 = vcmask 121856
        %v2472 = vsel %vm2470, %v2405, 0
        %v2475 = vsel %vm2470, %v2407, 0
        %v2478 = vsel %vm2470, %v2409, 0
        %v2481 = vsel %vm2470, %v2411, 0
        %v2484 = vsel %vm2470, %v2413, 0
        %v2487 = vsel %vm2470, %v2415, 0
        %v2490 = vsel %vm2470, %v2417, 0
        %v2493 = vsel %vm2470, %v2419, 0
        %v2496 = vsel %vm2470, %v2421, 0
        %v2499 = vsel %vm2470, %v2423, 0
        %v2502 = vsel %vm2470, %v2425, 0
        %v2505 = vsel %vm2470, %v2427, 0
        %v2508 = vsel %vm2470, %v2429, 0
        %v2511 = vsel %vm2470, %v2431, 0
        %v2514 = vsel %vm2470, %v2433, 0
        %v2517 = vsel %vm2470, %v2435, 0
        %v2520 = vsel %vm2470, %v2437, 0
        %v2523 = vsel %vm2470, %v2439, 0
        %v2526 = vsel %vm2470, %v2441, 0
        %v2529 = vsel %vm2470, %v2443, 0
        %v2532 = vsel %vm2470, %v2445, 0
        %v2535 = vsel %vm2470, %v2447, 0
        %v2538 = vsel %vm2470, %v2449, 0
        %v2541 = vsel %vm2470, %v2451, 0
        %v2544 = vsel %vm516, %v2469, 0
        %2546 = vmatpush.msra.mxu0 %v2467
        %2547 = vmatpush.msra.mxu0 %v2466
        %2548 = vmatpush.msra.mxu0 %v2465
        %2549 = vmatpush.msra.mxu0 %v2464
        %2550 = vmatpush.msra.mxu0 %v2463
        %2551 = vmatpush.msra.mxu0 %v2462
        %2552 = vmatpush.msra.mxu0 %v2461
        %2553 = vmatpush.msra.mxu0 %v2460
        %2554 = vmatpush.msra.mxu0 %v2459
        %2555 = vmatpush.msra.mxu0 %v2458
        %2556 = vmatpush.msra.mxu0 %v2457
        %2557 = vmatpush.msra.mxu0 %v2456
        %2558 = vmatpush.msra.mxu0 %v2455
        %2559 = vmatpush.msra.mxu0 %v2454
        %2560 = vmatpush.msra.mxu0 %v2453
        %2561 = vmatpush.msra.mxu0 %v2452
        %2562 = vmatmul.f32.gmra.mxu0 %v2404
        %v2563 = vpop.f32.mrf.mxu0
        %v2564 = vadd.f32 0.0, %v2563
        %2565 = vmatmul.f32.gmra.mxu0 %v2406
        %v2566 = vpop.f32.mrf.mxu0
        %v2567 = vadd.f32 0.0, %v2566
        %2568 = vmatmul.f32.gmra.mxu0 %v2408
        %v2569 = vpop.f32.mrf.mxu0
        %v2570 = vadd.f32 0.0, %v2569
        %2571 = vmatmul.f32.gmra.mxu0 %v2410
        %v2572 = vpop.f32.mrf.mxu0
        %v2573 = vadd.f32 0.0, %v2572
        %2574 = vmatmul.f32.gmra.mxu0 %v2412
        %v2575 = vpop.f32.mrf.mxu0
        %v2576 = vadd.f32 0.0, %v2575
        %2577 = vmatmul.f32.gmra.mxu0 %v2414
        %v2578 = vpop.f32.mrf.mxu0
        %v2579 = vadd.f32 0.0, %v2578
        %2580 = vmatmul.f32.gmra.mxu0 %v2416
        %v2581 = vpop.f32.mrf.mxu0
        %v2582 = vadd.f32 0.0, %v2581
        %2583 = vmatmul.f32.gmra.mxu0 %v2418
        %v2584 = vpop.f32.mrf.mxu0
        %v2585 = vadd.f32 0.0, %v2584
        %2586 = vmatmul.f32.gmra.mxu0 %v2420
        %v2587 = vpop.f32.mrf.mxu0
        %v2588 = vadd.f32 0.0, %v2587
        %2589 = vmatmul.f32.gmra.mxu0 %v2422
        %v2590 = vpop.f32.mrf.mxu0
        %v2591 = vadd.f32 0.0, %v2590
        %2592 = vmatmul.f32.gmra.mxu0 %v2424
        %v2593 = vpop.f32.mrf.mxu0
        %v2594 = vadd.f32 0.0, %v2593
        %2595 = vmatmul.f32.gmra.mxu0 %v2426
        %v2596 = vpop.f32.mrf.mxu0
        %v2597 = vadd.f32 0.0, %v2596
        %2598 = vmatmul.f32.gmra.mxu0 %v2428
        %v2599 = vpop.f32.mrf.mxu0
        %v2600 = vadd.f32 0.0, %v2599
        %2601 = vmatmul.f32.gmra.mxu0 %v2430
        %v2602 = vpop.f32.mrf.mxu0
        %v2603 = vadd.f32 0.0, %v2602
        %2604 = vmatmul.f32.gmra.mxu0 %v2432
        %v2605 = vpop.f32.mrf.mxu0
        %v2606 = vadd.f32 0.0, %v2605
        %2607 = vmatmul.f32.gmra.mxu0 %v2434
        %v2608 = vpop.f32.mrf.mxu0
        %v2609 = vadd.f32 0.0, %v2608
        %2610 = vmatmul.f32.gmra.mxu0 %v2436
        %v2611 = vpop.f32.mrf.mxu0
        %v2612 = vadd.f32 0.0, %v2611
        %2613 = vmatmul.f32.gmra.mxu0 %v2438
        %v2614 = vpop.f32.mrf.mxu0
        %v2615 = vadd.f32 0.0, %v2614
        %2616 = vmatmul.f32.gmra.mxu0 %v2440
        %v2617 = vpop.f32.mrf.mxu0
        %v2618 = vadd.f32 0.0, %v2617
        %2619 = vmatmul.f32.gmra.mxu0 %v2442
        %v2620 = vpop.f32.mrf.mxu0
        %v2621 = vadd.f32 0.0, %v2620
        %2622 = vmatmul.f32.gmra.mxu0 %v2444
        %v2623 = vpop.f32.mrf.mxu0
        %v2624 = vadd.f32 0.0, %v2623
        %2625 = vmatmul.f32.gmra.mxu0 %v2446
        %v2626 = vpop.f32.mrf.mxu0
        %v2627 = vadd.f32 0.0, %v2626
        %2628 = vmatmul.f32.gmra.mxu0 %v2448
        %v2629 = vpop.f32.mrf.mxu0
        %v2630 = vadd.f32 0.0, %v2629
        %2631 = vmatmul.f32.gmra.mxu0 %v2450
        %v2632 = vpop.f32.mrf.mxu0
        %v2633 = vadd.f32 0.0, %v2632
        %2634 = vdwg.mxu0
        %2635 = vmatpush.msra.mxu0 0.0
        %2636 = vmatpush.msra.mxu0 0.0
        %2637 = vmatpush.msra.mxu0 0.0
        %2638 = vmatpush.msra.mxu0 0.0
        %2639 = vmatpush.msra.mxu0 0.0
        %2640 = vmatpush.msra.mxu0 0.0
        %2641 = vmatpush.msra.mxu0 0.0
        %2642 = vmatpush.msra.mxu0 0.0
        %2643 = vmatpush.msra.mxu0 0.0
        %2644 = vmatpush.msra.mxu0 0.0
        %2645 = vmatpush.msra.mxu0 0.0
        %2646 = vmatpush.msra.mxu0 0.0
        %2647 = vmatpush.msra.mxu0 0.0
        %2648 = vmatpush.msra.mxu0 0.0
        %2649 = vmatpush.msra.mxu0 %v2544
        %2650 = vmatpush.msra.mxu0 %v2468
        %2651 = vmatmul.f32.gmra.mxu0 %v2472
        %v2652 = vpop.f32.mrf.mxu0
        %v2653 = vadd.f32 %v2564, %v2652
        %2654 = vmatmul.f32.gmra.mxu0 %v2475
        %v2655 = vpop.f32.mrf.mxu0
        %v2656 = vadd.f32 %v2567, %v2655
        %2657 = vmatmul.f32.gmra.mxu0 %v2478
        %v2658 = vpop.f32.mrf.mxu0
        %v2659 = vadd.f32 %v2570, %v2658
        %2660 = vmatmul.f32.gmra.mxu0 %v2481
        %v2661 = vpop.f32.mrf.mxu0
        %v2662 = vadd.f32 %v2573, %v2661
        %2663 = vmatmul.f32.gmra.mxu0 %v2484
        %v2664 = vpop.f32.mrf.mxu0
        %v2665 = vadd.f32 %v2576, %v2664
        %2666 = vmatmul.f32.gmra.mxu0 %v2487
        %v2667 = vpop.f32.mrf.mxu0
        %v2668 = vadd.f32 %v2579, %v2667
        %2669 = vmatmul.f32.gmra.mxu0 %v2490
        %v2670 = vpop.f32.mrf.mxu0
        %v2671 = vadd.f32 %v2582, %v2670
        %2672 = vmatmul.f32.gmra.mxu0 %v2493
        %v2673 = vpop.f32.mrf.mxu0
        %v2674 = vadd.f32 %v2585, %v2673
        %2675 = vmatmul.f32.gmra.mxu0 %v2496
        %v2676 = vpop.f32.mrf.mxu0
        %v2677 = vadd.f32 %v2588, %v2676
        %2678 = vmatmul.f32.gmra.mxu0 %v2499
        %v2679 = vpop.f32.mrf.mxu0
        %v2680 = vadd.f32 %v2591, %v2679
        %2681 = vmatmul.f32.gmra.mxu0 %v2502
        %v2682 = vpop.f32.mrf.mxu0
        %v2683 = vadd.f32 %v2594, %v2682
        %2684 = vmatmul.f32.gmra.mxu0 %v2505
        %v2685 = vpop.f32.mrf.mxu0
        %v2686 = vadd.f32 %v2597, %v2685
        %2687 = vmatmul.f32.gmra.mxu0 %v2508
        %v2688 = vpop.f32.mrf.mxu0
        %v2689 = vadd.f32 %v2600, %v2688
        %2690 = vmatmul.f32.gmra.mxu0 %v2511
        %v2691 = vpop.f32.mrf.mxu0
        %v2692 = vadd.f32 %v2603, %v2691
        %2693 = vmatmul.f32.gmra.mxu0 %v2514
        %v2694 = vpop.f32.mrf.mxu0
        %v2695 = vadd.f32 %v2606, %v2694
        %2696 = vmatmul.f32.gmra.mxu0 %v2517
        %v2697 = vpop.f32.mrf.mxu0
        %v2698 = vadd.f32 %v2609, %v2697
        %2699 = vmatmul.f32.gmra.mxu0 %v2520
        %v2700 = vpop.f32.mrf.mxu0
        %v2701 = vadd.f32 %v2612, %v2700
        %2702 = vmatmul.f32.gmra.mxu0 %v2523
        %v2703 = vpop.f32.mrf.mxu0
        %v2704 = vadd.f32 %v2615, %v2703
        %2705 = vmatmul.f32.gmra.mxu0 %v2526
        %v2706 = vpop.f32.mrf.mxu0
        %v2707 = vadd.f32 %v2618, %v2706
        %2708 = vmatmul.f32.gmra.mxu0 %v2529
        %v2709 = vpop.f32.mrf.mxu0
        %v2710 = vadd.f32 %v2621, %v2709
        %2711 = vmatmul.f32.gmra.mxu0 %v2532
        %v2712 = vpop.f32.mrf.mxu0
        %v2713 = vadd.f32 %v2624, %v2712
        %2714 = vmatmul.f32.gmra.mxu0 %v2535
        %v2715 = vpop.f32.mrf.mxu0
        %v2716 = vadd.f32 %v2627, %v2715
        %2717 = vmatmul.f32.gmra.mxu0 %v2538
        %v2718 = vpop.f32.mrf.mxu0
        %v2719 = vadd.f32 %v2630, %v2718
        %2720 = vmatmul.f32.gmra.mxu0 %v2541
        %v2721 = vpop.f32.mrf.mxu0
        %v2722 = vadd.f32 %v2633, %v2721
        %2723 = vdwg.mxu0
        %v2732 = vrot.slane %v2653, 1
        %v2733 = vrot.slane %v2662, 1
        %v2734 = vrot.slane %v2671, 1
        %v2735 = vrot.slane %v2680, 1
        %v2736 = vrot.slane %v2689, 1
        %v2737 = vrot.slane %v2698, 1
        %v2738 = vrot.slane %v2707, 1
        %v2739 = vrot.slane %v2716, 1
        %v2748 = vmax.f32 %v2653, %v2732
        %v2749 = vmax.f32 %v2662, %v2733
        %v2750 = vmax.f32 %v2671, %v2734
        %v2751 = vmax.f32 %v2680, %v2735
        %v2752 = vmax.f32 %v2689, %v2736
        %v2753 = vmax.f32 %v2698, %v2737
        %v2754 = vmax.f32 %v2707, %v2738
        %v2755 = vmax.f32 %v2716, %v2739
        %v2764 = vrot.slane %v2656, 1
        %v2765 = vrot.slane %v2665, 1
        %v2766 = vrot.slane %v2674, 1
        %v2767 = vrot.slane %v2683, 1
        %v2768 = vrot.slane %v2692, 1
        %v2769 = vrot.slane %v2701, 1
        %v2770 = vrot.slane %v2710, 1
        %v2771 = vrot.slane %v2719, 1
        %v2780 = vmax.f32 %v2656, %v2764
        %v2781 = vmax.f32 %v2665, %v2765
        %v2782 = vmax.f32 %v2674, %v2766
        %v2783 = vmax.f32 %v2683, %v2767
        %v2784 = vmax.f32 %v2692, %v2768
        %v2785 = vmax.f32 %v2701, %v2769
        %v2786 = vmax.f32 %v2710, %v2770
        %v2787 = vmax.f32 %v2719, %v2771
        %v2796 = vrot.slane %v2659, 1
        %v2797 = vrot.slane %v2668, 1
        %v2798 = vrot.slane %v2677, 1
        %v2799 = vrot.slane %v2686, 1
        %v2800 = vrot.slane %v2695, 1
        %v2801 = vrot.slane %v2704, 1
        %v2802 = vrot.slane %v2713, 1
        %v2803 = vrot.slane %v2722, 1
        %v2812 = vmax.f32 %v2659, %v2796
        %v2813 = vmax.f32 %v2668, %v2797
        %v2814 = vmax.f32 %v2677, %v2798
        %v2815 = vmax.f32 %v2686, %v2799
        %v2816 = vmax.f32 %v2695, %v2800
        %v2817 = vmax.f32 %v2704, %v2801
        %v2818 = vmax.f32 %v2713, %v2802
        %v2819 = vmax.f32 %v2722, %v2803
        %v2828 = vrot.slane %v2748, 1
        %v2829 = vrot.slane %v2749, 1
        %v2830 = vrot.slane %v2750, 1
        %v2831 = vrot.slane %v2751, 1
        %v2832 = vrot.slane %v2752, 1
        %v2833 = vrot.slane %v2753, 1
        %v2834 = vrot.slane %v2754, 1
        %v2835 = vrot.slane %v2755, 1
        %v2844 = vrot.slane %v2748, 2
        %v2845 = vrot.slane %v2749, 2
        %v2846 = vrot.slane %v2750, 2
        %v2847 = vrot.slane %v2751, 2
        %v2848 = vrot.slane %v2752, 2
        %v2849 = vrot.slane %v2753, 2
        %v2850 = vrot.slane %v2754, 2
        %v2851 = vrot.slane %v2755, 2
        %v2860 = vrot.slane %v2748, 3
        %v2861 = vrot.slane %v2749, 3
        %v2862 = vrot.slane %v2750, 3
        %v2863 = vrot.slane %v2751, 3
        %v2864 = vrot.slane %v2752, 3
        %v2865 = vrot.slane %v2753, 3
        %v2866 = vrot.slane %v2754, 3
        %v2867 = vrot.slane %v2755, 3
        %v2884 = vrot.slane %v2780, 4
        %v2885 = vrot.slane %v2781, 4
        %v2886 = vrot.slane %v2782, 4
        %v2887 = vrot.slane %v2783, 4
        %v2888 = vrot.slane %v2784, 4
        %v2889 = vrot.slane %v2785, 4
        %v2890 = vrot.slane %v2786, 4
        %v2891 = vrot.slane %v2787, 4
        %v2900 = vrot.slane %v2780, 5
        %v2901 = vrot.slane %v2781, 5
        %v2902 = vrot.slane %v2782, 5
        %v2903 = vrot.slane %v2783, 5
        %v2904 = vrot.slane %v2784, 5
        %v2905 = vrot.slane %v2785, 5
        %v2906 = vrot.slane %v2786, 5
        %v2907 = vrot.slane %v2787, 5
        %v2916 = vrot.slane %v2780, 6
        %v2917 = vrot.slane %v2781, 6
        %v2918 = vrot.slane %v2782, 6
        %v2919 = vrot.slane %v2783, 6
        %v2920 = vrot.slane %v2784, 6
        %v2921 = vrot.slane %v2785, 6
        %v2922 = vrot.slane %v2786, 6
        %v2923 = vrot.slane %v2787, 6
        %v2932 = vrot.slane %v2780, 7
        %v2933 = vrot.slane %v2781, 7
        %v2934 = vrot.slane %v2782, 7
        %v2935 = vrot.slane %v2783, 7
        %v2936 = vrot.slane %v2784, 7
        %v2937 = vrot.slane %v2785, 7
        %v2938 = vrot.slane %v2786, 7
        %v2939 = vrot.slane %v2787, 7
        %v2956 = vrot.slane %v2812, 1
        %v2957 = vrot.slane %v2813, 1
        %v2958 = vrot.slane %v2814, 1
        %v2959 = vrot.slane %v2815, 1
        %v2960 = vrot.slane %v2816, 1
        %v2961 = vrot.slane %v2817, 1
        %v2962 = vrot.slane %v2818, 1
        %v2963 = vrot.slane %v2819, 1
        %v2972 = vrot.slane %v2812, 2
        %v2973 = vrot.slane %v2813, 2
        %v2974 = vrot.slane %v2814, 2
        %v2975 = vrot.slane %v2815, 2
        %v2976 = vrot.slane %v2816, 2
        %v2977 = vrot.slane %v2817, 2
        %v2978 = vrot.slane %v2818, 2
        %v2979 = vrot.slane %v2819, 2
        %v2988 = vrot.slane %v2812, 3
        %v2989 = vrot.slane %v2813, 3
        %v2990 = vrot.slane %v2814, 3
        %v2991 = vrot.slane %v2815, 3
        %v2992 = vrot.slane %v2816, 3
        %v2993 = vrot.slane %v2817, 3
        %v2994 = vrot.slane %v2818, 3
        %v2995 = vrot.slane %v2819, 3
        %vm3004 = vcmask 1040384
        %v3005 = vsel %vm3004, %v2748, %v2828
        %v3006 = vsel %vm3004, %v2749, %v2829
        %v3007 = vsel %vm3004, %v2750, %v2830
        %v3008 = vsel %vm3004, %v2751, %v2831
        %v3009 = vsel %vm3004, %v2752, %v2832
        %v3010 = vsel %vm3004, %v2753, %v2833
        %v3011 = vsel %vm3004, %v2754, %v2834
        %v3012 = vsel %vm3004, %v2755, %v2835
        %vm3013 = vcmask 1041408
        %v3014 = vsel %vm3013, %v3005, %v2844
        %v3015 = vsel %vm3013, %v3006, %v2845
        %v3016 = vsel %vm3013, %v3007, %v2846
        %v3017 = vsel %vm3013, %v3008, %v2847
        %v3018 = vsel %vm3013, %v3009, %v2848
        %v3019 = vsel %vm3013, %v3010, %v2849
        %v3020 = vsel %vm3013, %v3011, %v2850
        %v3021 = vsel %vm3013, %v3012, %v2851
        %vm3022 = vcmask 1042432
        %v3023 = vsel %vm3022, %v3014, %v2860
        %v3024 = vsel %vm3022, %v3015, %v2861
        %v3025 = vsel %vm3022, %v3016, %v2862
        %v3026 = vsel %vm3022, %v3017, %v2863
        %v3027 = vsel %vm3022, %v3018, %v2864
        %v3028 = vsel %vm3022, %v3019, %v2865
        %v3029 = vsel %vm3022, %v3020, %v2866
        %v3030 = vsel %vm3022, %v3021, %v2867
        %v3031 = vsel %vm631, %v3023, %v2884
        %v3032 = vsel %vm631, %v3024, %v2885
        %v3033 = vsel %vm631, %v3025, %v2886
        %v3034 = vsel %vm631, %v3026, %v2887
        %v3035 = vsel %vm631, %v3027, %v2888
        %v3036 = vsel %vm631, %v3028, %v2889
        %v3037 = vsel %vm631, %v3029, %v2890
        %v3038 = vsel %vm631, %v3030, %v2891
        %v3039 = vsel %vm1394, %v3031, %v2900
        %v3040 = vsel %vm1394, %v3032, %v2901
        %v3041 = vsel %vm1394, %v3033, %v2902
        %v3042 = vsel %vm1394, %v3034, %v2903
        %v3043 = vsel %vm1394, %v3035, %v2904
        %v3044 = vsel %vm1394, %v3036, %v2905
        %v3045 = vsel %vm1394, %v3037, %v2906
        %v3046 = vsel %vm1394, %v3038, %v2907
        %v3047 = vsel %vm1048, %v3039, %v2916
        %v3048 = vsel %vm1048, %v3040, %v2917
        %v3049 = vsel %vm1048, %v3041, %v2918
        %v3050 = vsel %vm1048, %v3042, %v2919
        %v3051 = vsel %vm1048, %v3043, %v2920
        %v3052 = vsel %vm1048, %v3044, %v2921
        %v3053 = vsel %vm1048, %v3045, %v2922
        %v3054 = vsel %vm1048, %v3046, %v2923
        %v3055 = vsel %vm516, %v3047, %v2932
        %v3056 = vsel %vm516, %v3048, %v2933
        %v3057 = vsel %vm516, %v3049, %v2934
        %v3058 = vsel %vm516, %v3050, %v2935
        %v3059 = vsel %vm516, %v3051, %v2936
        %v3060 = vsel %vm516, %v3052, %v2937
        %v3061 = vsel %vm516, %v3053, %v2938
        %v3062 = vsel %vm516, %v3054, %v2939
        %v3063 = vsel %vm3004, %v2812, %v2956
        %v3064 = vsel %vm3004, %v2813, %v2957
        %v3065 = vsel %vm3004, %v2814, %v2958
        %v3066 = vsel %vm3004, %v2815, %v2959
        %v3067 = vsel %vm3004, %v2816, %v2960
        %v3068 = vsel %vm3004, %v2817, %v2961
        %v3069 = vsel %vm3004, %v2818, %v2962
        %v3070 = vsel %vm3004, %v2819, %v2963
        %v3071 = vsel %vm3013, %v3063, %v2972
        %v3072 = vsel %vm3013, %v3064, %v2973
        %v3073 = vsel %vm3013, %v3065, %v2974
        %v3074 = vsel %vm3013, %v3066, %v2975
        %v3075 = vsel %vm3013, %v3067, %v2976
        %v3076 = vsel %vm3013, %v3068, %v2977
        %v3077 = vsel %vm3013, %v3069, %v2978
        %v3078 = vsel %vm3013, %v3070, %v2979
        %v3079 = vsel %vm3022, %v3071, %v2988
        %v3080 = vsel %vm3022, %v3072, %v2989
        %v3081 = vsel %vm3022, %v3073, %v2990
        %v3082 = vsel %vm3022, %v3074, %v2991
        %v3083 = vsel %vm3022, %v3075, %v2992
        %v3084 = vsel %vm3022, %v3076, %v2993
        %v3085 = vsel %vm3022, %v3077, %v2994
        %v3086 = vsel %vm3022, %v3078, %v2995
        %v3087 = vld [vmem:[%s4] sm:$0xff]
        %v3088 = vld [vmem:[%s4 + $0x8] sm:$0xff]
        %v3089 = vld [vmem:[%s4 + $0x10] sm:$0xff]
        %v3090 = vld [vmem:[%s4 + $0x18] sm:$0xff]
        %v3091 = vld [vmem:[%s4 + $0x20] sm:$0xff]
        %v3092 = vld [vmem:[%s4 + $0x28] sm:$0xff]
        %v3093 = vld [vmem:[%s4 + $0x30] sm:$0xff]
        %v3094 = vld [vmem:[%s4 + $0x38] sm:$0xff]
        %v3095 = vld [vmem:[%s4 + $0x40] sm:$0xff]
        %v3112 = vrot.slane %v3055, 1
        %v3113 = vrot.slane %v3079, 1
        %v3114 = vsel %vm516, %v3112, %v3113
        %v3115 = vrot.slane %v3056, 1
        %v3116 = vrot.slane %v3080, 1
        %v3117 = vsel %vm516, %v3115, %v3116
        %v3118 = vrot.slane %v3057, 1
        %v3119 = vrot.slane %v3081, 1
        %v3120 = vsel %vm516, %v3118, %v3119
        %v3121 = vrot.slane %v3058, 1
        %v3122 = vrot.slane %v3082, 1
        %v3123 = vsel %vm516, %v3121, %v3122
        %v3124 = vrot.slane %v3059, 1
        %v3125 = vrot.slane %v3083, 1
        %v3126 = vsel %vm516, %v3124, %v3125
        %v3127 = vrot.slane %v3060, 1
        %v3128 = vrot.slane %v3084, 1
        %v3129 = vsel %vm516, %v3127, %v3128
        %v3130 = vrot.slane %v3061, 1
        %v3131 = vrot.slane %v3085, 1
        %v3132 = vsel %vm516, %v3130, %v3131
        %v3133 = vrot.slane %v3062, 1
        %v3134 = vrot.slane %v3086, 1
        %v3135 = vsel %vm516, %v3133, %v3134
        %s3136 = scalar_lea.vmem %s4, 72
        %v3137 = vld [vmem:[%s3136] sm:$0xff]
        %v3138 = vld [vmem:[%s3136 + $0x8] sm:$0xff]
        %v3139 = vld [vmem:[%s3136 + $0x10] sm:$0xff]
        %v3140 = vld [vmem:[%s3136 + $0x18] sm:$0xff]
        %v3141 = vld [vmem:[%s3136 + $0x20] sm:$0xff]
        %v3142 = vld [vmem:[%s3136 + $0x28] sm:$0xff]
        %v3143 = vld [vmem:[%s3136 + $0x30] sm:$0xff]
        %v3144 = vld [vmem:[%s3136 + $0x38] sm:$0xff]
        %v3145 = vld [vmem:[%s3136 + $0x40] sm:$0xff]
        %vm3146 = vcmask 588800
        %v3147 = vsel %vm3146, %v3114, 0
        %v3149 = vsel %vm3146, %v3117, 0
        %v3151 = vsel %vm3146, %v3120, 0
        %v3153 = vsel %vm3146, %v3123, 0
        %v3155 = vsel %vm3146, %v3126, 0
        %v3157 = vsel %vm3146, %v3129, 0
        %v3159 = vsel %vm3146, %v3132, 0
        %v3161 = vsel %vm3146, %v3135, 0
        %3163 = vmatpush.msra.mxu0 0.0
        %3164 = vmatpush.msra.mxu0 0.0
        %3165 = vmatpush.msra.mxu0 0.0
        %3166 = vmatpush.msra.mxu0 0.0
        %3167 = vmatpush.msra.mxu0 0.0
        %3168 = vmatpush.msra.mxu0 0.0
        %3169 = vmatpush.msra.mxu0 0.0
        %3170 = vmatpush.msra.mxu0 %v3145
        %3171 = vmatpush.msra.mxu0 %v3144
        %3172 = vmatpush.msra.mxu0 %v3143
        %3173 = vmatpush.msra.mxu0 %v3142
        %3174 = vmatpush.msra.mxu0 %v3141
        %3175 = vmatpush.msra.mxu0 %v3140
        %3176 = vmatpush.msra.mxu0 %v3139
        %3177 = vmatpush.msra.mxu0 %v3138
        %3178 = vmatpush.msra.mxu0 %v3137
        %3179 = vmatmul.f32.gmra.mxu0 %v3147
        %v3180 = vpop.f32.mrf.mxu0
        %v3181 = vadd.f32 0.0, %v3180
        %3182 = vmatmul.f32.gmra.mxu0 %v3149
        %v3183 = vpop.f32.mrf.mxu0
        %v3184 = vadd.f32 0.0, %v3183
        %3185 = vmatmul.f32.gmra.mxu0 %v3151
        %v3186 = vpop.f32.mrf.mxu0
        %v3187 = vadd.f32 0.0, %v3186
        %3188 = vmatmul.f32.gmra.mxu0 %v3153
        %v3189 = vpop.f32.mrf.mxu0
        %v3190 = vadd.f32 0.0, %v3189
        %3191 = vmatmul.f32.gmra.mxu0 %v3155
        %v3192 = vpop.f32.mrf.mxu0
        %v3193 = vadd.f32 0.0, %v3192
        %3194 = vmatmul.f32.gmra.mxu0 %v3157
        %v3195 = vpop.f32.mrf.mxu0
        %v3196 = vadd.f32 0.0, %v3195
        %3197 = vmatmul.f32.gmra.mxu0 %v3159
        %v3198 = vpop.f32.mrf.mxu0
        %v3199 = vadd.f32 0.0, %v3198
        %3200 = vmatmul.f32.gmra.mxu0 %v3161
        %v3201 = vpop.f32.mrf.mxu0
        %v3202 = vadd.f32 0.0, %v3201
        %3203 = vdwg.mxu0
        %v3204 = vsel %vm3146, %v3055, 0
        %v3206 = vsel %vm3146, %v3056, 0
        %v3208 = vsel %vm3146, %v3057, 0
        %v3210 = vsel %vm3146, %v3058, 0
        %v3212 = vsel %vm3146, %v3059, 0
        %v3214 = vsel %vm3146, %v3060, 0
        %v3216 = vsel %vm3146, %v3061, 0
        %v3218 = vsel %vm3146, %v3062, 0
        %3220 = vmatpush.msra.mxu0 0.0
        %3221 = vmatpush.msra.mxu0 0.0
        %3222 = vmatpush.msra.mxu0 0.0
        %3223 = vmatpush.msra.mxu0 0.0
        %3224 = vmatpush.msra.mxu0 0.0
        %3225 = vmatpush.msra.mxu0 0.0
        %3226 = vmatpush.msra.mxu0 0.0
        %3227 = vmatpush.msra.mxu0 %v3095
        %3228 = vmatpush.msra.mxu0 %v3094
        %3229 = vmatpush.msra.mxu0 %v3093
        %3230 = vmatpush.msra.mxu0 %v3092
        %3231 = vmatpush.msra.mxu0 %v3091
        %3232 = vmatpush.msra.mxu0 %v3090
        %3233 = vmatpush.msra.mxu0 %v3089
        %3234 = vmatpush.msra.mxu0 %v3088
        %3235 = vmatpush.msra.mxu0 %v3087
        %3236 = vmatmul.f32.gmra.mxu0 %v3204
        %v3237 = vpop.f32.mrf.mxu0
        %v3238 = vadd.f32 %v3181, %v3237
        %3239 = vmatmul.f32.gmra.mxu0 %v3206
        %v3240 = vpop.f32.mrf.mxu0
        %v3241 = vadd.f32 %v3184, %v3240
        %3242 = vmatmul.f32.gmra.mxu0 %v3208
        %v3243 = vpop.f32.mrf.mxu0
        %v3244 = vadd.f32 %v3187, %v3243
        %3245 = vmatmul.f32.gmra.mxu0 %v3210
        %v3246 = vpop.f32.mrf.mxu0
        %v3247 = vadd.f32 %v3190, %v3246
        %3248 = vmatmul.f32.gmra.mxu0 %v3212
        %v3249 = vpop.f32.mrf.mxu0
        %v3250 = vadd.f32 %v3193, %v3249
        %3251 = vmatmul.f32.gmra.mxu0 %v3214
        %v3252 = vpop.f32.mrf.mxu0
        %v3253 = vadd.f32 %v3196, %v3252
        %3254 = vmatmul.f32.gmra.mxu0 %v3216
        %v3255 = vpop.f32.mrf.mxu0
        %v3256 = vadd.f32 %v3199, %v3255
        %3257 = vmatmul.f32.gmra.mxu0 %v3218
        %v3258 = vpop.f32.mrf.mxu0
        %v3259 = vadd.f32 %v3202, %v3258
        %3260 = vdwg.mxu0
        %v3261 = vrot.slane %v3055, 2
        %v3262 = vrot.slane %v3079, 2
        %v3263 = vsel %vm1048, %v3261, %v3262
        %v3264 = vrot.slane %v3056, 2
        %v3265 = vrot.slane %v3080, 2
        %v3266 = vsel %vm1048, %v3264, %v3265
        %v3267 = vrot.slane %v3057, 2
        %v3268 = vrot.slane %v3081, 2
        %v3269 = vsel %vm1048, %v3267, %v3268
        %v3270 = vrot.slane %v3058, 2
        %v3271 = vrot.slane %v3082, 2
        %v3272 = vsel %vm1048, %v3270, %v3271
        %v3273 = vrot.slane %v3059, 2
        %v3274 = vrot.slane %v3083, 2
        %v3275 = vsel %vm1048, %v3273, %v3274
        %v3276 = vrot.slane %v3060, 2
        %v3277 = vrot.slane %v3084, 2
        %v3278 = vsel %vm1048, %v3276, %v3277
        %v3279 = vrot.slane %v3061, 2
        %v3280 = vrot.slane %v3085, 2
        %v3281 = vsel %vm1048, %v3279, %v3280
        %v3282 = vrot.slane %v3062, 2
        %v3283 = vrot.slane %v3086, 2
        %v3284 = vsel %vm1048, %v3282, %v3283
        %s3285 = scalar_lea.vmem %s4, 144
        %v3286 = vld [vmem:[%s3285] sm:$0xff]
        %v3287 = vld [vmem:[%s3285 + $0x8] sm:$0xff]
        %v3288 = vld [vmem:[%s3285 + $0x10] sm:$0xff]
        %v3289 = vld [vmem:[%s3285 + $0x18] sm:$0xff]
        %v3290 = vld [vmem:[%s3285 + $0x20] sm:$0xff]
        %v3291 = vld [vmem:[%s3285 + $0x28] sm:$0xff]
        %v3292 = vld [vmem:[%s3285 + $0x30] sm:$0xff]
        %v3293 = vld [vmem:[%s3285 + $0x38] sm:$0xff]
        %v3294 = vld [vmem:[%s3285 + $0x40] sm:$0xff]
        %v3295 = vsel %vm3146, %v3263, 0
        %v3297 = vsel %vm3146, %v3266, 0
        %v3299 = vsel %vm3146, %v3269, 0
        %v3301 = vsel %vm3146, %v3272, 0
        %v3303 = vsel %vm3146, %v3275, 0
        %v3305 = vsel %vm3146, %v3278, 0
        %v3307 = vsel %vm3146, %v3281, 0
        %v3309 = vsel %vm3146, %v3284, 0
        %3311 = vmatpush.msra.mxu0 0.0
        %3312 = vmatpush.msra.mxu0 0.0
        %3313 = vmatpush.msra.mxu0 0.0
        %3314 = vmatpush.msra.mxu0 0.0
        %3315 = vmatpush.msra.mxu0 0.0
        %3316 = vmatpush.msra.mxu0 0.0
        %3317 = vmatpush.msra.mxu0 0.0
        %3318 = vmatpush.msra.mxu0 %v3294
        %3319 = vmatpush.msra.mxu0 %v3293
        %3320 = vmatpush.msra.mxu0 %v3292
        %3321 = vmatpush.msra.mxu0 %v3291
        %3322 = vmatpush.msra.mxu0 %v3290
        %3323 = vmatpush.msra.mxu0 %v3289
        %3324 = vmatpush.msra.mxu0 %v3288
        %3325 = vmatpush.msra.mxu0 %v3287
        %3326 = vmatpush.msra.mxu0 %v3286
        %3327 = vmatmul.f32.gmra.mxu0 %v3295
        %v3328 = vpop.f32.mrf.mxu0
        %v3329 = vadd.f32 0.0, %v3328
        %3330 = vmatmul.f32.gmra.mxu0 %v3297
        %v3331 = vpop.f32.mrf.mxu0
        %v3332 = vadd.f32 0.0, %v3331
        %3333 = vmatmul.f32.gmra.mxu0 %v3299
        %v3334 = vpop.f32.mrf.mxu0
        %v3335 = vadd.f32 0.0, %v3334
        %3336 = vmatmul.f32.gmra.mxu0 %v3301
        %v3337 = vpop.f32.mrf.mxu0
        %v3338 = vadd.f32 0.0, %v3337
        %3339 = vmatmul.f32.gmra.mxu0 %v3303
        %v3340 = vpop.f32.mrf.mxu0
        %v3341 = vadd.f32 0.0, %v3340
        %3342 = vmatmul.f32.gmra.mxu0 %v3305
        %v3343 = vpop.f32.mrf.mxu0
        %v3344 = vadd.f32 0.0, %v3343
        %3345 = vmatmul.f32.gmra.mxu0 %v3307
        %v3346 = vpop.f32.mrf.mxu0
        %v3347 = vadd.f32 0.0, %v3346
        %3348 = vmatmul.f32.gmra.mxu0 %v3309
        %v3349 = vpop.f32.mrf.mxu0
        %v3350 = vadd.f32 0.0, %v3349
        %3351 = vdwg.mxu0
        %v3352 = vadd.f32 %v3238, %v3329
        %v3353 = vadd.f32 %v3241, %v3332
        %v3354 = vadd.f32 %v3244, %v3335
        %v3355 = vadd.f32 %v3247, %v3338
        %v3356 = vadd.f32 %v3250, %v3341
        %v3357 = vadd.f32 %v3253, %v3344
        %v3358 = vadd.f32 %v3256, %v3347
        %v3359 = vadd.f32 %v3259, %v3350
        %v3360 = vrot.slane %v3055, 3
        %v3361 = vrot.slane %v3079, 3
        %v3362 = vsel %vm1394, %v3360, %v3361
        %v3363 = vrot.slane %v3056, 3
        %v3364 = vrot.slane %v3080, 3
        %v3365 = vsel %vm1394, %v3363, %v3364
        %v3366 = vrot.slane %v3057, 3
        %v3367 = vrot.slane %v3081, 3
        %v3368 = vsel %vm1394, %v3366, %v3367
        %v3369 = vrot.slane %v3058, 3
        %v3370 = vrot.slane %v3082, 3
        %v3371 = vsel %vm1394, %v3369, %v3370
        %v3372 = vrot.slane %v3059, 3
        %v3373 = vrot.slane %v3083, 3
        %v3374 = vsel %vm1394, %v3372, %v3373
        %v3375 = vrot.slane %v3060, 3
        %v3376 = vrot.slane %v3084, 3
        %v3377 = vsel %vm1394, %v3375, %v3376
        %v3378 = vrot.slane %v3061, 3
        %v3379 = vrot.slane %v3085, 3
        %v3380 = vsel %vm1394, %v3378, %v3379
        %v3381 = vrot.slane %v3062, 3
        %v3382 = vrot.slane %v3086, 3
        %v3383 = vsel %vm1394, %v3381, %v3382
        %s3384 = scalar_lea.vmem %s4, 216
        %v3385 = vld [vmem:[%s3384] sm:$0xff]
        %v3386 = vld [vmem:[%s3384 + $0x8] sm:$0xff]
        %v3387 = vld [vmem:[%s3384 + $0x10] sm:$0xff]
        %v3388 = vld [vmem:[%s3384 + $0x18] sm:$0xff]
        %v3389 = vld [vmem:[%s3384 + $0x20] sm:$0xff]
        %v3390 = vld [vmem:[%s3384 + $0x28] sm:$0xff]
        %v3391 = vld [vmem:[%s3384 + $0x30] sm:$0xff]
        %v3392 = vld [vmem:[%s3384 + $0x38] sm:$0xff]
        %v3393 = vld [vmem:[%s3384 + $0x40] sm:$0xff]
        %v3394 = vsel %vm3146, %v3362, 0
        %v3396 = vsel %vm3146, %v3365, 0
        %v3398 = vsel %vm3146, %v3368, 0
        %v3400 = vsel %vm3146, %v3371, 0
        %v3402 = vsel %vm3146, %v3374, 0
        %v3404 = vsel %vm3146, %v3377, 0
        %v3406 = vsel %vm3146, %v3380, 0
        %v3408 = vsel %vm3146, %v3383, 0
        %3410 = vmatpush.msra.mxu0 0.0
        %3411 = vmatpush.msra.mxu0 0.0
        %3412 = vmatpush.msra.mxu0 0.0
        %3413 = vmatpush.msra.mxu0 0.0
        %3414 = vmatpush.msra.mxu0 0.0
        %3415 = vmatpush.msra.mxu0 0.0
        %3416 = vmatpush.msra.mxu0 0.0
        %3417 = vmatpush.msra.mxu0 %v3393
        %3418 = vmatpush.msra.mxu0 %v3392
        %3419 = vmatpush.msra.mxu0 %v3391
        %3420 = vmatpush.msra.mxu0 %v3390
        %3421 = vmatpush.msra.mxu0 %v3389
        %3422 = vmatpush.msra.mxu0 %v3388
        %3423 = vmatpush.msra.mxu0 %v3387
        %3424 = vmatpush.msra.mxu0 %v3386
        %3425 = vmatpush.msra.mxu0 %v3385
        %3426 = vmatmul.f32.gmra.mxu0 %v3394
        %v3427 = vpop.f32.mrf.mxu0
        %v3428 = vadd.f32 0.0, %v3427
        %3429 = vmatmul.f32.gmra.mxu0 %v3396
        %v3430 = vpop.f32.mrf.mxu0
        %v3431 = vadd.f32 0.0, %v3430
        %3432 = vmatmul.f32.gmra.mxu0 %v3398
        %v3433 = vpop.f32.mrf.mxu0
        %v3434 = vadd.f32 0.0, %v3433
        %3435 = vmatmul.f32.gmra.mxu0 %v3400
        %v3436 = vpop.f32.mrf.mxu0
        %v3437 = vadd.f32 0.0, %v3436
        %3438 = vmatmul.f32.gmra.mxu0 %v3402
        %v3439 = vpop.f32.mrf.mxu0
        %v3440 = vadd.f32 0.0, %v3439
        %3441 = vmatmul.f32.gmra.mxu0 %v3404
        %v3442 = vpop.f32.mrf.mxu0
        %v3443 = vadd.f32 0.0, %v3442
        %3444 = vmatmul.f32.gmra.mxu0 %v3406
        %v3445 = vpop.f32.mrf.mxu0
        %v3446 = vadd.f32 0.0, %v3445
        %3447 = vmatmul.f32.gmra.mxu0 %v3408
        %v3448 = vpop.f32.mrf.mxu0
        %v3449 = vadd.f32 0.0, %v3448
        %3450 = vdwg.mxu0
        %v3451 = vadd.f32 %v3352, %v3428
        %v3452 = vadd.f32 %v3353, %v3431
        %v3453 = vadd.f32 %v3354, %v3434
        %v3454 = vadd.f32 %v3355, %v3437
        %v3455 = vadd.f32 %v3356, %v3440
        %v3456 = vadd.f32 %v3357, %v3443
        %v3457 = vadd.f32 %v3358, %v3446
        %v3458 = vadd.f32 %v3359, %v3449
        %v3459 = vrot.slane %v3055, 4
        %v3460 = vrot.slane %v3079, 4
        %v3461 = vsel %vm631, %v3459, %v3460
        %v3462 = vrot.slane %v3056, 4
        %v3463 = vrot.slane %v3080, 4
        %v3464 = vsel %vm631, %v3462, %v3463
        %v3465 = vrot.slane %v3057, 4
        %v3466 = vrot.slane %v3081, 4
        %v3467 = vsel %vm631, %v3465, %v3466
        %v3468 = vrot.slane %v3058, 4
        %v3469 = vrot.slane %v3082, 4
        %v3470 = vsel %vm631, %v3468, %v3469
        %v3471 = vrot.slane %v3059, 4
        %v3472 = vrot.slane %v3083, 4
        %v3473 = vsel %vm631, %v3471, %v3472
        %v3474 = vrot.slane %v3060, 4
        %v3475 = vrot.slane %v3084, 4
        %v3476 = vsel %vm631, %v3474, %v3475
        %v3477 = vrot.slane %v3061, 4
        %v3478 = vrot.slane %v3085, 4
        %v3479 = vsel %vm631, %v3477, %v3478
        %v3480 = vrot.slane %v3062, 4
        %v3481 = vrot.slane %v3086, 4
        %v3482 = vsel %vm631, %v3480, %v3481
        %s3483 = scalar_lea.vmem %s4, 288
        %v3484 = vld [vmem:[%s3483] sm:$0xff]
        %v3485 = vld [vmem:[%s3483 + $0x8] sm:$0xff]
        %v3486 = vld [vmem:[%s3483 + $0x10] sm:$0xff]
        %v3487 = vld [vmem:[%s3483 + $0x18] sm:$0xff]
        %v3488 = vld [vmem:[%s3483 + $0x20] sm:$0xff]
        %v3489 = vld [vmem:[%s3483 + $0x28] sm:$0xff]
        %v3490 = vld [vmem:[%s3483 + $0x30] sm:$0xff]
        %v3491 = vld [vmem:[%s3483 + $0x38] sm:$0xff]
        %v3492 = vld [vmem:[%s3483 + $0x40] sm:$0xff]
        %v3493 = vsel %vm3146, %v3461, 0
        %v3495 = vsel %vm3146, %v3464, 0
        %v3497 = vsel %vm3146, %v3467, 0
        %v3499 = vsel %vm3146, %v3470, 0
        %v3501 = vsel %vm3146, %v3473, 0
        %v3503 = vsel %vm3146, %v3476, 0
        %v3505 = vsel %vm3146, %v3479, 0
        %v3507 = vsel %vm3146, %v3482, 0
        %3509 = vmatpush.msra.mxu0 0.0
        %3510 = vmatpush.msra.mxu0 0.0
        %3511 = vmatpush.msra.mxu0 0.0
        %3512 = vmatpush.msra.mxu0 0.0
        %3513 = vmatpush.msra.mxu0 0.0
        %3514 = vmatpush.msra.mxu0 0.0
        %3515 = vmatpush.msra.mxu0 0.0
        %3516 = vmatpush.msra.mxu0 %v3492
        %3517 = vmatpush.msra.mxu0 %v3491
        %3518 = vmatpush.msra.mxu0 %v3490
        %3519 = vmatpush.msra.mxu0 %v3489
        %3520 = vmatpush.msra.mxu0 %v3488
        %3521 = vmatpush.msra.mxu0 %v3487
        %3522 = vmatpush.msra.mxu0 %v3486
        %3523 = vmatpush.msra.mxu0 %v3485
        %3524 = vmatpush.msra.mxu0 %v3484
        %3525 = vmatmul.f32.gmra.mxu0 %v3493
        %v3526 = vpop.f32.mrf.mxu0
        %v3527 = vadd.f32 0.0, %v3526
        %3528 = vmatmul.f32.gmra.mxu0 %v3495
        %v3529 = vpop.f32.mrf.mxu0
        %v3530 = vadd.f32 0.0, %v3529
        %3531 = vmatmul.f32.gmra.mxu0 %v3497
        %v3532 = vpop.f32.mrf.mxu0
        %v3533 = vadd.f32 0.0, %v3532
        %3534 = vmatmul.f32.gmra.mxu0 %v3499
        %v3535 = vpop.f32.mrf.mxu0
        %v3536 = vadd.f32 0.0, %v3535
        %3537 = vmatmul.f32.gmra.mxu0 %v3501
        %v3538 = vpop.f32.mrf.mxu0
        %v3539 = vadd.f32 0.0, %v3538
        %3540 = vmatmul.f32.gmra.mxu0 %v3503
        %v3541 = vpop.f32.mrf.mxu0
        %v3542 = vadd.f32 0.0, %v3541
        %3543 = vmatmul.f32.gmra.mxu0 %v3505
        %v3544 = vpop.f32.mrf.mxu0
        %v3545 = vadd.f32 0.0, %v3544
        %3546 = vmatmul.f32.gmra.mxu0 %v3507
        %v3547 = vpop.f32.mrf.mxu0
        %v3548 = vadd.f32 0.0, %v3547
        %3549 = vdwg.mxu0
        %v3550 = vadd.f32 %v3451, %v3527
        %v3551 = vadd.f32 %v3452, %v3530
        %v3552 = vadd.f32 %v3453, %v3533
        %v3553 = vadd.f32 %v3454, %v3536
        %v3554 = vadd.f32 %v3455, %v3539
        %v3555 = vadd.f32 %v3456, %v3542
        %v3556 = vadd.f32 %v3457, %v3545
        %v3557 = vadd.f32 %v3458, %v3548
        %v3558 = vld [vmem:[%s5] sm:$0x1]
        %v3560 = vperm.slane %v3558, 0
        %v3562 = vadd.f32 %v3550, %v3560
        %v3563 = vadd.f32 %v3551, %v3560
        %v3564 = vadd.f32 %v3552, %v3560
        %v3565 = vadd.f32 %v3553, %v3560
        %v3566 = vadd.f32 %v3554, %v3560
        %v3567 = vadd.f32 %v3555, %v3560
        %v3568 = vadd.f32 %v3556, %v3560
        %v3569 = vadd.f32 %v3557, %v3560
        %v3570 = vmax.f32 %v3562, 0.0
        %v3571 = vmax.f32 %v3563, 0.0
        %v3572 = vmax.f32 %v3564, 0.0
        %v3573 = vmax.f32 %v3565, 0.0
        %v3574 = vmax.f32 %v3566, 0.0
        %v3575 = vmax.f32 %v3567, 0.0
        %v3576 = vmax.f32 %v3568, 0.0
        %v3577 = vmax.f32 %v3569, 0.0
        %3586 = vrot.lane.b32.xlu0 %v3570, 127
        %v3587 = vpop.permute.xlu0 %3586
        %3588 = vrot.lane.b32.xlu0 %v3571, 127
        %v3589 = vpop.permute.xlu0 %3588
        %3590 = vrot.lane.b32.xlu0 %v3572, 127
        %v3591 = vpop.permute.xlu0 %3590
        %3592 = vrot.lane.b32.xlu0 %v3573, 127
        %v3593 = vpop.permute.xlu0 %3592
        %3594 = vrot.lane.b32.xlu0 %v3574, 127
        %v3595 = vpop.permute.xlu0 %3594
        %3596 = vrot.lane.b32.xlu0 %v3575, 127
        %v3597 = vpop.permute.xlu0 %3596
        %3598 = vrot.lane.b32.xlu0 %v3576, 127
        %v3599 = vpop.permute.xlu0 %3598
        %3600 = vrot.lane.b32.xlu0 %v3577, 127
        %v3601 = vpop.permute.xlu0 %3600
        %v3610 = vmax.f32 %v3570, %v3587
        %v3611 = vmax.f32 %v3571, %v3589
        %v3612 = vmax.f32 %v3572, %v3591
        %v3613 = vmax.f32 %v3573, %v3593
        %v3614 = vmax.f32 %v3574, %v3595
        %v3615 = vmax.f32 %v3575, %v3597
        %v3616 = vmax.f32 %v3576, %v3599
        %v3617 = vmax.f32 %v3577, %v3601
        %v3618 = vld [vmem:[%s6] sm:$0xff]
        %v3619 = vld [vmem:[%s6 + $0x8] sm:$0xff]
        %v3620 = vld [vmem:[%s6 + $0x10] sm:$0xff]
        %v3621 = vld [vmem:[%s6 + $0x18] sm:$0xff]
        %v3622 = vld [vmem:[%s6 + $0x20] sm:$0xff]
        %v3623 = vld [vmem:[%s6 + $0x28] sm:$0xff]
        %v3624 = vld [vmem:[%s6 + $0x30] sm:$0xff]
        %v3625 = vld [vmem:[%s6 + $0x38] sm:$0xff]
        %v3626 = vld [vmem:[%s6 + $0x40] sm:$0xff]
        %v3627 = vld [vmem:[%s6 + $0x48] sm:$0xff]
        %v3628 = vld [vmem:[%s6 + $0x50] sm:$0xff]
        %v3629 = vld [vmem:[%s6 + $0x58] sm:$0xff]
        %v3630 = vld [vmem:[%s6 + $0x60] sm:$0xff]
        %v3631 = vld [vmem:[%s6 + $0x68] sm:$0xff]
        %v3632 = vld [vmem:[%s6 + $0x70] sm:$0xff]
        %v3633 = vld [vmem:[%s6 + $0x78] sm:$0x7f]
        %v3635 = vsel %vm2331, %v3610, 0
        %v3638 = vsel %vm2331, %v3611, 0
        %v3641 = vsel %vm2331, %v3612, 0
        %v3644 = vsel %vm2331, %v3613, 0
        %v3647 = vsel %vm2331, %v3614, 0
        %v3650 = vsel %vm2331, %v3615, 0
        %v3653 = vsel %vm2331, %v3616, 0
        %v3656 = vsel %vm2331, %v3617, 0
        %v3659 = vsel %vm516, %v3633, 0
        %3661 = vmatpush.msra.mxu0 %v3659
        %3662 = vmatpush.msra.mxu0 %v3632
        %3663 = vmatpush.msra.mxu0 %v3631
        %3664 = vmatpush.msra.mxu0 %v3630
        %3665 = vmatpush.msra.mxu0 %v3629
        %3666 = vmatpush.msra.mxu0 %v3628
        %3667 = vmatpush.msra.mxu0 %v3627
        %3668 = vmatpush.msra.mxu0 %v3626
        %3669 = vmatpush.msra.mxu0 %v3625
        %3670 = vmatpush.msra.mxu0 %v3624
        %3671 = vmatpush.msra.mxu0 %v3623
        %3672 = vmatpush.msra.mxu0 %v3622
        %3673 = vmatpush.msra.mxu0 %v3621
        %3674 = vmatpush.msra.mxu0 %v3620
        %3675 = vmatpush.msra.mxu0 %v3619
        %3676 = vmatpush.msra.mxu0 %v3618
        %3677 = vmatmul.f32.gmra.mxu0 %v3635
        %v3678 = vpop.f32.mrf.mxu0
        %v3679 = vadd.f32 0.0, %v3678
        %3680 = vmatmul.f32.gmra.mxu0 %v3638
        %v3681 = vpop.f32.mrf.mxu0
        %v3682 = vadd.f32 0.0, %v3681
        %3683 = vmatmul.f32.gmra.mxu0 %v3641
        %v3684 = vpop.f32.mrf.mxu0
        %v3685 = vadd.f32 0.0, %v3684
        %3686 = vmatmul.f32.gmra.mxu0 %v3644
        %v3687 = vpop.f32.mrf.mxu0
        %v3688 = vadd.f32 0.0, %v3687
        %3689 = vmatmul.f32.gmra.mxu0 %v3647
        %v3690 = vpop.f32.mrf.mxu0
        %v3691 = vadd.f32 0.0, %v3690
        %3692 = vmatmul.f32.gmra.mxu0 %v3650
        %v3693 = vpop.f32.mrf.mxu0
        %v3694 = vadd.f32 0.0, %v3693
        %3695 = vmatmul.f32.gmra.mxu0 %v3653
        %v3696 = vpop.f32.mrf.mxu0
        %v3697 = vadd.f32 0.0, %v3696
        %3698 = vmatmul.f32.gmra.mxu0 %v3656
        %v3699 = vpop.f32.mrf.mxu0
        %v3700 = vadd.f32 0.0, %v3699
        %3701 = vdwg.mxu0
        %v3710 = vrot.slane %v3679, 1
        %v3711 = vrot.slane %v3682, 1
        %v3712 = vrot.slane %v3685, 1
        %v3713 = vrot.slane %v3688, 1
        %v3714 = vrot.slane %v3691, 1
        %v3715 = vrot.slane %v3694, 1
        %v3716 = vrot.slane %v3697, 1
        %v3717 = vrot.slane %v3700, 1
        %v3726 = vmax.f32 %v3679, %v3710
        %v3727 = vmax.f32 %v3682, %v3711
        %v3728 = vmax.f32 %v3685, %v3712
        %v3729 = vmax.f32 %v3688, %v3713
        %v3730 = vmax.f32 %v3691, %v3714
        %v3731 = vmax.f32 %v3694, %v3715
        %v3732 = vmax.f32 %v3697, %v3716
        %v3733 = vmax.f32 %v3700, %v3717
        %v3734 = vld [vmem:[%s7] sm:$0xff]
        %v3735 = vld [vmem:[%s7 + $0x8] sm:$0xff]
        %v3736 = vld [vmem:[%s7 + $0x10] sm:$0xff]
        %v3737 = vld [vmem:[%s7 + $0x18] sm:$0xff]
        %v3738 = vld [vmem:[%s7 + $0x20] sm:$0xff]
        %v3739 = vld [vmem:[%s7 + $0x28] sm:$0xff]
        %v3740 = vld [vmem:[%s7 + $0x30] sm:$0xff]
        %v3741 = vld [vmem:[%s7 + $0x38] sm:$0xff]
        %v3742 = vld [vmem:[%s7 + $0x40] sm:$0xff]
        %v3743 = vld [vmem:[%s7 + $0x48] sm:$0xff]
        %v3744 = vld [vmem:[%s7 + $0x50] sm:$0xff]
        %v3745 = vld [vmem:[%s7 + $0x58] sm:$0xff]
        %v3746 = vld [vmem:[%s7 + $0x60] sm:$0xff]
        %v3747 = vld [vmem:[%s7 + $0x68] sm:$0xff]
        %v3748 = vld [vmem:[%s7 + $0x70] sm:$0xff]
        %v3749 = vld [vmem:[%s7 + $0x78] sm:$0xff]
        %v3758 = vrot.slane %v3726, 2
        %v3759 = vrot.slane %v3727, 1
        %vm3760 = vcmask 1041409
        %v3761 = vsel %vm3760, %v3759, %v3758
        %vm3762 = vcmask 1042434
        %v3763 = vsel %vm3762, %v3728, %v3761
        %v3764 = vrot.slane %v3729, 7
        %vm3765 = vcmask 1043459
        %v3766 = vsel %vm3765, %v3764, %v3763
        %v3767 = vrot.slane %v3730, 6
        %vm3768 = vcmask 1044484
        %v3769 = vsel %vm3768, %v3767, %v3766
        %v3770 = vrot.slane %v3731, 5
        %vm3771 = vcmask 1045509
        %v3772 = vsel %vm3771, %v3770, %v3769
        %v3773 = vrot.slane %v3732, 4
        %vm3774 = vcmask 1046534
        %v3775 = vsel %vm3774, %v3773, %v3772
        %v3776 = vrot.slane %v3733, 3
        %vm3777 = vcmask 1047559
        %v3778 = vsel %vm3777, %v3776, %v3775
        %vm3779 = vcmask 523264
        %v3780 = vsel %vm3779, %v3778, 0
        %3782 = vmatpush.msra.mxu0 0.0
        %3783 = vmatpush.msra.mxu0 0.0
        %3784 = vmatpush.msra.mxu0 0.0
        %3785 = vmatpush.msra.mxu0 0.0
        %3786 = vmatpush.msra.mxu0 0.0
        %3787 = vmatpush.msra.mxu0 0.0
        %3788 = vmatpush.msra.mxu0 0.0
        %3789 = vmatpush.msra.mxu0 0.0
        %3790 = vmatpush.msra.mxu0 %v3749
        %3791 = vmatpush.msra.mxu0 %v3748
        %3792 = vmatpush.msra.mxu0 %v3747
        %3793 = vmatpush.msra.mxu0 %v3746
        %3794 = vmatpush.msra.mxu0 %v3745
        %3795 = vmatpush.msra.mxu0 %v3744
        %3796 = vmatpush.msra.mxu0 %v3743
        %3797 = vmatpush.msra.mxu0 %v3742
        %3798 = vmatmul.f32.gmra.mxu0 %v3780
        %v3799 = vpop.f32.mrf.mxu0
        %v3800 = vadd.f32 0.0, %v3799
        %3801 = vdwg.mxu0
        %v3802 = vrot.slane %v3727, 7
        %v3803 = vsel %vm3760, %v3802, %v3726
        %v3804 = vrot.slane %v3728, 6
        %v3805 = vsel %vm3762, %v3804, %v3803
        %v3806 = vrot.slane %v3729, 5
        %v3807 = vsel %vm3765, %v3806, %v3805
        %v3808 = vrot.slane %v3730, 4
        %v3809 = vsel %vm3768, %v3808, %v3807
        %v3810 = vrot.slane %v3731, 3
        %v3811 = vsel %vm3771, %v3810, %v3809
        %v3812 = vrot.slane %v3732, 2
        %v3813 = vsel %vm3774, %v3812, %v3811
        %v3814 = vrot.slane %v3733, 1
        %v3815 = vsel %vm3777, %v3814, %v3813
        %v3816 = vsel %vm3779, %v3815, 0
        %3818 = vmatpush.msra.mxu0 0.0
        %3819 = vmatpush.msra.mxu0 0.0
        %3820 = vmatpush.msra.mxu0 0.0
        %3821 = vmatpush.msra.mxu0 0.0
        %3822 = vmatpush.msra.mxu0 0.0
        %3823 = vmatpush.msra.mxu0 0.0
        %3824 = vmatpush.msra.mxu0 0.0
        %3825 = vmatpush.msra.mxu0 0.0
        %3826 = vmatpush.msra.mxu0 %v3741
        %3827 = vmatpush.msra.mxu0 %v3740
        %3828 = vmatpush.msra.mxu0 %v3739
        %3829 = vmatpush.msra.mxu0 %v3738
        %3830 = vmatpush.msra.mxu0 %v3737
        %3831 = vmatpush.msra.mxu0 %v3736
        %3832 = vmatpush.msra.mxu0 %v3735
        %3833 = vmatpush.msra.mxu0 %v3734
        %3834 = vmatmul.f32.gmra.mxu0 %v3816
        %v3835 = vpop.f32.mrf.mxu0
        %v3836 = vadd.f32 %v3800, %v3835
        %3837 = vdwg.mxu0
        %v3838 = vld [vmem:[%s7 + $0x80] sm:$0xff]
        %v3839 = vld [vmem:[%s7 + $0x88] sm:$0xff]
        %v3840 = vld [vmem:[%s7 + $0x90] sm:$0xff]
        %v3841 = vld [vmem:[%s7 + $0x98] sm:$0xff]
        %v3842 = vld [vmem:[%s7 + $0xa0] sm:$0xff]
        %v3843 = vld [vmem:[%s7 + $0xa8] sm:$0xff]
        %v3844 = vld [vmem:[%s7 + $0xb0] sm:$0xff]
        %v3845 = vld [vmem:[%s7 + $0xb8] sm:$0xff]
        %v3846 = vrot.slane %v3726, 4
        %v3847 = vrot.slane %v3727, 3
        %v3848 = vsel %vm3760, %v3847, %v3846
        %v3849 = vrot.slane %v3728, 2
        %v3850 = vsel %vm3762, %v3849, %v3848
        %v3851 = vrot.slane %v3729, 1
        %v3852 = vsel %vm3765, %v3851, %v3850
        %v3853 = vsel %vm3768, %v3730, %v3852
        %v3854 = vrot.slane %v3731, 7
        %v3855 = vsel %vm3771, %v3854, %v3853
        %v3856 = vrot.slane %v3732, 6
        %v3857 = vsel %vm3774, %v3856, %v3855
        %v3858 = vrot.slane %v3733, 5
        %v3859 = vsel %vm3777, %v3858, %v3857
        %v3860 = vsel %vm3779, %v3859, 0
        %3862 = vmatpush.msra.mxu0 0.0
        %3863 = vmatpush.msra.mxu0 0.0
        %3864 = vmatpush.msra.mxu0 0.0
        %3865 = vmatpush.msra.mxu0 0.0
        %3866 = vmatpush.msra.mxu0 0.0
        %3867 = vmatpush.msra.mxu0 0.0
        %3868 = vmatpush.msra.mxu0 0.0
        %3869 = vmatpush.msra.mxu0 0.0
        %3870 = vmatpush.msra.mxu0 %v3845
        %3871 = vmatpush.msra.mxu0 %v3844
        %3872 = vmatpush.msra.mxu0 %v3843
        %3873 = vmatpush.msra.mxu0 %v3842
        %3874 = vmatpush.msra.mxu0 %v3841
        %3875 = vmatpush.msra.mxu0 %v3840
        %3876 = vmatpush.msra.mxu0 %v3839
        %3877 = vmatpush.msra.mxu0 %v3838
        %3878 = vmatmul.f32.gmra.mxu0 %v3860
        %v3879 = vpop.f32.mrf.mxu0
        %v3880 = vadd.f32 0.0, %v3879
        %3881 = vdwg.mxu0
        %v3882 = vadd.f32 %v3836, %v3880
        %v3883 = vld [vmem:[%s7 + $0xc0] sm:$0xff]
        %v3884 = vld [vmem:[%s7 + $0xc8] sm:$0xff]
        %v3885 = vld [vmem:[%s7 + $0xd0] sm:$0xff]
        %v3886 = vld [vmem:[%s7 + $0xd8] sm:$0xff]
        %v3887 = vld [vmem:[%s7 + $0xe0] sm:$0xff]
        %v3888 = vld [vmem:[%s7 + $0xe8] sm:$0xff]
        %v3889 = vld [vmem:[%s7 + $0xf0] sm:$0xff]
        %v3890 = vld [vmem:[%s7 + $0xf8] sm:$0xff]
        %v3891 = vrot.slane %v3726, 6
        %v3892 = vrot.slane %v3727, 5
        %v3893 = vsel %vm3760, %v3892, %v3891
        %v3894 = vrot.slane %v3728, 4
        %v3895 = vsel %vm3762, %v3894, %v3893
        %v3896 = vrot.slane %v3729, 3
        %v3897 = vsel %vm3765, %v3896, %v3895
        %v3898 = vrot.slane %v3730, 2
        %v3899 = vsel %vm3768, %v3898, %v3897
        %v3900 = vrot.slane %v3731, 1
        %v3901 = vsel %vm3771, %v3900, %v3899
        %v3902 = vsel %vm3774, %v3732, %v3901
        %v3903 = vrot.slane %v3733, 7
        %v3904 = vsel %vm3777, %v3903, %v3902
        %v3905 = vsel %vm3779, %v3904, 0
        %3907 = vmatpush.msra.mxu0 0.0
        %3908 = vmatpush.msra.mxu0 0.0
        %3909 = vmatpush.msra.mxu0 0.0
        %3910 = vmatpush.msra.mxu0 0.0
        %3911 = vmatpush.msra.mxu0 0.0
        %3912 = vmatpush.msra.mxu0 0.0
        %3913 = vmatpush.msra.mxu0 0.0
        %3914 = vmatpush.msra.mxu0 0.0
        %3915 = vmatpush.msra.mxu0 %v3890
        %3916 = vmatpush.msra.mxu0 %v3889
        %3917 = vmatpush.msra.mxu0 %v3888
        %3918 = vmatpush.msra.mxu0 %v3887
        %3919 = vmatpush.msra.mxu0 %v3886
        %3920 = vmatpush.msra.mxu0 %v3885
        %3921 = vmatpush.msra.mxu0 %v3884
        %3922 = vmatpush.msra.mxu0 %v3883
        %3923 = vmatmul.f32.gmra.mxu0 %v3905
        %v3924 = vpop.f32.mrf.mxu0
        %v3925 = vadd.f32 0.0, %v3924
        %3926 = vdwg.mxu0
        %v3927 = vadd.f32 %v3882, %v3925
        %v3928 = vld [vmem:[%s8] sm:$0x1]
        %v3930 = vperm.slane %v3928, 0
        %v3932 = vadd.f32 %v3927, %v3930
        %v3933 = vmax.f32 %v3932, 0.0
        %v3934 = vld [vmem:[%s9] sm:$0xff]
        %v3935 = vld [vmem:[%s9 + $0x8] sm:$0xff]
        %v3936 = vld [vmem:[%s9 + $0x10] sm:$0xff]
        %v3937 = vld [vmem:[%s9 + $0x18] sm:$0xff]
        %v3938 = vld [vmem:[%s9 + $0x20] sm:$0xff]
        %v3939 = vld [vmem:[%s9 + $0x28] sm:$0xff]
        %v3940 = vld [vmem:[%s9 + $0x30] sm:$0xff]
        %v3941 = vld [vmem:[%s9 + $0x38] sm:$0xff]
        %v3942 = vld [vmem:[%s9 + $0x40] sm:$0xff]
        %v3943 = vld [vmem:[%s9 + $0x48] sm:$0xff]
        %v3944 = vld [vmem:[%s9 + $0x50] sm:$0xff]
        %v3945 = vld [vmem:[%s9 + $0x58] sm:$0xff]
        %v3946 = vld [vmem:[%s9 + $0x60] sm:$0xff]
        %v3947 = vld [vmem:[%s9 + $0x68] sm:$0xff]
        %v3948 = vld [vmem:[%s9 + $0x70] sm:$0xff]
        %v3949 = vld [vmem:[%s10] sm:$0x1]
        %v3951 = vperm.slane %v3949, 0
        %vm3953 = vcmask 982016
        %v3955 = vsel %vm3953, %v3933, 0
        %3957 = vmatpush.msra.mxu0 0.0
        %3958 = vmatpush.msra.mxu0 %v3948
        %3959 = vmatpush.msra.mxu0 %v3947
        %3960 = vmatpush.msra.mxu0 %v3946
        %3961 = vmatpush.msra.mxu0 %v3945
        %3962 = vmatpush.msra.mxu0 %v3944
        %3963 = vmatpush.msra.mxu0 %v3943
        %3964 = vmatpush.msra.mxu0 %v3942
        %3965 = vmatpush.msra.mxu0 %v3941
        %3966 = vmatpush.msra.mxu0 %v3940
        %3967 = vmatpush.msra.mxu0 %v3939
        %3968 = vmatpush.msra.mxu0 %v3938
        %3969 = vmatpush.msra.mxu0 %v3937
        %3970 = vmatpush.msra.mxu0 %v3936
        %3971 = vmatpush.msra.mxu0 %v3935
        %3972 = vmatpush.msra.mxu0 %v3934
        %3973 = vmatmul.f32.gmra.mxu0 %v3955
        %v3974 = vpop.f32.mrf.mxu0
        %v3975 = vadd.f32 %v3951, %v3974
        %3976 = vdwg.mxu0
        %v3977 = vmax.f32 %v3975, 0.0
        %v3978 = vld [vmem:[%s11] sm:$0xff]
        %v3979 = vld [vmem:[%s11 + $0x8] sm:$0xff]
        %v3980 = vld [vmem:[%s11 + $0x10] sm:$0xff]
        %v3981 = vld [vmem:[%s11 + $0x18] sm:$0xff]
        %v3982 = vld [vmem:[%s11 + $0x20] sm:$0xff]
        %v3983 = vld [vmem:[%s11 + $0x28] sm:$0xff]
        %v3984 = vld [vmem:[%s11 + $0x30] sm:$0xff]
        %v3985 = vld [vmem:[%s11 + $0x38] sm:$0xff]
        %v3986 = vld [vmem:[%s11 + $0x40] sm:$0xff]
        %v3987 = vld [vmem:[%s11 + $0x48] sm:$0xff]
        %v3988 = vld [vmem:[%s11 + $0x50] sm:$0xf]
        %v3989 = vld [vmem:[%s12] sm:$0x1]
        %v3991 = vperm.slane %v3989, 0
        %vm3993 = vcmask 687104
        %v3995 = vsel %vm3993, %v3977, 0
        %v3998 = vsel %vm631, %v3988, 0
        %4000 = vmatpush.msra.mxu0 0.0
        %4001 = vmatpush.msra.mxu0 0.0
        %4002 = vmatpush.msra.mxu0 0.0
        %4003 = vmatpush.msra.mxu0 0.0
        %4004 = vmatpush.msra.mxu0 0.0
        %4005 = vmatpush.msra.mxu0 %v3998
        %4006 = vmatpush.msra.mxu0 %v3987
        %4007 = vmatpush.msra.mxu0 %v3986
        %4008 = vmatpush.msra.mxu0 %v3985
        %4009 = vmatpush.msra.mxu0 %v3984
        %4010 = vmatpush.msra.mxu0 %v3983
        %4011 = vmatpush.msra.mxu0 %v3982
        %4012 = vmatpush.msra.mxu0 %v3981
        %4013 = vmatpush.msra.mxu0 %v3980
        %4014 = vmatpush.msra.mxu0 %v3979
        %4015 = vmatpush.msra.mxu0 %v3978
        %4016 = vmatmul.f32.gmra.mxu0 %v3995
        %v4017 = vpop.f32.mrf.mxu0
        %v4018 = vadd.f32 %v3991, %v4017
        %4019 = vdwg.mxu0
        %4020 = vst [vmem:[%s436] sm:$0xff] %v4018
        %s4021 = sand.u32 %s313, 1
        %s4022 = scalar_lea.sflag [#allocation3], %s4021
        %s4023 = sand.u32 %s313, 1
        %s4024 = smul.addr %s4023, 8
        %s4025 = scalar_lea.vmem [#allocation2], %s4024
        // Predicated region
        $region73: #{lenet_forward.1} parent=71 // pred_check
          %p4026 = pneg %p323
        $region74: #{lenet_forward.1} parent=71 // pred_check_branch
          %4028 = sbr.rel (%p4026) target = $region76
        $region75: #{lenet_forward.1} parent=71 // pred_region
          %4030 = vsyncadd %s4022, 0
          %s4031 = smul.addr %s27, 8
          %s4032 = scalar_lea.hbm %s13, %s4031
          %s4034 = sshll.u32 %s4025, 4
          %s4035 = int_to_ptr.vmem [resolvable:$true] %s4034
          %s4036 = sshll.u32 %s4032, 4
          %s4037 = int_to_ptr.hbm [resolvable:$true] %s4036
          %4039 = dma.vmem_to_hbm [thread:$0]  %s4035, 128, %s4037, %s4022
        $region76: #{lenet_forward.1} parent=71 // pred_fallthru
          _
      $region72: #{lenet_forward.1} parent=5 // pred_fallthru
        _
      %p4040 = scmp.le.s32.totalorder 2, %s22
      // Predicated region
      $region77: #{lenet_forward.1} parent=5 // pred_check
        %p4041 = pneg %p4040
      $region78: #{lenet_forward.1} parent=5 // pred_check_branch
        %4043 = sbr.rel (%p4041) target = $region80
      $region79: #{lenet_forward.1} parent=5 // pred_region
        %s4044 = ssub.s32 %s22, 2
        // Predicated region
        $region81: #{lenet_forward.1} parent=79 // pred_check
          %p4045 = pneg %p329
        $region82: #{lenet_forward.1} parent=79 // pred_check_branch
          %4047 = sbr.rel (%p4045) target = $region84
        $region83: #{lenet_forward.1} parent=79 // pred_region
          %s4048 = sand.u32 %s314, 1
          %s4049 = scalar_lea.sflag [#allocation3], %s4048
          %s4050 = sand.u32 %s314, 1
          %s4051 = smul.addr %s4050, 8
          %s4052 = scalar_lea.vmem [#allocation2], %s4051
          %4054 = dma.done %s4049, 128
        $region84: #{lenet_forward.1} parent=79 // pred_fallthru
          _
      $region80: #{lenet_forward.1} parent=5 // pred_fallthru
        _
    $region6: #{lenet_forward.1} parent=1 // loop_footer
      %s26 = sadd.s32 1, %s22
    $region7: #{lenet_forward.1} parent=1 // loop_footer_branch
      %21 = sbr.rel target = $region3
    $region8: #{lenet_forward.1} parent=1 // loop_exit
      _
    %4055 = vsyncpa [#allocation3], 1
    %s4056 = scalar_lea.sflag [#allocation3], 1
    %4057 = vsyncpa %s4056, 1

</llo_original>
